<compile_context>
chip_gen: v5e
topology: v5e:2x2
jax: 0.10.0
libtpu: 0.0.40
codegen_flags: <defaults>
</compile_context>

<pallas_src>
import functools
import math

import jax
import jax.numpy as jnp
from jax import lax
from jax.experimental import pallas as pl
from jax.experimental.pallas import tpu as pltpu

LN_EPS = 1e-5
_INV_SQRT2 = 1.0 / math.sqrt(2.0)
_LANE = 128  # TPU lane width: pad the packed head output to a multiple of this.

# TODO(synk): nn.Dropout with p > 0 (train mode) is not implemented; the chosen config
# uses dropout = 0 for every block, so the forward pass is deterministic.


# ----------------------------- Pallas kernel -------------------------------


def _layernorm(h, gamma, beta):
    # PyTorch nn.LayerNorm: biased variance, eps=1e-5, over last dim.
    # Single pass: E[h] and E[h^2] in one sweep; var = E[h^2] - mean^2.
    inv_n = 1.0 / h.shape[-1]
    s1 = jnp.sum(h, axis=-1, keepdims=True)
    s2 = jnp.sum(h * h, axis=-1, keepdims=True)
    mean = s1 * inv_n
    var = s2 * inv_n - mean * mean
    return (h - mean) * lax.rsqrt(var + LN_EPS) * gamma + beta


def _gelu_exact(h):
    # PyTorch nn.GELU(approximate='none'): 0.5 * x * (1 + erf(x / sqrt(2))).
    # TODO(synk): tanh-approx GELU would route to the idle EUP (big win on v5e's
    # VALU-bound path); kept exact for parity with the PyTorch module.
    return 0.5 * h * (1.0 + lax.erf(h * _INV_SQRT2))


def _encoder_kernel(
    x_ref,
    w1_ref, b1_ref, g1_ref, beta1_ref,
    w2_ref, b2_ref, g2_ref, beta2_ref,
    w5_ref, b5_ref,
    out_ref,
    *, zdim, rows, n_chunks,
):
    """Fused encoder tile: 3 bf16 matmuls (f32 acc) + 2 LayerNorm + 2 GELU + exp.

    The head weight is packed [W_mu | W_sigma | zeros] into one lane-dense slab, so a
    single matmul produces both outputs; exp is applied to columns >= zdim.
    """
    zslab = out_ref.shape[-1]
    # Column ids of the packed head output: [0, zdim) = mu, [zdim, 2*zdim) = sigma.
    col = lax.broadcasted_iota(jnp.int32, (rows, zslab), 1)
    is_sigma = col >= zdim

    # Resident params: load once per tile, reuse across row sub-chunks.
    w1 = w1_ref[...]; b1 = b1_ref[...]; g1 = g1_ref[...]; be1 = beta1_ref[...]
    w2 = w2_ref[...]; b2 = b2_ref[...]; g2 = g2_ref[...]; be2 = beta2_ref[...]
    w5 = w5_ref[...]; b5 = b5_ref[...]

    def chunk(c, carry):
        r0 = pl.multiple_of(c * rows, 8)
        # In-kernel bf16 cast of the f32 input tile (VPU, overlaps the DMA pipeline).
        x = x_ref[pl.ds(r0, rows), :].astype(jnp.bfloat16)

        # body1: Linear -> LayerNorm -> GELU
        h1 = jnp.dot(x, w1, preferred_element_type=jnp.float32) + b1
        h1 = _gelu_exact(_layernorm(h1, g1, be1))

        # body2: Linear -> LayerNorm -> GELU
        h2 = jnp.dot(h1.astype(jnp.bfloat16), w2, preferred_element_type=jnp.float32) + b2
        h2 = _gelu_exact(_layernorm(h2, g2, be2)).astype(jnp.bfloat16)

        # body5: single packed head matmul; exp only on the sigma columns.
        s = jnp.dot(h2, w5, preferred_element_type=jnp.float32) + b5
        out_ref[pl.ds(r0, rows), :] = jnp.where(is_sigma, jnp.exp(s), s)
        return carry

    # Unrolled so the LLO scheduler can overlap chunk i's erf/LN VALU work with
    # chunk i+1's MXU pushes.
    lax.fori_loop(0, n_chunks, chunk, 0, unroll=True)


# ------------------------------ host wrapper --------------------------------


def _round_up(n, m):
    return ((n + m - 1) // m) * m


def encoder_forward(x, kparams, zdim, *, block_b=512, n_chunks=4):
    """Run the fused encoder kernel.

    x: (B, input_size) float32. kparams: packed kernel params (see pack_params).
    Returns (mu, std), each (B, zdim) float32.
    """
    B, in_features = x.shape
    hidden1 = kparams["w1"].shape[1]
    hidden2 = kparams["w2"].shape[1]
    zslab = kparams["w5"].shape[1]  # lane-padded packed head width (multiple of 128)

    x = x.astype(jnp.float32)  # kernel casts to bf16 internally

    # Batch tile: whole (8-rounded) batch in one step when it fits within block_b;
    # otherwise block_b-row tiles (multiple tiles shard across v7x's 2 TCs).
    tb = min(_round_up(max(block_b, 8), 8), _round_up(max(B, 1), 8))
    b_pad = _round_up(B, tb)
    if b_pad != B:
        x = jnp.pad(x, ((0, b_pad - B), (0, 0)))
    nb = b_pad // tb

    # Row sub-chunks inside a tile (each a multiple of 8 sublanes).
    nc = max(1, int(n_chunks))
    while nc > 1 and (tb % nc != 0 or (tb // nc) % 8 != 0):
        nc -= 1
    rows = tb // nc

    kernel = functools.partial(_encoder_kernel, zdim=zdim, rows=rows, n_chunks=nc)

    inputs = (
        x,
        kparams["w1"], kparams["b1"], kparams["g1"], kparams["beta1"],
        kparams["w2"], kparams["b2"], kparams["g2"], kparams["beta2"],
        kparams["w5"], kparams["b5"],
    )

    def resident(a):
        # Whole-array block, constant index -> stays resident in VMEM across the grid.
        return pl.BlockSpec(a.shape, lambda i: (0, 0))

    in_specs = [pl.BlockSpec((tb, in_features), lambda i: (i, 0))]
    in_specs += [resident(a) for a in inputs[1:]]

    flops = 2 * b_pad * (in_features * hidden1 + hidden1 * hidden2 + hidden2 * zslab)
    transcendentals = b_pad * (hidden1 + hidden2 + zslab)  # erf + exp (advisory)
    bytes_accessed = (
        b_pad * in_features * 4
        + sum(int(a.size) * a.dtype.itemsize for a in inputs[1:])
        + b_pad * zslab * 4
    )

    slab = pl.pallas_call(
        kernel,
        out_shape=jax.ShapeDtypeStruct((b_pad, zslab), jnp.float32),
        grid=(nb,),
        in_specs=in_specs,
        out_specs=pl.BlockSpec((tb, zslab), lambda i: (i, 0)),
        compiler_params=pltpu.CompilerParams(
            dimension_semantics=("parallel",),  # batch tiles are independent (v7x: 2 TCs)
        ),
        cost_estimate=pl.CostEstimate(
            flops=int(flops),
            transcendentals=int(transcendentals),
            bytes_accessed=int(bytes_accessed),
        ),
    )(*inputs)

    # Slice the packed, lane-padded slab back to the logical outputs on the host.
    mu = slab[:B, :zdim]
    std = slab[:B, zdim:2 * zdim]
    return mu, std


# --------------------------- parameters & packing ---------------------------


def init_params(key, input_size, hidden, zdim):
    """Deterministic synthetic parameters, f32, shapes mirroring the PyTorch module."""
    ks = jax.random.split(key, 6)

    def linear(kw, kb, fan_in, fan_out):
        # Stored as (in, out) == transpose of PyTorch's (out, in).
        w = jax.random.normal(kw, (fan_in, fan_out), jnp.float32) / math.sqrt(fan_in)
        b = jax.random.normal(kb, (1, fan_out), jnp.float32) * 0.01
        return w, b

    w1, b1 = linear(ks[0], ks[1], input_size, hidden)
    w2, b2 = linear(ks[2], ks[3], hidden, hidden)
    w5, b5 = linear(ks[4], ks[5], hidden, 2 * zdim)

    return dict(
        w1=w1, b1=b1,
        g1=jnp.ones((1, hidden), jnp.float32), beta1=jnp.zeros((1, hidden), jnp.float32),
        w2=w2, b2=b2,
        g2=jnp.ones((1, hidden), jnp.float32), beta2=jnp.zeros((1, hidden), jnp.float32),
        w5=w5, b5=b5,
    )


def pack_params(params, zdim, lane_pad=_LANE):
    """Pack f32 params for the kernel: bf16 weights; the head weight/bias keep their
    [mu | sigma] column order and are zero-padded to a lane-dense (mult-of-128) width."""
    zslab = _round_up(max(2 * zdim, 1), lane_pad)

    def pad_cols(a, width):
        return jnp.pad(a, ((0, 0), (0, width - a.shape[1])))

    return dict(
        w1=params["w1"].astype(jnp.bfloat16), b1=params["b1"],
        g1=params["g1"], beta1=params["beta1"],
        w2=params["w2"].astype(jnp.bfloat16), b2=params["b2"],
        g2=params["g2"], beta2=params["beta2"],
        w5=pad_cols(params["w5"], zslab).astype(jnp.bfloat16),
        b5=pad_cols(params["b5"], zslab),
    )


def encoder_reference(x, params, zdim):
    """Pure-JAX f32 reference of the PyTorch forward (for a tolerance check)."""
    def ln(h, g, b):
        mean = jnp.mean(h, axis=-1, keepdims=True)
        var = jnp.mean((h - mean) ** 2, axis=-1, keepdims=True)
        return (h - mean) / jnp.sqrt(var + LN_EPS) * g + b

    def gelu(h):
        return 0.5 * h * (1.0 + lax.erf(h * _INV_SQRT2))

    h1 = gelu(ln(x @ params["w1"] + params["b1"], params["g1"], params["beta1"]))
    h2 = gelu(ln(h1 @ params["w2"] + params["b2"], params["g2"], params["beta2"]))
    scores = h2 @ params["w5"] + params["b5"]
    return scores[:, :zdim], jnp.exp(scores[:, zdim:])


# ---------------------------------- main -------------------------------------


if __name__ == "__main__":
    # Config mirroring the PyTorch module:
    #   input_size = 32, zdim = 16
    #   arch  = [[64, 64], [64, 64], [64, 64], [64, 64], [64, 32]]
    #   bNorm = [64, 64, 0, 0, 0]; relu = [1, 1, 0, 0, 0]; drop = [0]*5
    B, INPUT_SIZE, HIDDEN, ZDIM = 256, 32, 64, 16

    key = jax.random.PRNGKey(0)
    kx, kp = jax.random.split(key)

    x = jax.random.normal(kx, (B, INPUT_SIZE), jnp.float32)
    params = init_params(kp, INPUT_SIZE, HIDDEN, ZDIM)
    kparams = pack_params(params, ZDIM)

    # block_b=512 >= B -> whole batch in one grid step (4 row sub-chunks of 64).
    mu, std = encoder_forward(x, kparams, ZDIM, block_b=512, n_chunks=4)
    jax.block_until_ready((mu, std))

    assert mu.shape == (B, ZDIM) and std.shape == (B, ZDIM)
    assert bool(jnp.all(std > 0.0))            # std = exp(sigma) must be positive
    assert bool(jnp.all(jnp.isfinite(mu)))

    # Tolerance check vs. f32 reference (bf16 MXU operands -> small drift expected).
    mu_ref, std_ref = encoder_reference(x, params, ZDIM)
    assert bool(jnp.max(jnp.abs(mu - mu_ref)) < 0.15)
    assert bool(jnp.max(jnp.abs(std / std_ref - 1.0)) < 0.1)

    print("KERNEL_OK")
</pallas_src>

<mosaic_0001>
module attributes {stable_mosaic.version = 11 : i64} {
  func.func @_encoder_kernel(%arg0: i32, %arg1: memref<256x32xf32, #tpu.memory_space<vmem>>, %arg2: memref<32x64xbf16, #tpu.memory_space<vmem>>, %arg3: memref<1x64xf32, #tpu.memory_space<vmem>>, %arg4: memref<1x64xf32, #tpu.memory_space<vmem>>, %arg5: memref<1x64xf32, #tpu.memory_space<vmem>>, %arg6: memref<64x64xbf16, #tpu.memory_space<vmem>>, %arg7: memref<1x64xf32, #tpu.memory_space<vmem>>, %arg8: memref<1x64xf32, #tpu.memory_space<vmem>>, %arg9: memref<1x64xf32, #tpu.memory_space<vmem>>, %arg10: memref<64x128xbf16, #tpu.memory_space<vmem>>, %arg11: memref<1x128xf32, #tpu.memory_space<vmem>>, %arg12: memref<256x128xf32, #tpu.memory_space<vmem>>) attributes {dimension_semantics = [#tpu.dimension_semantics<parallel>], iteration_bounds = array<i64: 1>, scalar_prefetch = 0 : i64, scratch_operands = 0 : i64, tpu.core_type = #tpu.core_type<tc>, window_params = [{transform_indices = @transform_0, window_bounds = array<i64: 256, 32>}, {pipeline_mode = #tpu.pipeline_mode<synchronous>, transform_indices = @transform_1, window_bounds = array<i64: 32, 64>}, {pipeline_mode = #tpu.pipeline_mode<synchronous>, transform_indices = @transform_2, window_bounds = array<i64: 1, 64>}, {pipeline_mode = #tpu.pipeline_mode<synchronous>, transform_indices = @transform_3, window_bounds = array<i64: 1, 64>}, {pipeline_mode = #tpu.pipeline_mode<synchronous>, transform_indices = @transform_4, window_bounds = array<i64: 1, 64>}, {pipeline_mode = #tpu.pipeline_mode<synchronous>, transform_indices = @transform_5, window_bounds = array<i64: 64, 64>}, {pipeline_mode = #tpu.pipeline_mode<synchronous>, transform_indices = @transform_6, window_bounds = array<i64: 1, 64>}, {pipeline_mode = #tpu.pipeline_mode<synchronous>, transform_indices = @transform_7, window_bounds = array<i64: 1, 64>}, {pipeline_mode = #tpu.pipeline_mode<synchronous>, transform_indices = @transform_8, window_bounds = array<i64: 1, 64>}, {pipeline_mode = #tpu.pipeline_mode<synchronous>, transform_indices = @transform_9, window_bounds = array<i64: 64, 128>}, {pipeline_mode = #tpu.pipeline_mode<synchronous>, transform_indices = @transform_10, window_bounds = array<i64: 1, 128>}, {transform_indices = @transform_11, window_bounds = array<i64: 256, 128>}]} {
    %0 = tpu.iota {dimensions = array<i32: 1>} : vector<64x128xi32>
    %c16_i32 = arith.constant 16 : i32
    %1 = vector.broadcast %c16_i32 : i32 to vector<64x128xi32>
    %2 = arith.cmpi sge, %0, %1 : vector<64x128xi32>
    %c0 = arith.constant 0 : index
    %c0_0 = arith.constant 0 : index
    %3 = vector.load %arg2[%c0, %c0_0] : memref<32x64xbf16, #tpu.memory_space<vmem>>, vector<32x64xbf16>
    %c0_1 = arith.constant 0 : index
    %c0_2 = arith.constant 0 : index
    %4 = vector.load %arg3[%c0_1, %c0_2] : memref<1x64xf32, #tpu.memory_space<vmem>>, vector<1x64xf32>
    %c0_3 = arith.constant 0 : index
    %c0_4 = arith.constant 0 : index
    %5 = vector.load %arg4[%c0_3, %c0_4] : memref<1x64xf32, #tpu.memory_space<vmem>>, vector<1x64xf32>
    %c0_5 = arith.constant 0 : index
    %c0_6 = arith.constant 0 : index
    %6 = vector.load %arg5[%c0_5, %c0_6] : memref<1x64xf32, #tpu.memory_space<vmem>>, vector<1x64xf32>
    %c0_7 = arith.constant 0 : index
    %c0_8 = arith.constant 0 : index
    %7 = vector.load %arg6[%c0_7, %c0_8] : memref<64x64xbf16, #tpu.memory_space<vmem>>, vector<64x64xbf16>
    %c0_9 = arith.constant 0 : index
    %c0_10 = arith.constant 0 : index
    %8 = vector.load %arg7[%c0_9, %c0_10] : memref<1x64xf32, #tpu.memory_space<vmem>>, vector<1x64xf32>
    %c0_11 = arith.constant 0 : index
    %c0_12 = arith.constant 0 : index
    %9 = vector.load %arg8[%c0_11, %c0_12] : memref<1x64xf32, #tpu.memory_space<vmem>>, vector<1x64xf32>
    %c0_13 = arith.constant 0 : index
    %c0_14 = arith.constant 0 : index
    %10 = vector.load %arg9[%c0_13, %c0_14] : memref<1x64xf32, #tpu.memory_space<vmem>>, vector<1x64xf32>
    %c0_15 = arith.constant 0 : index
    %c0_16 = arith.constant 0 : index
    %11 = vector.load %arg10[%c0_15, %c0_16] : memref<64x128xbf16, #tpu.memory_space<vmem>>, vector<64x128xbf16>
    %c0_17 = arith.constant 0 : index
    %c0_18 = arith.constant 0 : index
    %12 = vector.load %arg11[%c0_17, %c0_18] : memref<1x128xf32, #tpu.memory_space<vmem>>, vector<1x128xf32>
    %c0_i32 = arith.constant 0 : i32
    %c64_i32 = arith.constant 64 : i32
    %13 = arith.muli %c0_i32, %c64_i32 : i32
    %14 = tpu.assume_multiple %13, 8 : i32
    %15 = arith.index_cast %14 : i32 to index
    %c0_19 = arith.constant 0 : index
    %16 = vector.load %arg1[%15, %c0_19] : memref<256x32xf32, #tpu.memory_space<vmem>>, vector<64x32xf32>
    %17 = arith.truncf %16 : vector<64x32xf32> to vector<64x32xbf16>
    %cst = arith.constant dense<0.000000e+00> : vector<64x64xf32>
    %18 = tpu.matmul %17, %3, %cst {dimension_numbers = #tpu.dot_dimension_numbers<[1], [0], [0], [1], [0, 0, 1, 1], [], []>} : vector<64x32xbf16>, vector<32x64xbf16>, vector<64x64xf32> -> vector<64x64xf32>
    %19 = vector.broadcast %4 : vector<1x64xf32> to vector<64x64xf32>
    %20 = arith.addf %18, %19 : vector<64x64xf32>
    %cst_20 = arith.constant dense<0.000000e+00> : vector<64xf32>
    %21 = vector.multi_reduction <add>, %20, %cst_20 [1] : vector<64x64xf32> to vector<64xf32>
    %22 = vector.shape_cast %21 : vector<64xf32> to vector<64x1xf32>
    %23 = arith.mulf %20, %20 : vector<64x64xf32>
    %cst_21 = arith.constant dense<0.000000e+00> : vector<64xf32>
    %24 = vector.multi_reduction <add>, %23, %cst_21 [1] : vector<64x64xf32> to vector<64xf32>
    %25 = vector.shape_cast %24 : vector<64xf32> to vector<64x1xf32>
    %cst_22 = arith.constant 1.562500e-02 : f32
    %26 = vector.broadcast %cst_22 : f32 to vector<64x1xf32>
    %27 = arith.mulf %22, %26 : vector<64x1xf32>
    %cst_23 = arith.constant 1.562500e-02 : f32
    %28 = vector.broadcast %cst_23 : f32 to vector<64x1xf32>
    %29 = arith.mulf %25, %28 : vector<64x1xf32>
    %30 = arith.mulf %27, %27 : vector<64x1xf32>
    %31 = arith.subf %29, %30 : vector<64x1xf32>
    %32 = vector.broadcast %27 : vector<64x1xf32> to vector<64x64xf32>
    %33 = arith.subf %20, %32 : vector<64x64xf32>
    %cst_24 = arith.constant 9.99999974E-6 : f32
    %34 = vector.broadcast %cst_24 : f32 to vector<64x1xf32>
    %35 = arith.addf %31, %34 : vector<64x1xf32>
    %36 = math.rsqrt %35 : vector<64x1xf32>
    %37 = vector.broadcast %36 : vector<64x1xf32> to vector<64x64xf32>
    %38 = arith.mulf %33, %37 : vector<64x64xf32>
    %39 = vector.broadcast %5 : vector<1x64xf32> to vector<64x64xf32>
    %40 = arith.mulf %38, %39 : vector<64x64xf32>
    %41 = vector.broadcast %6 : vector<1x64xf32> to vector<64x64xf32>
    %42 = arith.addf %40, %41 : vector<64x64xf32>
    %cst_25 = arith.constant 5.000000e-01 : f32
    %43 = vector.broadcast %cst_25 : f32 to vector<64x64xf32>
    %44 = arith.mulf %43, %42 : vector<64x64xf32>
    %cst_26 = arith.constant 0.707106769 : f32
    %45 = vector.broadcast %cst_26 : f32 to vector<64x64xf32>
    %46 = arith.mulf %42, %45 : vector<64x64xf32>
    %47 = math.erf %46 : vector<64x64xf32>
    %cst_27 = arith.constant 1.000000e+00 : f32
    %48 = vector.broadcast %cst_27 : f32 to vector<64x64xf32>
    %49 = arith.addf %48, %47 : vector<64x64xf32>
    %50 = arith.mulf %44, %49 : vector<64x64xf32>
    %51 = arith.truncf %50 : vector<64x64xf32> to vector<64x64xbf16>
    %cst_28 = arith.constant dense<0.000000e+00> : vector<64x64xf32>
    %52 = tpu.matmul %51, %7, %cst_28 {dimension_numbers = #tpu.dot_dimension_numbers<[1], [0], [0], [1], [0, 0, 1, 1], [], []>} : vector<64x64xbf16>, vector<64x64xbf16>, vector<64x64xf32> -> vector<64x64xf32>
    %53 = vector.broadcast %8 : vector<1x64xf32> to vector<64x64xf32>
    %54 = arith.addf %52, %53 : vector<64x64xf32>
    %cst_29 = arith.constant dense<0.000000e+00> : vector<64xf32>
    %55 = vector.multi_reduction <add>, %54, %cst_29 [1] : vector<64x64xf32> to vector<64xf32>
    %56 = vector.shape_cast %55 : vector<64xf32> to vector<64x1xf32>
    %57 = arith.mulf %54, %54 : vector<64x64xf32>
    %cst_30 = arith.constant dense<0.000000e+00> : vector<64xf32>
    %58 = vector.multi_reduction <add>, %57, %cst_30 [1] : vector<64x64xf32> to vector<64xf32>
    %59 = vector.shape_cast %58 : vector<64xf32> to vector<64x1xf32>
    %cst_31 = arith.constant 1.562500e-02 : f32
    %60 = vector.broadcast %cst_31 : f32 to vector<64x1xf32>
    %61 = arith.mulf %56, %60 : vector<64x1xf32>
    %cst_32 = arith.constant 1.562500e-02 : f32
    %62 = vector.broadcast %cst_32 : f32 to vector<64x1xf32>
    %63 = arith.mulf %59, %62 : vector<64x1xf32>
    %64 = arith.mulf %61, %61 : vector<64x1xf32>
    %65 = arith.subf %63, %64 : vector<64x1xf32>
    %66 = vector.broadcast %61 : vector<64x1xf32> to vector<64x64xf32>
    %67 = arith.subf %54, %66 : vector<64x64xf32>
    %cst_33 = arith.constant 9.99999974E-6 : f32
    %68 = vector.broadcast %cst_33 : f32 to vector<64x1xf32>
    %69 = arith.addf %65, %68 : vector<64x1xf32>
    %70 = math.rsqrt %69 : vector<64x1xf32>
    %71 = vector.broadcast %70 : vector<64x1xf32> to vector<64x64xf32>
    %72 = arith.mulf %67, %71 : vector<64x64xf32>
    %73 = vector.broadcast %9 : vector<1x64xf32> to vector<64x64xf32>
    %74 = arith.mulf %72, %73 : vector<64x64xf32>
    %75 = vector.broadcast %10 : vector<1x64xf32> to vector<64x64xf32>
    %76 = arith.addf %74, %75 : vector<64x64xf32>
    %cst_34 = arith.constant 5.000000e-01 : f32
    %77 = vector.broadcast %cst_34 : f32 to vector<64x64xf32>
    %78 = arith.mulf %77, %76 : vector<64x64xf32>
    %cst_35 = arith.constant 0.707106769 : f32
    %79 = vector.broadcast %cst_35 : f32 to vector<64x64xf32>
    %80 = arith.mulf %76, %79 : vector<64x64xf32>
    %81 = math.erf %80 : vector<64x64xf32>
    %cst_36 = arith.constant 1.000000e+00 : f32
    %82 = vector.broadcast %cst_36 : f32 to vector<64x64xf32>
    %83 = arith.addf %82, %81 : vector<64x64xf32>
    %84 = arith.mulf %78, %83 : vector<64x64xf32>
    %85 = arith.truncf %84 : vector<64x64xf32> to vector<64x64xbf16>
    %cst_37 = arith.constant dense<0.000000e+00> : vector<64x128xf32>
    %86 = tpu.matmul %85, %11, %cst_37 {dimension_numbers = #tpu.dot_dimension_numbers<[1], [0], [0], [1], [0, 0, 1, 1], [], []>} : vector<64x64xbf16>, vector<64x128xbf16>, vector<64x128xf32> -> vector<64x128xf32>
    %87 = vector.broadcast %12 : vector<1x128xf32> to vector<64x128xf32>
    %88 = arith.addf %86, %87 : vector<64x128xf32>
    %89 = math.exp %88 : vector<64x128xf32>
    %90 = arith.select %2, %89, %88 : vector<64x128xi1>, vector<64x128xf32>
    %91 = arith.index_cast %14 : i32 to index
    %c0_38 = arith.constant 0 : index
    %92 = vector.load %arg12[%91, %c0_38] : memref<256x128xf32, #tpu.memory_space<vmem>>, vector<64x128xf32>
    tpu.vector_store %arg12[%91, %c0_38], %90 {strides = array<i32>} : memref<256x128xf32, #tpu.memory_space<vmem>>, vector<64x128xf32>,
    %c1_i32 = arith.constant 1 : i32
    %c64_i32_39 = arith.constant 64 : i32
    %93 = arith.muli %c1_i32, %c64_i32_39 : i32
    %94 = tpu.assume_multiple %93, 8 : i32
    %95 = arith.index_cast %94 : i32 to index
    %c0_40 = arith.constant 0 : index
    %96 = vector.load %arg1[%95, %c0_40] : memref<256x32xf32, #tpu.memory_space<vmem>>, vector<64x32xf32>
    %97 = arith.truncf %96 : vector<64x32xf32> to vector<64x32xbf16>
    %cst_41 = arith.constant dense<0.000000e+00> : vector<64x64xf32>
    %98 = tpu.matmul %97, %3, %cst_41 {dimension_numbers = #tpu.dot_dimension_numbers<[1], [0], [0], [1], [0, 0, 1, 1], [], []>} : vector<64x32xbf16>, vector<32x64xbf16>, vector<64x64xf32> -> vector<64x64xf32>
    %99 = vector.broadcast %4 : vector<1x64xf32> to vector<64x64xf32>
    %100 = arith.addf %98, %99 : vector<64x64xf32>
    %cst_42 = arith.constant dense<0.000000e+00> : vector<64xf32>
    %101 = vector.multi_reduction <add>, %100, %cst_42 [1] : vector<64x64xf32> to vector<64xf32>
    %102 = vector.shape_cast %101 : vector<64xf32> to vector<64x1xf32>
    %103 = arith.mulf %100, %100 : vector<64x64xf32>
    %cst_43 = arith.constant dense<0.000000e+00> : vector<64xf32>
    %104 = vector.multi_reduction <add>, %103, %cst_43 [1] : vector<64x64xf32> to vector<64xf32>
    %105 = vector.shape_cast %104 : vector<64xf32> to vector<64x1xf32>
    %cst_44 = arith.constant 1.562500e-02 : f32
    %106 = vector.broadcast %cst_44 : f32 to vector<64x1xf32>
    %107 = arith.mulf %102, %106 : vector<64x1xf32>
    %cst_45 = arith.constant 1.562500e-02 : f32
    %108 = vector.broadcast %cst_45 : f32 to vector<64x1xf32>
    %109 = arith.mulf %105, %108 : vector<64x1xf32>
    %110 = arith.mulf %107, %107 : vector<64x1xf32>
    %111 = arith.subf %109, %110 : vector<64x1xf32>
    %112 = vector.broadcast %107 : vector<64x1xf32> to vector<64x64xf32>
    %113 = arith.subf %100, %112 : vector<64x64xf32>
    %cst_46 = arith.constant 9.99999974E-6 : f32
    %114 = vector.broadcast %cst_46 : f32 to vector<64x1xf32>
    %115 = arith.addf %111, %114 : vector<64x1xf32>
    %116 = math.rsqrt %115 : vector<64x1xf32>
    %117 = vector.broadcast %116 : vector<64x1xf32> to vector<64x64xf32>
    %118 = arith.mulf %113, %117 : vector<64x64xf32>
    %119 = vector.broadcast %5 : vector<1x64xf32> to vector<64x64xf32>
    %120 = arith.mulf %118, %119 : vector<64x64xf32>
    %121 = vector.broadcast %6 : vector<1x64xf32> to vector<64x64xf32>
    %122 = arith.addf %120, %121 : vector<64x64xf32>
    %cst_47 = arith.constant 5.000000e-01 : f32
    %123 = vector.broadcast %cst_47 : f32 to vector<64x64xf32>
    %124 = arith.mulf %123, %122 : vector<64x64xf32>
    %cst_48 = arith.constant 0.707106769 : f32
    %125 = vector.broadcast %cst_48 : f32 to vector<64x64xf32>
    %126 = arith.mulf %122, %125 : vector<64x64xf32>
    %127 = math.erf %126 : vector<64x64xf32>
    %cst_49 = arith.constant 1.000000e+00 : f32
    %128 = vector.broadcast %cst_49 : f32 to vector<64x64xf32>
    %129 = arith.addf %128, %127 : vector<64x64xf32>
    %130 = arith.mulf %124, %129 : vector<64x64xf32>
    %131 = arith.truncf %130 : vector<64x64xf32> to vector<64x64xbf16>
    %cst_50 = arith.constant dense<0.000000e+00> : vector<64x64xf32>
    %132 = tpu.matmul %131, %7, %cst_50 {dimension_numbers = #tpu.dot_dimension_numbers<[1], [0], [0], [1], [0, 0, 1, 1], [], []>} : vector<64x64xbf16>, vector<64x64xbf16>, vector<64x64xf32> -> vector<64x64xf32>
    %133 = vector.broadcast %8 : vector<1x64xf32> to vector<64x64xf32>
    %134 = arith.addf %132, %133 : vector<64x64xf32>
    %cst_51 = arith.constant dense<0.000000e+00> : vector<64xf32>
    %135 = vector.multi_reduction <add>, %134, %cst_51 [1] : vector<64x64xf32> to vector<64xf32>
    %136 = vector.shape_cast %135 : vector<64xf32> to vector<64x1xf32>
    %137 = arith.mulf %134, %134 : vector<64x64xf32>
    %cst_52 = arith.constant dense<0.000000e+00> : vector<64xf32>
    %138 = vector.multi_reduction <add>, %137, %cst_52 [1] : vector<64x64xf32> to vector<64xf32>
    %139 = vector.shape_cast %138 : vector<64xf32> to vector<64x1xf32>
    %cst_53 = arith.constant 1.562500e-02 : f32
    %140 = vector.broadcast %cst_53 : f32 to vector<64x1xf32>
    %141 = arith.mulf %136, %140 : vector<64x1xf32>
    %cst_54 = arith.constant 1.562500e-02 : f32
    %142 = vector.broadcast %cst_54 : f32 to vector<64x1xf32>
    %143 = arith.mulf %139, %142 : vector<64x1xf32>
    %144 = arith.mulf %141, %141 : vector<64x1xf32>
    %145 = arith.subf %143, %144 : vector<64x1xf32>
    %146 = vector.broadcast %141 : vector<64x1xf32> to vector<64x64xf32>
    %147 = arith.subf %134, %146 : vector<64x64xf32>
    %cst_55 = arith.constant 9.99999974E-6 : f32
    %148 = vector.broadcast %cst_55 : f32 to vector<64x1xf32>
    %149 = arith.addf %145, %148 : vector<64x1xf32>
    %150 = math.rsqrt %149 : vector<64x1xf32>
    %151 = vector.broadcast %150 : vector<64x1xf32> to vector<64x64xf32>
    %152 = arith.mulf %147, %151 : vector<64x64xf32>
    %153 = vector.broadcast %9 : vector<1x64xf32> to vector<64x64xf32>
    %154 = arith.mulf %152, %153 : vector<64x64xf32>
    %155 = vector.broadcast %10 : vector<1x64xf32> to vector<64x64xf32>
    %156 = arith.addf %154, %155 : vector<64x64xf32>
    %cst_56 = arith.constant 5.000000e-01 : f32
    %157 = vector.broadcast %cst_56 : f32 to vector<64x64xf32>
    %158 = arith.mulf %157, %156 : vector<64x64xf32>
    %cst_57 = arith.constant 0.707106769 : f32
    %159 = vector.broadcast %cst_57 : f32 to vector<64x64xf32>
    %160 = arith.mulf %156, %159 : vector<64x64xf32>
    %161 = math.erf %160 : vector<64x64xf32>
    %cst_58 = arith.constant 1.000000e+00 : f32
    %162 = vector.broadcast %cst_58 : f32 to vector<64x64xf32>
    %163 = arith.addf %162, %161 : vector<64x64xf32>
    %164 = arith.mulf %158, %163 : vector<64x64xf32>
    %165 = arith.truncf %164 : vector<64x64xf32> to vector<64x64xbf16>
    %cst_59 = arith.constant dense<0.000000e+00> : vector<64x128xf32>
    %166 = tpu.matmul %165, %11, %cst_59 {dimension_numbers = #tpu.dot_dimension_numbers<[1], [0], [0], [1], [0, 0, 1, 1], [], []>} : vector<64x64xbf16>, vector<64x128xbf16>, vector<64x128xf32> -> vector<64x128xf32>
    %167 = vector.broadcast %12 : vector<1x128xf32> to vector<64x128xf32>
    %168 = arith.addf %166, %167 : vector<64x128xf32>
    %169 = math.exp %168 : vector<64x128xf32>
    %170 = arith.select %2, %169, %168 : vector<64x128xi1>, vector<64x128xf32>
    %171 = arith.index_cast %94 : i32 to index
    %c0_60 = arith.constant 0 : index
    %172 = vector.load %arg12[%171, %c0_60] : memref<256x128xf32, #tpu.memory_space<vmem>>, vector<64x128xf32>
    tpu.vector_store %arg12[%171, %c0_60], %170 {strides = array<i32>} : memref<256x128xf32, #tpu.memory_space<vmem>>, vector<64x128xf32>,
    %c2_i32 = arith.constant 2 : i32
    %c64_i32_61 = arith.constant 64 : i32
    %173 = arith.muli %c2_i32, %c64_i32_61 : i32
    %174 = tpu.assume_multiple %173, 8 : i32
    %175 = arith.index_cast %174 : i32 to index
    %c0_62 = arith.constant 0 : index
    %176 = vector.load %arg1[%175, %c0_62] : memref<256x32xf32, #tpu.memory_space<vmem>>, vector<64x32xf32>
    %177 = arith.truncf %176 : vector<64x32xf32> to vector<64x32xbf16>
    %cst_63 = arith.constant dense<0.000000e+00> : vector<64x64xf32>
    %178 = tpu.matmul %177, %3, %cst_63 {dimension_numbers = #tpu.dot_dimension_numbers<[1], [0], [0], [1], [0, 0, 1, 1], [], []>} : vector<64x32xbf16>, vector<32x64xbf16>, vector<64x64xf32> -> vector<64x64xf32>
    %179 = vector.broadcast %4 : vector<1x64xf32> to vector<64x64xf32>
    %180 = arith.addf %178, %179 : vector<64x64xf32>
    %cst_64 = arith.constant dense<0.000000e+00> : vector<64xf32>
    %181 = vector.multi_reduction <add>, %180, %cst_64 [1] : vector<64x64xf32> to vector<64xf32>
    %182 = vector.shape_cast %181 : vector<64xf32> to vector<64x1xf32>
    %183 = arith.mulf %180, %180 : vector<64x64xf32>
    %cst_65 = arith.constant dense<0.000000e+00> : vector<64xf32>
    %184 = vector.multi_reduction <add>, %183, %cst_65 [1] : vector<64x64xf32> to vector<64xf32>
    %185 = vector.shape_cast %184 : vector<64xf32> to vector<64x1xf32>
    %cst_66 = arith.constant 1.562500e-02 : f32
    %186 = vector.broadcast %cst_66 : f32 to vector<64x1xf32>
    %187 = arith.mulf %182, %186 : vector<64x1xf32>
    %cst_67 = arith.constant 1.562500e-02 : f32
    %188 = vector.broadcast %cst_67 : f32 to vector<64x1xf32>
    %189 = arith.mulf %185, %188 : vector<64x1xf32>
    %190 = arith.mulf %187, %187 : vector<64x1xf32>
    %191 = arith.subf %189, %190 : vector<64x1xf32>
    %192 = vector.broadcast %187 : vector<64x1xf32> to vector<64x64xf32>
    %193 = arith.subf %180, %192 : vector<64x64xf32>
    %cst_68 = arith.constant 9.99999974E-6 : f32
    %194 = vector.broadcast %cst_68 : f32 to vector<64x1xf32>
    %195 = arith.addf %191, %194 : vector<64x1xf32>
    %196 = math.rsqrt %195 : vector<64x1xf32>
    %197 = vector.broadcast %196 : vector<64x1xf32> to vector<64x64xf32>
    %198 = arith.mulf %193, %197 : vector<64x64xf32>
    %199 = vector.broadcast %5 : vector<1x64xf32> to vector<64x64xf32>
    %200 = arith.mulf %198, %199 : vector<64x64xf32>
    %201 = vector.broadcast %6 : vector<1x64xf32> to vector<64x64xf32>
    %202 = arith.addf %200, %201 : vector<64x64xf32>
    %cst_69 = arith.constant 5.000000e-01 : f32
    %203 = vector.broadcast %cst_69 : f32 to vector<64x64xf32>
    %204 = arith.mulf %203, %202 : vector<64x64xf32>
    %cst_70 = arith.constant 0.707106769 : f32
    %205 = vector.broadcast %cst_70 : f32 to vector<64x64xf32>
    %206 = arith.mulf %202, %205 : vector<64x64xf32>
    %207 = math.erf %206 : vector<64x64xf32>
    %cst_71 = arith.constant 1.000000e+00 : f32
    %208 = vector.broadcast %cst_71 : f32 to vector<64x64xf32>
    %209 = arith.addf %208, %207 : vector<64x64xf32>
    %210 = arith.mulf %204, %209 : vector<64x64xf32>
    %211 = arith.truncf %210 : vector<64x64xf32> to vector<64x64xbf16>
    %cst_72 = arith.constant dense<0.000000e+00> : vector<64x64xf32>
    %212 = tpu.matmul %211, %7, %cst_72 {dimension_numbers = #tpu.dot_dimension_numbers<[1], [0], [0], [1], [0, 0, 1, 1], [], []>} : vector<64x64xbf16>, vector<64x64xbf16>, vector<64x64xf32> -> vector<64x64xf32>
    %213 = vector.broadcast %8 : vector<1x64xf32> to vector<64x64xf32>
    %214 = arith.addf %212, %213 : vector<64x64xf32>
    %cst_73 = arith.constant dense<0.000000e+00> : vector<64xf32>
    %215 = vector.multi_reduction <add>, %214, %cst_73 [1] : vector<64x64xf32> to vector<64xf32>
    %216 = vector.shape_cast %215 : vector<64xf32> to vector<64x1xf32>
    %217 = arith.mulf %214, %214 : vector<64x64xf32>
    %cst_74 = arith.constant dense<0.000000e+00> : vector<64xf32>
    %218 = vector.multi_reduction <add>, %217, %cst_74 [1] : vector<64x64xf32> to vector<64xf32>
    %219 = vector.shape_cast %218 : vector<64xf32> to vector<64x1xf32>
    %cst_75 = arith.constant 1.562500e-02 : f32
    %220 = vector.broadcast %cst_75 : f32 to vector<64x1xf32>
    %221 = arith.mulf %216, %220 : vector<64x1xf32>
    %cst_76 = arith.constant 1.562500e-02 : f32
    %222 = vector.broadcast %cst_76 : f32 to vector<64x1xf32>
    %223 = arith.mulf %219, %222 : vector<64x1xf32>
    %224 = arith.mulf %221, %221 : vector<64x1xf32>
    %225 = arith.subf %223, %224 : vector<64x1xf32>
    %226 = vector.broadcast %221 : vector<64x1xf32> to vector<64x64xf32>
    %227 = arith.subf %214, %226 : vector<64x64xf32>
    %cst_77 = arith.constant 9.99999974E-6 : f32
    %228 = vector.broadcast %cst_77 : f32 to vector<64x1xf32>
    %229 = arith.addf %225, %228 : vector<64x1xf32>
    %230 = math.rsqrt %229 : vector<64x1xf32>
    %231 = vector.broadcast %230 : vector<64x1xf32> to vector<64x64xf32>
    %232 = arith.mulf %227, %231 : vector<64x64xf32>
    %233 = vector.broadcast %9 : vector<1x64xf32> to vector<64x64xf32>
    %234 = arith.mulf %232, %233 : vector<64x64xf32>
    %235 = vector.broadcast %10 : vector<1x64xf32> to vector<64x64xf32>
    %236 = arith.addf %234, %235 : vector<64x64xf32>
    %cst_78 = arith.constant 5.000000e-01 : f32
    %237 = vector.broadcast %cst_78 : f32 to vector<64x64xf32>
    %238 = arith.mulf %237, %236 : vector<64x64xf32>
    %cst_79 = arith.constant 0.707106769 : f32
    %239 = vector.broadcast %cst_79 : f32 to vector<64x64xf32>
    %240 = arith.mulf %236, %239 : vector<64x64xf32>
    %241 = math.erf %240 : vector<64x64xf32>
    %cst_80 = arith.constant 1.000000e+00 : f32
    %242 = vector.broadcast %cst_80 : f32 to vector<64x64xf32>
    %243 = arith.addf %242, %241 : vector<64x64xf32>
    %244 = arith.mulf %238, %243 : vector<64x64xf32>
    %245 = arith.truncf %244 : vector<64x64xf32> to vector<64x64xbf16>
    %cst_81 = arith.constant dense<0.000000e+00> : vector<64x128xf32>
    %246 = tpu.matmul %245, %11, %cst_81 {dimension_numbers = #tpu.dot_dimension_numbers<[1], [0], [0], [1], [0, 0, 1, 1], [], []>} : vector<64x64xbf16>, vector<64x128xbf16>, vector<64x128xf32> -> vector<64x128xf32>
    %247 = vector.broadcast %12 : vector<1x128xf32> to vector<64x128xf32>
    %248 = arith.addf %246, %247 : vector<64x128xf32>
    %249 = math.exp %248 : vector<64x128xf32>
    %250 = arith.select %2, %249, %248 : vector<64x128xi1>, vector<64x128xf32>
    %251 = arith.index_cast %174 : i32 to index
    %c0_82 = arith.constant 0 : index
    %252 = vector.load %arg12[%251, %c0_82] : memref<256x128xf32, #tpu.memory_space<vmem>>, vector<64x128xf32>
    tpu.vector_store %arg12[%251, %c0_82], %250 {strides = array<i32>} : memref<256x128xf32, #tpu.memory_space<vmem>>, vector<64x128xf32>,
    %c3_i32 = arith.constant 3 : i32
    %c64_i32_83 = arith.constant 64 : i32
    %253 = arith.muli %c3_i32, %c64_i32_83 : i32
    %254 = tpu.assume_multiple %253, 8 : i32
    %255 = arith.index_cast %254 : i32 to index
    %c0_84 = arith.constant 0 : index
    %256 = vector.load %arg1[%255, %c0_84] : memref<256x32xf32, #tpu.memory_space<vmem>>, vector<64x32xf32>
    %257 = arith.truncf %256 : vector<64x32xf32> to vector<64x32xbf16>
    %cst_85 = arith.constant dense<0.000000e+00> : vector<64x64xf32>
    %258 = tpu.matmul %257, %3, %cst_85 {dimension_numbers = #tpu.dot_dimension_numbers<[1], [0], [0], [1], [0, 0, 1, 1], [], []>} : vector<64x32xbf16>, vector<32x64xbf16>, vector<64x64xf32> -> vector<64x64xf32>
    %259 = vector.broadcast %4 : vector<1x64xf32> to vector<64x64xf32>
    %260 = arith.addf %258, %259 : vector<64x64xf32>
    %cst_86 = arith.constant dense<0.000000e+00> : vector<64xf32>
    %261 = vector.multi_reduction <add>, %260, %cst_86 [1] : vector<64x64xf32> to vector<64xf32>
    %262 = vector.shape_cast %261 : vector<64xf32> to vector<64x1xf32>
    %263 = arith.mulf %260, %260 : vector<64x64xf32>
    %cst_87 = arith.constant dense<0.000000e+00> : vector<64xf32>
    %264 = vector.multi_reduction <add>, %263, %cst_87 [1] : vector<64x64xf32> to vector<64xf32>
    %265 = vector.shape_cast %264 : vector<64xf32> to vector<64x1xf32>
    %cst_88 = arith.constant 1.562500e-02 : f32
    %266 = vector.broadcast %cst_88 : f32 to vector<64x1xf32>
    %267 = arith.mulf %262, %266 : vector<64x1xf32>
    %cst_89 = arith.constant 1.562500e-02 : f32
    %268 = vector.broadcast %cst_89 : f32 to vector<64x1xf32>
    %269 = arith.mulf %265, %268 : vector<64x1xf32>
    %270 = arith.mulf %267, %267 : vector<64x1xf32>
    %271 = arith.subf %269, %270 : vector<64x1xf32>
    %272 = vector.broadcast %267 : vector<64x1xf32> to vector<64x64xf32>
    %273 = arith.subf %260, %272 : vector<64x64xf32>
    %cst_90 = arith.constant 9.99999974E-6 : f32
    %274 = vector.broadcast %cst_90 : f32 to vector<64x1xf32>
    %275 = arith.addf %271, %274 : vector<64x1xf32>
    %276 = math.rsqrt %275 : vector<64x1xf32>
    %277 = vector.broadcast %276 : vector<64x1xf32> to vector<64x64xf32>
    %278 = arith.mulf %273, %277 : vector<64x64xf32>
    %279 = vector.broadcast %5 : vector<1x64xf32> to vector<64x64xf32>
    %280 = arith.mulf %278, %279 : vector<64x64xf32>
    %281 = vector.broadcast %6 : vector<1x64xf32> to vector<64x64xf32>
    %282 = arith.addf %280, %281 : vector<64x64xf32>
    %cst_91 = arith.constant 5.000000e-01 : f32
    %283 = vector.broadcast %cst_91 : f32 to vector<64x64xf32>
    %284 = arith.mulf %283, %282 : vector<64x64xf32>
    %cst_92 = arith.constant 0.707106769 : f32
    %285 = vector.broadcast %cst_92 : f32 to vector<64x64xf32>
    %286 = arith.mulf %282, %285 : vector<64x64xf32>
    %287 = math.erf %286 : vector<64x64xf32>
    %cst_93 = arith.constant 1.000000e+00 : f32
    %288 = vector.broadcast %cst_93 : f32 to vector<64x64xf32>
    %289 = arith.addf %288, %287 : vector<64x64xf32>
    %290 = arith.mulf %284, %289 : vector<64x64xf32>
    %291 = arith.truncf %290 : vector<64x64xf32> to vector<64x64xbf16>
    %cst_94 = arith.constant dense<0.000000e+00> : vector<64x64xf32>
    %292 = tpu.matmul %291, %7, %cst_94 {dimension_numbers = #tpu.dot_dimension_numbers<[1], [0], [0], [1], [0, 0, 1, 1], [], []>} : vector<64x64xbf16>, vector<64x64xbf16>, vector<64x64xf32> -> vector<64x64xf32>
    %293 = vector.broadcast %8 : vector<1x64xf32> to vector<64x64xf32>
    %294 = arith.addf %292, %293 : vector<64x64xf32>
    %cst_95 = arith.constant dense<0.000000e+00> : vector<64xf32>
    %295 = vector.multi_reduction <add>, %294, %cst_95 [1] : vector<64x64xf32> to vector<64xf32>
    %296 = vector.shape_cast %295 : vector<64xf32> to vector<64x1xf32>
    %297 = arith.mulf %294, %294 : vector<64x64xf32>
    %cst_96 = arith.constant dense<0.000000e+00> : vector<64xf32>
    %298 = vector.multi_reduction <add>, %297, %cst_96 [1] : vector<64x64xf32> to vector<64xf32>
    %299 = vector.shape_cast %298 : vector<64xf32> to vector<64x1xf32>
    %cst_97 = arith.constant 1.562500e-02 : f32
    %300 = vector.broadcast %cst_97 : f32 to vector<64x1xf32>
    %301 = arith.mulf %296, %300 : vector<64x1xf32>
    %cst_98 = arith.constant 1.562500e-02 : f32
    %302 = vector.broadcast %cst_98 : f32 to vector<64x1xf32>
    %303 = arith.mulf %299, %302 : vector<64x1xf32>
    %304 = arith.mulf %301, %301 : vector<64x1xf32>
    %305 = arith.subf %303, %304 : vector<64x1xf32>
    %306 = vector.broadcast %301 : vector<64x1xf32> to vector<64x64xf32>
    %307 = arith.subf %294, %306 : vector<64x64xf32>
    %cst_99 = arith.constant 9.99999974E-6 : f32
    %308 = vector.broadcast %cst_99 : f32 to vector<64x1xf32>
    %309 = arith.addf %305, %308 : vector<64x1xf32>
    %310 = math.rsqrt %309 : vector<64x1xf32>
    %311 = vector.broadcast %310 : vector<64x1xf32> to vector<64x64xf32>
    %312 = arith.mulf %307, %311 : vector<64x64xf32>
    %313 = vector.broadcast %9 : vector<1x64xf32> to vector<64x64xf32>
    %314 = arith.mulf %312, %313 : vector<64x64xf32>
    %315 = vector.broadcast %10 : vector<1x64xf32> to vector<64x64xf32>
    %316 = arith.addf %314, %315 : vector<64x64xf32>
    %cst_100 = arith.constant 5.000000e-01 : f32
    %317 = vector.broadcast %cst_100 : f32 to vector<64x64xf32>
    %318 = arith.mulf %317, %316 : vector<64x64xf32>
    %cst_101 = arith.constant 0.707106769 : f32
    %319 = vector.broadcast %cst_101 : f32 to vector<64x64xf32>
    %320 = arith.mulf %316, %319 : vector<64x64xf32>
    %321 = math.erf %320 : vector<64x64xf32>
    %cst_102 = arith.constant 1.000000e+00 : f32
    %322 = vector.broadcast %cst_102 : f32 to vector<64x64xf32>
    %323 = arith.addf %322, %321 : vector<64x64xf32>
    %324 = arith.mulf %318, %323 : vector<64x64xf32>
    %325 = arith.truncf %324 : vector<64x64xf32> to vector<64x64xbf16>
    %cst_103 = arith.constant dense<0.000000e+00> : vector<64x128xf32>
    %326 = tpu.matmul %325, %11, %cst_103 {dimension_numbers = #tpu.dot_dimension_numbers<[1], [0], [0], [1], [0, 0, 1, 1], [], []>} : vector<64x64xbf16>, vector<64x128xbf16>, vector<64x128xf32> -> vector<64x128xf32>
    %327 = vector.broadcast %12 : vector<1x128xf32> to vector<64x128xf32>
    %328 = arith.addf %326, %327 : vector<64x128xf32>
    %329 = math.exp %328 : vector<64x128xf32>
    %330 = arith.select %2, %329, %328 : vector<64x128xi1>, vector<64x128xf32>
    %331 = arith.index_cast %254 : i32 to index
    %c0_104 = arith.constant 0 : index
    %332 = vector.load %arg12[%331, %c0_104] : memref<256x128xf32, #tpu.memory_space<vmem>>, vector<64x128xf32>
    tpu.vector_store %arg12[%331, %c0_104], %330 {strides = array<i32>} : memref<256x128xf32, #tpu.memory_space<vmem>>, vector<64x128xf32>,
    %c4_i32 = arith.constant 4 : i32
    return
  }
  func.func @transform_0(%arg0: i32) -> (i32, i32) {
    %c0_i32 = arith.constant 0 : i32
    %c0_i32_0 = arith.constant 0 : i32
    return %arg0, %c0_i32 : i32, i32
  }
  func.func @transform_1(%arg0: i32) -> (i32, i32) {
    %c0_i32 = arith.constant 0 : i32
    %c0_i32_0 = arith.constant 0 : i32
    %c0_i32_1 = arith.constant 0 : i32
    return %c0_i32, %c0_i32_0 : i32, i32
  }
  func.func @transform_2(%arg0: i32) -> (i32, i32) {
    %c0_i32 = arith.constant 0 : i32
    %c0_i32_0 = arith.constant 0 : i32
    %c0_i32_1 = arith.constant 0 : i32
    return %c0_i32, %c0_i32_0 : i32, i32
  }
  func.func @transform_3(%arg0: i32) -> (i32, i32) {
    %c0_i32 = arith.constant 0 : i32
    %c0_i32_0 = arith.constant 0 : i32
    %c0_i32_1 = arith.constant 0 : i32
    return %c0_i32, %c0_i32_0 : i32, i32
  }
  func.func @transform_4(%arg0: i32) -> (i32, i32) {
    %c0_i32 = arith.constant 0 : i32
    %c0_i32_0 = arith.constant 0 : i32
    %c0_i32_1 = arith.constant 0 : i32
    return %c0_i32, %c0_i32_0 : i32, i32
  }
  func.func @transform_5(%arg0: i32) -> (i32, i32) {
    %c0_i32 = arith.constant 0 : i32
    %c0_i32_0 = arith.constant 0 : i32
    %c0_i32_1 = arith.constant 0 : i32
    return %c0_i32, %c0_i32_0 : i32, i32
  }
  func.func @transform_6(%arg0: i32) -> (i32, i32) {
    %c0_i32 = arith.constant 0 : i32
    %c0_i32_0 = arith.constant 0 : i32
    %c0_i32_1 = arith.constant 0 : i32
    return %c0_i32, %c0_i32_0 : i32, i32
  }
  func.func @transform_7(%arg0: i32) -> (i32, i32) {
    %c0_i32 = arith.constant 0 : i32
    %c0_i32_0 = arith.constant 0 : i32
    %c0_i32_1 = arith.constant 0 : i32
    return %c0_i32, %c0_i32_0 : i32, i32
  }
  func.func @transform_8(%arg0: i32) -> (i32, i32) {
    %c0_i32 = arith.constant 0 : i32
    %c0_i32_0 = arith.constant 0 : i32
    %c0_i32_1 = arith.constant 0 : i32
    return %c0_i32, %c0_i32_0 : i32, i32
  }
  func.func @transform_9(%arg0: i32) -> (i32, i32) {
    %c0_i32 = arith.constant 0 : i32
    %c0_i32_0 = arith.constant 0 : i32
    %c0_i32_1 = arith.constant 0 : i32
    return %c0_i32, %c0_i32_0 : i32, i32
  }
  func.func @transform_10(%arg0: i32) -> (i32, i32) {
    %c0_i32 = arith.constant 0 : i32
    %c0_i32_0 = arith.constant 0 : i32
    %c0_i32_1 = arith.constant 0 : i32
    return %c0_i32, %c0_i32_0 : i32, i32
  }
  func.func @transform_11(%arg0: i32) -> (i32, i32) {
    %c0_i32 = arith.constant 0 : i32
    %c0_i32_0 = arith.constant 0 : i32
    return %arg0, %c0_i32 : i32, i32
  }
}

</mosaic_0001>

<llo_original>
// kernel: tpu_custom_call.1
$region0: #{tpu_custom_call.1}
  #allocation0 [shape = 'u32[]', space=smem, size = 0x4, offset = 0x4, fixed_abs, tag = 'smem constant byte address 0x4 - core index']
  #allocation1 [shape = 'u32[72,128]{1,0:T(1,128)}', space=vmem, size = 0x9000, scoped, tag = 'internal scratch']
  %s0 = inlined_call_operand.vmem [shape: f32[256,32], index: 0, kind: input, shape index: {}]
  %s1 = inlined_call_operand.vmem [shape: bf16[32,64], index: 1, kind: input, shape index: {}]
  %s2 = inlined_call_operand.vmem [shape: f32[1,64], index: 2, kind: input, shape index: {}]
  %s3 = inlined_call_operand.vmem [shape: f32[1,64], index: 3, kind: input, shape index: {}]
  %s4 = inlined_call_operand.vmem [shape: f32[1,64], index: 4, kind: input, shape index: {}]
  %s5 = inlined_call_operand.vmem [shape: bf16[64,64], index: 5, kind: input, shape index: {}]
  %s6 = inlined_call_operand.vmem [shape: f32[1,64], index: 6, kind: input, shape index: {}]
  %s7 = inlined_call_operand.vmem [shape: f32[1,64], index: 7, kind: input, shape index: {}]
  %s8 = inlined_call_operand.vmem [shape: f32[1,64], index: 8, kind: input, shape index: {}]
  %s9 = inlined_call_operand.vmem [shape: bf16[64,128], index: 9, kind: input, shape index: {}]
  %s10 = inlined_call_operand.vmem [shape: f32[1,128], index: 10, kind: input, shape index: {}]
  %s11 = inlined_call_operand.hbm [shape: f32[256,128], index: 11, kind: output, shape index: {}]
  %s12 = sld [smem:[#allocation0]]
  $region54: #{tpu_custom_call.1} parent=0
    _
  %s14 = ssub.s32 1, %s12
  %s15 = scalar_select 0, %s14, %s12
  $region1: #{tpu_custom_call.1} parent=0
    #allocation2 [shape = 'u8[131072]{0}', space=vmem, size = 0x20000, scoped, tag = 'output window, operand 0, single buffered']
    #allocation3 [shape = 's32[1]{0}', space=sflag, size = 0x4, scoped, tag = 'scoped memory for tpu_custom_call.1']
    %16 = vsyncpa [#allocation3], 0
    // Predicated region
    $region2: #{tpu_custom_call.1} parent=1 // pred_check
      _
    $region3: #{tpu_custom_call.1} parent=1 // pred_check_branch
      %18 = sbr.rel (0) target = $region5
    $region4: #{tpu_custom_call.1} parent=1 // pred_region
      _
    $region5: #{tpu_custom_call.1} parent=1 // pred_fallthru
      _
    // Predicated region
    $region6: #{tpu_custom_call.1} parent=1 // pred_check
      _
    $region7: #{tpu_custom_call.1} parent=1 // pred_check_branch
      %20 = sbr.rel (0) target = $region9
    $region8: #{tpu_custom_call.1} parent=1 // pred_region
      _
    $region9: #{tpu_custom_call.1} parent=1 // pred_fallthru
      _
    // Predicated region
    $region10: #{tpu_custom_call.1} parent=1 // pred_check
      _
    $region11: #{tpu_custom_call.1} parent=1 // pred_check_branch
      %22 = sbr.rel (0) target = $region13
    $region12: #{tpu_custom_call.1} parent=1 // pred_region
      _
    $region13: #{tpu_custom_call.1} parent=1 // pred_fallthru
      _
    // Predicated region
    $region14: #{tpu_custom_call.1} parent=1 // pred_check
      _
    $region15: #{tpu_custom_call.1} parent=1 // pred_check_branch
      %24 = sbr.rel (0) target = $region17
    $region16: #{tpu_custom_call.1} parent=1 // pred_region
      _
    $region17: #{tpu_custom_call.1} parent=1 // pred_fallthru
      _
    // Predicated region
    $region18: #{tpu_custom_call.1} parent=1 // pred_check
      _
    $region19: #{tpu_custom_call.1} parent=1 // pred_check_branch
      %26 = sbr.rel (0) target = $region21
    $region20: #{tpu_custom_call.1} parent=1 // pred_region
      _
    $region21: #{tpu_custom_call.1} parent=1 // pred_fallthru
      _
    // Predicated region
    $region22: #{tpu_custom_call.1} parent=1 // pred_check
      _
    $region23: #{tpu_custom_call.1} parent=1 // pred_check_branch
      %28 = sbr.rel (0) target = $region25
    $region24: #{tpu_custom_call.1} parent=1 // pred_region
      _
    $region25: #{tpu_custom_call.1} parent=1 // pred_fallthru
      _
    // Predicated region
    $region26: #{tpu_custom_call.1} parent=1 // pred_check
      _
    $region27: #{tpu_custom_call.1} parent=1 // pred_check_branch
      %30 = sbr.rel (0) target = $region29
    $region28: #{tpu_custom_call.1} parent=1 // pred_region
      _
    $region29: #{tpu_custom_call.1} parent=1 // pred_fallthru
      _
    // Predicated region
    $region30: #{tpu_custom_call.1} parent=1 // pred_check
      _
    $region31: #{tpu_custom_call.1} parent=1 // pred_check_branch
      %32 = sbr.rel (0) target = $region33
    $region32: #{tpu_custom_call.1} parent=1 // pred_region
      _
    $region33: #{tpu_custom_call.1} parent=1 // pred_fallthru
      _
    // Predicated region
    $region34: #{tpu_custom_call.1} parent=1 // pred_check
      _
    $region35: #{tpu_custom_call.1} parent=1 // pred_check_branch
      %34 = sbr.rel (0) target = $region37
    $region36: #{tpu_custom_call.1} parent=1 // pred_region
      _
    $region37: #{tpu_custom_call.1} parent=1 // pred_fallthru
      _
    // Predicated region
    $region38: #{tpu_custom_call.1} parent=1 // pred_check
      _
    $region39: #{tpu_custom_call.1} parent=1 // pred_check_branch
      %36 = sbr.rel (0) target = $region41
    $region40: #{tpu_custom_call.1} parent=1 // pred_region
      _
    $region41: #{tpu_custom_call.1} parent=1 // pred_fallthru
      _
    // Predicated region
    $region42: #{tpu_custom_call.1} parent=1 // pred_check
      _
    $region43: #{tpu_custom_call.1} parent=1 // pred_check_branch
      %38 = sbr.rel (0) target = $region45
    $region44: #{tpu_custom_call.1} parent=1 // pred_region
      _
    $region45: #{tpu_custom_call.1} parent=1 // pred_fallthru
      _
    %v40 = vlaneseq
    %v41 = vand.u32 %v40, 127
    %vm42 = vcmp.ge.s32.totalorder %v41, 16
    %v43 = vld [vmem:[%s1] sm:$0xf]
    %v44 = vld [vmem:[%s1 + $0x4] sm:$0xf]
    %v45 = vld [vmem:[%s1 + $0x8] sm:$0xf]
    %v46 = vld [vmem:[%s1 + $0xc] sm:$0xf]
    %v47 = vld [vmem:[%s2] sm:$0x1]
    %v48 = vld [vmem:[%s3] sm:$0x1]
    %v49 = vld [vmem:[%s4] sm:$0x1]
    %v50 = vld [vmem:[%s5] sm:$0xf]
    %v51 = vld [vmem:[%s5 + $0x4] sm:$0xf]
    %v52 = vld [vmem:[%s5 + $0x8] sm:$0xf]
    %v53 = vld [vmem:[%s5 + $0xc] sm:$0xf]
    %v54 = vld [vmem:[%s5 + $0x10] sm:$0xf]
    %v55 = vld [vmem:[%s5 + $0x14] sm:$0xf]
    %v56 = vld [vmem:[%s5 + $0x18] sm:$0xf]
    %v57 = vld [vmem:[%s5 + $0x1c] sm:$0xf]
    %v58 = vld [vmem:[%s6] sm:$0x1]
    %v59 = vld [vmem:[%s7] sm:$0x1]
    %v60 = vld [vmem:[%s8] sm:$0x1]
    %v61 = vld [vmem:[%s9] sm:$0xf]
    %v62 = vld [vmem:[%s9 + $0x4] sm:$0xf]
    %v63 = vld [vmem:[%s9 + $0x8] sm:$0xf]
    %v64 = vld [vmem:[%s9 + $0xc] sm:$0xf]
    %v65 = vld [vmem:[%s9 + $0x10] sm:$0xf]
    %v66 = vld [vmem:[%s9 + $0x14] sm:$0xf]
    %v67 = vld [vmem:[%s9 + $0x18] sm:$0xf]
    %v68 = vld [vmem:[%s9 + $0x1c] sm:$0xf]
    %v69 = vld [vmem:[%s10] sm:$0x1]
    %v70 = vld [vmem:[%s0] sm:$0xff]
    %v71 = vld [vmem:[%s0 + $0x8] sm:$0xff]
    %v72 = vld [vmem:[%s0 + $0x10] sm:$0xff]
    %v73 = vld [vmem:[%s0 + $0x18] sm:$0xff]
    %v74 = vld [vmem:[%s0 + $0x20] sm:$0xff]
    %v75 = vld [vmem:[%s0 + $0x28] sm:$0xff]
    %v76 = vld [vmem:[%s0 + $0x30] sm:$0xff]
    %v77 = vld [vmem:[%s0 + $0x38] sm:$0xff]
    %v78 = vpack.c.bf16 %v71, %v70
    %v79 = vpack.c.bf16 %v73, %v72
    %v80 = vpack.c.bf16 %v75, %v74
    %v81 = vpack.c.bf16 %v77, %v76
    %v83 = vperm.slane %v47, 0
    %v89 = vunpack.c.l.b16 %v43
    %v90 = vunpack.c.l.b16 %v44
    %v91 = vunpack.c.l.b16 %v45
    %v92 = vunpack.c.l.b16 %v46
    %v93 = vpack.c.b16 %v90, %v89
    %v94 = vpack.c.b16 %v92, %v91
    %vm97 = vcmask 261120
    %v99 = vsel %vm97, %v78, 0
    %v102 = vsel %vm97, %v79, 0
    %v105 = vsel %vm97, %v80, 0
    %v108 = vsel %vm97, %v81, 0
    %110 = vmatpush.bf16.msra.mxu0 0
    %111 = vmatpush.bf16.msra.mxu0 0
    %112 = vmatpush.bf16.msra.mxu0 0
    %113 = vmatpush.bf16.msra.mxu0 0
    %114 = vmatpush.bf16.msra.mxu0 0
    %115 = vmatpush.bf16.msra.mxu0 0
    %116 = vmatpush.bf16.msra.mxu0 %v94
    %117 = vmatpush.bf16.msra.mxu0 %v93
    %118 = vmatmul.bf16.gmra.mxu0 %v99
    %v119 = vpop.f32.mrf.mxu0
    %v120 = vadd.f32 %v83, %v119
    %v121 = vpop.f32.mrf.mxu0
    %v122 = vadd.f32 %v83, %v121
    %123 = vmatmul.bf16.gmra.mxu0 %v102
    %v124 = vpop.f32.mrf.mxu0
    %v125 = vadd.f32 %v83, %v124
    %v126 = vpop.f32.mrf.mxu0
    %v127 = vadd.f32 %v83, %v126
    %128 = vmatmul.bf16.gmra.mxu0 %v105
    %v129 = vpop.f32.mrf.mxu0
    %v130 = vadd.f32 %v83, %v129
    %v131 = vpop.f32.mrf.mxu0
    %v132 = vadd.f32 %v83, %v131
    %133 = vmatmul.bf16.gmra.mxu0 %v108
    %v134 = vpop.f32.mrf.mxu0
    %v135 = vadd.f32 %v83, %v134
    %v136 = vpop.f32.mrf.mxu0
    %v137 = vadd.f32 %v83, %v136
    %138 = vdwg.mxu0
    %vm139 = vcmask 523264
    %v140 = vsel %vm139, %v120, 0.0
    %141 = vadd.xlane.f32.xlu0 %v140
    %v142 = vpop.xlane.xlu0 %141
    %v143 = vsel %vm139, %v122, 0.0
    %144 = vadd.xlane.f32.xlu0 %v143
    %v145 = vpop.xlane.xlu0 %144
    %v146 = vsel %vm139, %v125, 0.0
    %147 = vadd.xlane.f32.xlu0 %v146
    %v148 = vpop.xlane.xlu0 %147
    %v149 = vsel %vm139, %v127, 0.0
    %150 = vadd.xlane.f32.xlu0 %v149
    %v151 = vpop.xlane.xlu0 %150
    %v152 = vsel %vm139, %v130, 0.0
    %153 = vadd.xlane.f32.xlu0 %v152
    %v154 = vpop.xlane.xlu0 %153
    %v155 = vsel %vm139, %v132, 0.0
    %156 = vadd.xlane.f32.xlu0 %v155
    %v157 = vpop.xlane.xlu0 %156
    %v158 = vsel %vm139, %v135, 0.0
    %159 = vadd.xlane.f32.xlu0 %v158
    %v160 = vpop.xlane.xlu0 %159
    %v161 = vsel %vm139, %v137, 0.0
    %162 = vadd.xlane.f32.xlu0 %v161
    %v163 = vpop.xlane.xlu0 %162
    %v164 = vmul.f32 %v120, %v120
    %v165 = vmul.f32 %v122, %v122
    %v166 = vmul.f32 %v125, %v125
    %v167 = vmul.f32 %v127, %v127
    %v168 = vmul.f32 %v130, %v130
    %v169 = vmul.f32 %v132, %v132
    %v170 = vmul.f32 %v135, %v135
    %v171 = vmul.f32 %v137, %v137
    %v172 = vsel %vm139, %v164, 0.0
    %173 = vadd.xlane.f32.xlu0 %v172
    %v174 = vpop.xlane.xlu0 %173
    %v175 = vsel %vm139, %v165, 0.0
    %176 = vadd.xlane.f32.xlu0 %v175
    %v177 = vpop.xlane.xlu0 %176
    %v178 = vsel %vm139, %v166, 0.0
    %179 = vadd.xlane.f32.xlu0 %v178
    %v180 = vpop.xlane.xlu0 %179
    %v181 = vsel %vm139, %v167, 0.0
    %182 = vadd.xlane.f32.xlu0 %v181
    %v183 = vpop.xlane.xlu0 %182
    %v184 = vsel %vm139, %v168, 0.0
    %185 = vadd.xlane.f32.xlu0 %v184
    %v186 = vpop.xlane.xlu0 %185
    %v187 = vsel %vm139, %v169, 0.0
    %188 = vadd.xlane.f32.xlu0 %v187
    %v189 = vpop.xlane.xlu0 %188
    %v190 = vsel %vm139, %v170, 0.0
    %191 = vadd.xlane.f32.xlu0 %v190
    %v192 = vpop.xlane.xlu0 %191
    %v193 = vsel %vm139, %v171, 0.0
    %194 = vadd.xlane.f32.xlu0 %v193
    %v195 = vpop.xlane.xlu0 %194
    %v196 = vmul.f32 %v142, 0.015625
    %v197 = vmul.f32 %v145, 0.015625
    %v198 = vmul.f32 %v148, 0.015625
    %v199 = vmul.f32 %v151, 0.015625
    %v200 = vmul.f32 %v154, 0.015625
    %v201 = vmul.f32 %v157, 0.015625
    %v202 = vmul.f32 %v160, 0.015625
    %v203 = vmul.f32 %v163, 0.015625
    %v204 = vmul.f32 %v174, 0.015625
    %v205 = vmul.f32 %v177, 0.015625
    %v206 = vmul.f32 %v180, 0.015625
    %v207 = vmul.f32 %v183, 0.015625
    %v208 = vmul.f32 %v186, 0.015625
    %v209 = vmul.f32 %v189, 0.015625
    %v210 = vmul.f32 %v192, 0.015625
    %v211 = vmul.f32 %v195, 0.015625
    %v212 = vmul.f32 %v196, %v196
    %v213 = vmul.f32 %v197, %v197
    %v214 = vmul.f32 %v198, %v198
    %v215 = vmul.f32 %v199, %v199
    %v216 = vmul.f32 %v200, %v200
    %v217 = vmul.f32 %v201, %v201
    %v218 = vmul.f32 %v202, %v202
    %v219 = vmul.f32 %v203, %v203
    %v220 = vsub.f32 %v204, %v212
    %v221 = vsub.f32 %v205, %v213
    %v222 = vsub.f32 %v206, %v214
    %v223 = vsub.f32 %v207, %v215
    %v224 = vsub.f32 %v208, %v216
    %v225 = vsub.f32 %v209, %v217
    %v226 = vsub.f32 %v210, %v218
    %v227 = vsub.f32 %v211, %v219
    %v228 = vsub.f32 %v120, %v196
    %v229 = vsub.f32 %v122, %v197
    %v230 = vsub.f32 %v125, %v198
    %v231 = vsub.f32 %v127, %v199
    %v232 = vsub.f32 %v130, %v200
    %v233 = vsub.f32 %v132, %v201
    %v234 = vsub.f32 %v135, %v202
    %v235 = vsub.f32 %v137, %v203
    %v236 = vadd.f32 %v220, 1e-05
    %v237 = vadd.f32 %v221, 1e-05
    %v238 = vadd.f32 %v222, 1e-05
    %v239 = vadd.f32 %v223, 1e-05
    %v240 = vadd.f32 %v224, 1e-05
    %v241 = vadd.f32 %v225, 1e-05
    %v242 = vadd.f32 %v226, 1e-05
    %v243 = vadd.f32 %v227, 1e-05
    %v244 = vrsqrt.pop %v236
    %v245 = vmul.f32 %v244, %v236
    %v246 = vmul.f32 %v245, %v244
    %v247 = vmul.f32 0.5, %v246
    %v248 = vsub.f32 1.5, %v247
    %v249 = vmul.f32 %v244, %v248
    %vm250 = vweird.f32 %v236
    %vm251 = vweird.f32 %v244
    %vm252 = vmor %vm250, %vm251
    %v253 = vsel %vm252, %v244, %v249
    %v254 = vrsqrt.pop %v237
    %v255 = vmul.f32 %v254, %v237
    %v256 = vmul.f32 %v255, %v254
    %v257 = vmul.f32 0.5, %v256
    %v258 = vsub.f32 1.5, %v257
    %v259 = vmul.f32 %v254, %v258
    %vm260 = vweird.f32 %v237
    %vm261 = vweird.f32 %v254
    %vm262 = vmor %vm260, %vm261
    %v263 = vsel %vm262, %v254, %v259
    %v264 = vrsqrt.pop %v238
    %v265 = vmul.f32 %v264, %v238
    %v266 = vmul.f32 %v265, %v264
    %v267 = vmul.f32 0.5, %v266
    %v268 = vsub.f32 1.5, %v267
    %v269 = vmul.f32 %v264, %v268
    %vm270 = vweird.f32 %v238
    %vm271 = vweird.f32 %v264
    %vm272 = vmor %vm270, %vm271
    %v273 = vsel %vm272, %v264, %v269
    %v274 = vrsqrt.pop %v239
    %v275 = vmul.f32 %v274, %v239
    %v276 = vmul.f32 %v275, %v274
    %v277 = vmul.f32 0.5, %v276
    %v278 = vsub.f32 1.5, %v277
    %v279 = vmul.f32 %v274, %v278
    %vm280 = vweird.f32 %v239
    %vm281 = vweird.f32 %v274
    %vm282 = vmor %vm280, %vm281
    %v283 = vsel %vm282, %v274, %v279
    %v284 = vrsqrt.pop %v240
    %v285 = vmul.f32 %v284, %v240
    %v286 = vmul.f32 %v285, %v284
    %v287 = vmul.f32 0.5, %v286
    %v288 = vsub.f32 1.5, %v287
    %v289 = vmul.f32 %v284, %v288
    %vm290 = vweird.f32 %v240
    %vm291 = vweird.f32 %v284
    %vm292 = vmor %vm290, %vm291
    %v293 = vsel %vm292, %v284, %v289
    %v294 = vrsqrt.pop %v241
    %v295 = vmul.f32 %v294, %v241
    %v296 = vmul.f32 %v295, %v294
    %v297 = vmul.f32 0.5, %v296
    %v298 = vsub.f32 1.5, %v297
    %v299 = vmul.f32 %v294, %v298
    %vm300 = vweird.f32 %v241
    %vm301 = vweird.f32 %v294
    %vm302 = vmor %vm300, %vm301
    %v303 = vsel %vm302, %v294, %v299
    %v304 = vrsqrt.pop %v242
    %v305 = vmul.f32 %v304, %v242
    %v306 = vmul.f32 %v305, %v304
    %v307 = vmul.f32 0.5, %v306
    %v308 = vsub.f32 1.5, %v307
    %v309 = vmul.f32 %v304, %v308
    %vm310 = vweird.f32 %v242
    %vm311 = vweird.f32 %v304
    %vm312 = vmor %vm310, %vm311
    %v313 = vsel %vm312, %v304, %v309
    %v314 = vrsqrt.pop %v243
    %v315 = vmul.f32 %v314, %v243
    %v316 = vmul.f32 %v315, %v314
    %v317 = vmul.f32 0.5, %v316
    %v318 = vsub.f32 1.5, %v317
    %v319 = vmul.f32 %v314, %v318
    %vm320 = vweird.f32 %v243
    %vm321 = vweird.f32 %v314
    %vm322 = vmor %vm320, %vm321
    %v323 = vsel %vm322, %v314, %v319
    %v324 = vmul.f32 %v228, %v253
    %v325 = vmul.f32 %v229, %v263
    %v326 = vmul.f32 %v230, %v273
    %v327 = vmul.f32 %v231, %v283
    %v328 = vmul.f32 %v232, %v293
    %v329 = vmul.f32 %v233, %v303
    %v330 = vmul.f32 %v234, %v313
    %v331 = vmul.f32 %v235, %v323
    %v333 = vperm.slane %v48, 0
    %v335 = vmul.f32 %v324, %v333
    %v336 = vmul.f32 %v325, %v333
    %v337 = vmul.f32 %v326, %v333
    %v338 = vmul.f32 %v327, %v333
    %v339 = vmul.f32 %v328, %v333
    %v340 = vmul.f32 %v329, %v333
    %v341 = vmul.f32 %v330, %v333
    %v342 = vmul.f32 %v331, %v333
    %v344 = vperm.slane %v49, 0
    %v346 = vadd.f32 %v335, %v344
    %v347 = vadd.f32 %v336, %v344
    %v348 = vadd.f32 %v337, %v344
    %v349 = vadd.f32 %v338, %v344
    %v350 = vadd.f32 %v339, %v344
    %v351 = vadd.f32 %v340, %v344
    %v352 = vadd.f32 %v341, %v344
    %v353 = vadd.f32 %v342, %v344
    %v354 = vmul.f32 %v346, 0.5
    %v355 = vmul.f32 %v347, 0.5
    %v356 = vmul.f32 %v348, 0.5
    %v357 = vmul.f32 %v349, 0.5
    %v358 = vmul.f32 %v350, 0.5
    %v359 = vmul.f32 %v351, 0.5
    %v360 = vmul.f32 %v352, 0.5
    %v361 = vmul.f32 %v353, 0.5
    %v362 = vmul.f32 %v346, 0.70710677
    %v363 = vmul.f32 %v347, 0.70710677
    %v364 = vmul.f32 %v348, 0.70710677
    %v365 = vmul.f32 %v349, 0.70710677
    %v366 = vmul.f32 %v350, 0.70710677
    %v367 = vmul.f32 %v351, 0.70710677
    %v368 = vmul.f32 %v352, 0.70710677
    %v369 = vmul.f32 %v353, 0.70710677
    %v370 = vmul.f32 %v362, %v362
    %v371 = vmin.f32 16.0, %v370
    %v372 = vmul.f32 %v371, 2.1237322e-06
    %v373 = vadd.f32 %v372, 0.00028619796
    %v374 = vmul.f32 %v371, %v373
    %v375 = vadd.f32 %v374, 0.0036580483
    %v376 = vmul.f32 %v371, %v375
    %v377 = vadd.f32 %v376, 0.05243302
    %v378 = vmul.f32 %v371, %v377
    %v379 = vadd.f32 %v378, 0.18741608
    %v380 = vmul.f32 %v371, %v379
    %v381 = vadd.f32 %v380, 1.1283791
    %v382 = vmul.f32 %v362, %v381
    %v383 = vmul.f32 %v371, 3.8918573e-05
    %v384 = vadd.f32 %v383, 0.001143296
    %v385 = vmul.f32 %v371, %v384
    %v386 = vadd.f32 %v385, 0.014752088
    %v387 = vmul.f32 %v371, %v386
    %v388 = vadd.f32 %v387, 0.112945676
    %v389 = vmul.f32 %v371, %v388
    %v390 = vadd.f32 %v389, 0.4994258
    %v391 = vmul.f32 %v371, %v390
    %v392 = vadd.f32 %v391, 1.0
    %v393 = vrcp.pop %v392
    %v394 = vmul.f32 %v392, %v393
    %v395 = vsub.f32 1.0, %v394
    %v396 = vmul.f32 %v393, %v395
    %v397 = vadd.f32 %v393, %v396
    %vm398 = vweird.f32 %v392
    %vm399 = vweird.f32 %v393
    %vm400 = vmor %vm398, %vm399
    %v401 = vsel %vm400, %v393, %v397
    %v402 = vand.u32 2147483647, %v392
    %vm403 = vcmp.eq.f32.partialorder %v402, 8.507059e+37
    %v404 = vand.u32 %v392, 2147483648
    %v405 = vor.u32 1.1754944e-38, %v404
    %v406 = vsel %vm403, %v405, %v401
    %v407 = vmul.f32 %v382, %v406
    %v408 = vmin.f32 %v407, 1.0
    %v409 = vmax.f32 %v408, -1.0
    %v410 = vmul.f32 %v363, %v363
    %v411 = vmin.f32 16.0, %v410
    %v412 = vmul.f32 %v411, 2.1237322e-06
    %v413 = vadd.f32 %v412, 0.00028619796
    %v414 = vmul.f32 %v411, %v413
    %v415 = vadd.f32 %v414, 0.0036580483
    %v416 = vmul.f32 %v411, %v415
    %v417 = vadd.f32 %v416, 0.05243302
    %v418 = vmul.f32 %v411, %v417
    %v419 = vadd.f32 %v418, 0.18741608
    %v420 = vmul.f32 %v411, %v419
    %v421 = vadd.f32 %v420, 1.1283791
    %v422 = vmul.f32 %v363, %v421
    %v423 = vmul.f32 %v411, 3.8918573e-05
    %v424 = vadd.f32 %v423, 0.001143296
    %v425 = vmul.f32 %v411, %v424
    %v426 = vadd.f32 %v425, 0.014752088
    %v427 = vmul.f32 %v411, %v426
    %v428 = vadd.f32 %v427, 0.112945676
    %v429 = vmul.f32 %v411, %v428
    %v430 = vadd.f32 %v429, 0.4994258
    %v431 = vmul.f32 %v411, %v430
    %v432 = vadd.f32 %v431, 1.0
    %v433 = vrcp.pop %v432
    %v434 = vmul.f32 %v432, %v433
    %v435 = vsub.f32 1.0, %v434
    %v436 = vmul.f32 %v433, %v435
    %v437 = vadd.f32 %v433, %v436
    %vm438 = vweird.f32 %v432
    %vm439 = vweird.f32 %v433
    %vm440 = vmor %vm438, %vm439
    %v441 = vsel %vm440, %v433, %v437
    %v442 = vand.u32 2147483647, %v432
    %vm443 = vcmp.eq.f32.partialorder %v442, 8.507059e+37
    %v444 = vand.u32 %v432, 2147483648
    %v445 = vor.u32 1.1754944e-38, %v444
    %v446 = vsel %vm443, %v445, %v441
    %v447 = vmul.f32 %v422, %v446
    %v448 = vmin.f32 %v447, 1.0
    %v449 = vmax.f32 %v448, -1.0
    %v450 = vmul.f32 %v364, %v364
    %v451 = vmin.f32 16.0, %v450
    %v452 = vmul.f32 %v451, 2.1237322e-06
    %v453 = vadd.f32 %v452, 0.00028619796
    %v454 = vmul.f32 %v451, %v453
    %v455 = vadd.f32 %v454, 0.0036580483
    %v456 = vmul.f32 %v451, %v455
    %v457 = vadd.f32 %v456, 0.05243302
    %v458 = vmul.f32 %v451, %v457
    %v459 = vadd.f32 %v458, 0.18741608
    %v460 = vmul.f32 %v451, %v459
    %v461 = vadd.f32 %v460, 1.1283791
    %v462 = vmul.f32 %v364, %v461
    %v463 = vmul.f32 %v451, 3.8918573e-05
    %v464 = vadd.f32 %v463, 0.001143296
    %v465 = vmul.f32 %v451, %v464
    %v466 = vadd.f32 %v465, 0.014752088
    %v467 = vmul.f32 %v451, %v466
    %v468 = vadd.f32 %v467, 0.112945676
    %v469 = vmul.f32 %v451, %v468
    %v470 = vadd.f32 %v469, 0.4994258
    %v471 = vmul.f32 %v451, %v470
    %v472 = vadd.f32 %v471, 1.0
    %v473 = vrcp.pop %v472
    %v474 = vmul.f32 %v472, %v473
    %v475 = vsub.f32 1.0, %v474
    %v476 = vmul.f32 %v473, %v475
    %v477 = vadd.f32 %v473, %v476
    %vm478 = vweird.f32 %v472
    %vm479 = vweird.f32 %v473
    %vm480 = vmor %vm478, %vm479
    %v481 = vsel %vm480, %v473, %v477
    %v482 = vand.u32 2147483647, %v472
    %vm483 = vcmp.eq.f32.partialorder %v482, 8.507059e+37
    %v484 = vand.u32 %v472, 2147483648
    %v485 = vor.u32 1.1754944e-38, %v484
    %v486 = vsel %vm483, %v485, %v481
    %v487 = vmul.f32 %v462, %v486
    %v488 = vmin.f32 %v487, 1.0
    %v489 = vmax.f32 %v488, -1.0
    %v490 = vmul.f32 %v365, %v365
    %v491 = vmin.f32 16.0, %v490
    %v492 = vmul.f32 %v491, 2.1237322e-06
    %v493 = vadd.f32 %v492, 0.00028619796
    %v494 = vmul.f32 %v491, %v493
    %v495 = vadd.f32 %v494, 0.0036580483
    %v496 = vmul.f32 %v491, %v495
    %v497 = vadd.f32 %v496, 0.05243302
    %v498 = vmul.f32 %v491, %v497
    %v499 = vadd.f32 %v498, 0.18741608
    %v500 = vmul.f32 %v491, %v499
    %v501 = vadd.f32 %v500, 1.1283791
    %v502 = vmul.f32 %v365, %v501
    %v503 = vmul.f32 %v491, 3.8918573e-05
    %v504 = vadd.f32 %v503, 0.001143296
    %v505 = vmul.f32 %v491, %v504
    %v506 = vadd.f32 %v505, 0.014752088
    %v507 = vmul.f32 %v491, %v506
    %v508 = vadd.f32 %v507, 0.112945676
    %v509 = vmul.f32 %v491, %v508
    %v510 = vadd.f32 %v509, 0.4994258
    %v511 = vmul.f32 %v491, %v510
    %v512 = vadd.f32 %v511, 1.0
    %v513 = vrcp.pop %v512
    %v514 = vmul.f32 %v512, %v513
    %v515 = vsub.f32 1.0, %v514
    %v516 = vmul.f32 %v513, %v515
    %v517 = vadd.f32 %v513, %v516
    %vm518 = vweird.f32 %v512
    %vm519 = vweird.f32 %v513
    %vm520 = vmor %vm518, %vm519
    %v521 = vsel %vm520, %v513, %v517
    %v522 = vand.u32 2147483647, %v512
    %vm523 = vcmp.eq.f32.partialorder %v522, 8.507059e+37
    %v524 = vand.u32 %v512, 2147483648
    %v525 = vor.u32 1.1754944e-38, %v524
    %v526 = vsel %vm523, %v525, %v521
    %v527 = vmul.f32 %v502, %v526
    %v528 = vmin.f32 %v527, 1.0
    %v529 = vmax.f32 %v528, -1.0
    %v530 = vmul.f32 %v366, %v366
    %v531 = vmin.f32 16.0, %v530
    %v532 = vmul.f32 %v531, 2.1237322e-06
    %v533 = vadd.f32 %v532, 0.00028619796
    %v534 = vmul.f32 %v531, %v533
    %v535 = vadd.f32 %v534, 0.0036580483
    %v536 = vmul.f32 %v531, %v535
    %v537 = vadd.f32 %v536, 0.05243302
    %v538 = vmul.f32 %v531, %v537
    %v539 = vadd.f32 %v538, 0.18741608
    %v540 = vmul.f32 %v531, %v539
    %v541 = vadd.f32 %v540, 1.1283791
    %v542 = vmul.f32 %v366, %v541
    %v543 = vmul.f32 %v531, 3.8918573e-05
    %v544 = vadd.f32 %v543, 0.001143296
    %v545 = vmul.f32 %v531, %v544
    %v546 = vadd.f32 %v545, 0.014752088
    %v547 = vmul.f32 %v531, %v546
    %v548 = vadd.f32 %v547, 0.112945676
    %v549 = vmul.f32 %v531, %v548
    %v550 = vadd.f32 %v549, 0.4994258
    %v551 = vmul.f32 %v531, %v550
    %v552 = vadd.f32 %v551, 1.0
    %v553 = vrcp.pop %v552
    %v554 = vmul.f32 %v552, %v553
    %v555 = vsub.f32 1.0, %v554
    %v556 = vmul.f32 %v553, %v555
    %v557 = vadd.f32 %v553, %v556
    %vm558 = vweird.f32 %v552
    %vm559 = vweird.f32 %v553
    %vm560 = vmor %vm558, %vm559
    %v561 = vsel %vm560, %v553, %v557
    %v562 = vand.u32 2147483647, %v552
    %vm563 = vcmp.eq.f32.partialorder %v562, 8.507059e+37
    %v564 = vand.u32 %v552, 2147483648
    %v565 = vor.u32 1.1754944e-38, %v564
    %v566 = vsel %vm563, %v565, %v561
    %v567 = vmul.f32 %v542, %v566
    %v568 = vmin.f32 %v567, 1.0
    %v569 = vmax.f32 %v568, -1.0
    %v570 = vmul.f32 %v367, %v367
    %v571 = vmin.f32 16.0, %v570
    %v572 = vmul.f32 %v571, 2.1237322e-06
    %v573 = vadd.f32 %v572, 0.00028619796
    %v574 = vmul.f32 %v571, %v573
    %v575 = vadd.f32 %v574, 0.0036580483
    %v576 = vmul.f32 %v571, %v575
    %v577 = vadd.f32 %v576, 0.05243302
    %v578 = vmul.f32 %v571, %v577
    %v579 = vadd.f32 %v578, 0.18741608
    %v580 = vmul.f32 %v571, %v579
    %v581 = vadd.f32 %v580, 1.1283791
    %v582 = vmul.f32 %v367, %v581
    %v583 = vmul.f32 %v571, 3.8918573e-05
    %v584 = vadd.f32 %v583, 0.001143296
    %v585 = vmul.f32 %v571, %v584
    %v586 = vadd.f32 %v585, 0.014752088
    %v587 = vmul.f32 %v571, %v586
    %v588 = vadd.f32 %v587, 0.112945676
    %v589 = vmul.f32 %v571, %v588
    %v590 = vadd.f32 %v589, 0.4994258
    %v591 = vmul.f32 %v571, %v590
    %v592 = vadd.f32 %v591, 1.0
    %v593 = vrcp.pop %v592
    %v594 = vmul.f32 %v592, %v593
    %v595 = vsub.f32 1.0, %v594
    %v596 = vmul.f32 %v593, %v595
    %v597 = vadd.f32 %v593, %v596
    %vm598 = vweird.f32 %v592
    %vm599 = vweird.f32 %v593
    %vm600 = vmor %vm598, %vm599
    %v601 = vsel %vm600, %v593, %v597
    %v602 = vand.u32 2147483647, %v592
    %vm603 = vcmp.eq.f32.partialorder %v602, 8.507059e+37
    %v604 = vand.u32 %v592, 2147483648
    %v605 = vor.u32 1.1754944e-38, %v604
    %v606 = vsel %vm603, %v605, %v601
    %v607 = vmul.f32 %v582, %v606
    %v608 = vmin.f32 %v607, 1.0
    %v609 = vmax.f32 %v608, -1.0
    %v610 = vmul.f32 %v368, %v368
    %v611 = vmin.f32 16.0, %v610
    %v612 = vmul.f32 %v611, 2.1237322e-06
    %v613 = vadd.f32 %v612, 0.00028619796
    %v614 = vmul.f32 %v611, %v613
    %v615 = vadd.f32 %v614, 0.0036580483
    %v616 = vmul.f32 %v611, %v615
    %v617 = vadd.f32 %v616, 0.05243302
    %v618 = vmul.f32 %v611, %v617
    %v619 = vadd.f32 %v618, 0.18741608
    %v620 = vmul.f32 %v611, %v619
    %v621 = vadd.f32 %v620, 1.1283791
    %v622 = vmul.f32 %v368, %v621
    %v623 = vmul.f32 %v611, 3.8918573e-05
    %v624 = vadd.f32 %v623, 0.001143296
    %v625 = vmul.f32 %v611, %v624
    %v626 = vadd.f32 %v625, 0.014752088
    %v627 = vmul.f32 %v611, %v626
    %v628 = vadd.f32 %v627, 0.112945676
    %v629 = vmul.f32 %v611, %v628
    %v630 = vadd.f32 %v629, 0.4994258
    %v631 = vmul.f32 %v611, %v630
    %v632 = vadd.f32 %v631, 1.0
    %v633 = vrcp.pop %v632
    %v634 = vmul.f32 %v632, %v633
    %v635 = vsub.f32 1.0, %v634
    %v636 = vmul.f32 %v633, %v635
    %v637 = vadd.f32 %v633, %v636
    %vm638 = vweird.f32 %v632
    %vm639 = vweird.f32 %v633
    %vm640 = vmor %vm638, %vm639
    %v641 = vsel %vm640, %v633, %v637
    %v642 = vand.u32 2147483647, %v632
    %vm643 = vcmp.eq.f32.partialorder %v642, 8.507059e+37
    %v644 = vand.u32 %v632, 2147483648
    %v645 = vor.u32 1.1754944e-38, %v644
    %v646 = vsel %vm643, %v645, %v641
    %v647 = vmul.f32 %v622, %v646
    %v648 = vmin.f32 %v647, 1.0
    %v649 = vmax.f32 %v648, -1.0
    %v650 = vmul.f32 %v369, %v369
    %v651 = vmin.f32 16.0, %v650
    %v652 = vmul.f32 %v651, 2.1237322e-06
    %v653 = vadd.f32 %v652, 0.00028619796
    %v654 = vmul.f32 %v651, %v653
    %v655 = vadd.f32 %v654, 0.0036580483
    %v656 = vmul.f32 %v651, %v655
    %v657 = vadd.f32 %v656, 0.05243302
    %v658 = vmul.f32 %v651, %v657
    %v659 = vadd.f32 %v658, 0.18741608
    %v660 = vmul.f32 %v651, %v659
    %v661 = vadd.f32 %v660, 1.1283791
    %v662 = vmul.f32 %v369, %v661
    %v663 = vmul.f32 %v651, 3.8918573e-05
    %v664 = vadd.f32 %v663, 0.001143296
    %v665 = vmul.f32 %v651, %v664
    %v666 = vadd.f32 %v665, 0.014752088
    %v667 = vmul.f32 %v651, %v666
    %v668 = vadd.f32 %v667, 0.112945676
    %v669 = vmul.f32 %v651, %v668
    %v670 = vadd.f32 %v669, 0.4994258
    %v671 = vmul.f32 %v651, %v670
    %v672 = vadd.f32 %v671, 1.0
    %v673 = vrcp.pop %v672
    %v674 = vmul.f32 %v672, %v673
    %v675 = vsub.f32 1.0, %v674
    %v676 = vmul.f32 %v673, %v675
    %v677 = vadd.f32 %v673, %v676
    %vm678 = vweird.f32 %v672
    %vm679 = vweird.f32 %v673
    %vm680 = vmor %vm678, %vm679
    %v681 = vsel %vm680, %v673, %v677
    %v682 = vand.u32 2147483647, %v672
    %vm683 = vcmp.eq.f32.partialorder %v682, 8.507059e+37
    %v684 = vand.u32 %v672, 2147483648
    %v685 = vor.u32 1.1754944e-38, %v684
    %v686 = vsel %vm683, %v685, %v681
    %v687 = vmul.f32 %v662, %v686
    %v688 = vmin.f32 %v687, 1.0
    %v689 = vmax.f32 %v688, -1.0
    %v690 = vadd.f32 %v409, 1.0
    %v691 = vadd.f32 %v449, 1.0
    %v692 = vadd.f32 %v489, 1.0
    %v693 = vadd.f32 %v529, 1.0
    %v694 = vadd.f32 %v569, 1.0
    %v695 = vadd.f32 %v609, 1.0
    %v696 = vadd.f32 %v649, 1.0
    %v697 = vadd.f32 %v689, 1.0
    %v698 = vmul.f32 %v354, %v690
    %v699 = vmul.f32 %v355, %v691
    %v700 = vmul.f32 %v356, %v692
    %v701 = vmul.f32 %v357, %v693
    %v702 = vmul.f32 %v358, %v694
    %v703 = vmul.f32 %v359, %v695
    %v704 = vmul.f32 %v360, %v696
    %v705 = vmul.f32 %v361, %v697
    %v706 = vpack.c.bf16 %v699, %v698
    %v707 = vpack.c.bf16 %v701, %v700
    %v708 = vpack.c.bf16 %v703, %v702
    %v709 = vpack.c.bf16 %v705, %v704
    %v711 = vperm.slane %v58, 0
    %v721 = vunpack.c.l.b16 %v50
    %v722 = vunpack.c.l.b16 %v51
    %v723 = vunpack.c.l.b16 %v52
    %v724 = vunpack.c.l.b16 %v53
    %v725 = vunpack.c.l.b16 %v54
    %v726 = vunpack.c.l.b16 %v55
    %v727 = vunpack.c.l.b16 %v56
    %v728 = vunpack.c.l.b16 %v57
    %v729 = vpack.c.b16 %v722, %v721
    %v730 = vpack.c.b16 %v724, %v723
    %v731 = vpack.c.b16 %v726, %v725
    %v732 = vpack.c.b16 %v728, %v727
    %v738 = vsel %vm139, %v706, 0
    %v741 = vsel %vm139, %v707, 0
    %v744 = vsel %vm139, %v708, 0
    %v747 = vsel %vm139, %v709, 0
    %749 = vmatpush.bf16.msra.mxu0 0
    %750 = vmatpush.bf16.msra.mxu0 0
    %751 = vmatpush.bf16.msra.mxu0 0
    %752 = vmatpush.bf16.msra.mxu0 0
    %753 = vmatpush.bf16.msra.mxu0 %v732
    %754 = vmatpush.bf16.msra.mxu0 %v731
    %755 = vmatpush.bf16.msra.mxu0 %v730
    %756 = vmatpush.bf16.msra.mxu0 %v729
    %757 = vmatmul.bf16.gmra.mxu0 %v738
    %v758 = vpop.f32.mrf.mxu0
    %v759 = vadd.f32 %v711, %v758
    %v760 = vpop.f32.mrf.mxu0
    %v761 = vadd.f32 %v711, %v760
    %762 = vmatmul.bf16.gmra.mxu0 %v741
    %v763 = vpop.f32.mrf.mxu0
    %v764 = vadd.f32 %v711, %v763
    %v765 = vpop.f32.mrf.mxu0
    %v766 = vadd.f32 %v711, %v765
    %767 = vmatmul.bf16.gmra.mxu0 %v744
    %v768 = vpop.f32.mrf.mxu0
    %v769 = vadd.f32 %v711, %v768
    %v770 = vpop.f32.mrf.mxu0
    %v771 = vadd.f32 %v711, %v770
    %772 = vmatmul.bf16.gmra.mxu0 %v747
    %v773 = vpop.f32.mrf.mxu0
    %v774 = vadd.f32 %v711, %v773
    %v775 = vpop.f32.mrf.mxu0
    %v776 = vadd.f32 %v711, %v775
    %777 = vdwg.mxu0
    %v778 = vsel %vm139, %v759, 0.0
    %779 = vadd.xlane.f32.xlu0 %v778
    %v780 = vpop.xlane.xlu0 %779
    %v781 = vsel %vm139, %v761, 0.0
    %782 = vadd.xlane.f32.xlu0 %v781
    %v783 = vpop.xlane.xlu0 %782
    %v784 = vsel %vm139, %v764, 0.0
    %785 = vadd.xlane.f32.xlu0 %v784
    %v786 = vpop.xlane.xlu0 %785
    %v787 = vsel %vm139, %v766, 0.0
    %788 = vadd.xlane.f32.xlu0 %v787
    %v789 = vpop.xlane.xlu0 %788
    %v790 = vsel %vm139, %v769, 0.0
    %791 = vadd.xlane.f32.xlu0 %v790
    %v792 = vpop.xlane.xlu0 %791
    %v793 = vsel %vm139, %v771, 0.0
    %794 = vadd.xlane.f32.xlu0 %v793
    %v795 = vpop.xlane.xlu0 %794
    %v796 = vsel %vm139, %v774, 0.0
    %797 = vadd.xlane.f32.xlu0 %v796
    %v798 = vpop.xlane.xlu0 %797
    %v799 = vsel %vm139, %v776, 0.0
    %800 = vadd.xlane.f32.xlu0 %v799
    %v801 = vpop.xlane.xlu0 %800
    %v802 = vmul.f32 %v759, %v759
    %v803 = vmul.f32 %v761, %v761
    %v804 = vmul.f32 %v764, %v764
    %v805 = vmul.f32 %v766, %v766
    %v806 = vmul.f32 %v769, %v769
    %v807 = vmul.f32 %v771, %v771
    %v808 = vmul.f32 %v774, %v774
    %v809 = vmul.f32 %v776, %v776
    %v810 = vsel %vm139, %v802, 0.0
    %811 = vadd.xlane.f32.xlu0 %v810
    %v812 = vpop.xlane.xlu0 %811
    %v813 = vsel %vm139, %v803, 0.0
    %814 = vadd.xlane.f32.xlu0 %v813
    %v815 = vpop.xlane.xlu0 %814
    %v816 = vsel %vm139, %v804, 0.0
    %817 = vadd.xlane.f32.xlu0 %v816
    %v818 = vpop.xlane.xlu0 %817
    %v819 = vsel %vm139, %v805, 0.0
    %820 = vadd.xlane.f32.xlu0 %v819
    %v821 = vpop.xlane.xlu0 %820
    %v822 = vsel %vm139, %v806, 0.0
    %823 = vadd.xlane.f32.xlu0 %v822
    %v824 = vpop.xlane.xlu0 %823
    %v825 = vsel %vm139, %v807, 0.0
    %826 = vadd.xlane.f32.xlu0 %v825
    %v827 = vpop.xlane.xlu0 %826
    %v828 = vsel %vm139, %v808, 0.0
    %829 = vadd.xlane.f32.xlu0 %v828
    %v830 = vpop.xlane.xlu0 %829
    %v831 = vsel %vm139, %v809, 0.0
    %832 = vadd.xlane.f32.xlu0 %v831
    %v833 = vpop.xlane.xlu0 %832
    %v834 = vmul.f32 %v780, 0.015625
    %v835 = vmul.f32 %v783, 0.015625
    %v836 = vmul.f32 %v786, 0.015625
    %v837 = vmul.f32 %v789, 0.015625
    %v838 = vmul.f32 %v792, 0.015625
    %v839 = vmul.f32 %v795, 0.015625
    %v840 = vmul.f32 %v798, 0.015625
    %v841 = vmul.f32 %v801, 0.015625
    %v842 = vmul.f32 %v812, 0.015625
    %v843 = vmul.f32 %v815, 0.015625
    %v844 = vmul.f32 %v818, 0.015625
    %v845 = vmul.f32 %v821, 0.015625
    %v846 = vmul.f32 %v824, 0.015625
    %v847 = vmul.f32 %v827, 0.015625
    %v848 = vmul.f32 %v830, 0.015625
    %v849 = vmul.f32 %v833, 0.015625
    %v850 = vmul.f32 %v834, %v834
    %v851 = vmul.f32 %v835, %v835
    %v852 = vmul.f32 %v836, %v836
    %v853 = vmul.f32 %v837, %v837
    %v854 = vmul.f32 %v838, %v838
    %v855 = vmul.f32 %v839, %v839
    %v856 = vmul.f32 %v840, %v840
    %v857 = vmul.f32 %v841, %v841
    %v858 = vsub.f32 %v842, %v850
    %v859 = vsub.f32 %v843, %v851
    %v860 = vsub.f32 %v844, %v852
    %v861 = vsub.f32 %v845, %v853
    %v862 = vsub.f32 %v846, %v854
    %v863 = vsub.f32 %v847, %v855
    %v864 = vsub.f32 %v848, %v856
    %v865 = vsub.f32 %v849, %v857
    %v866 = vsub.f32 %v759, %v834
    %v867 = vsub.f32 %v761, %v835
    %v868 = vsub.f32 %v764, %v836
    %v869 = vsub.f32 %v766, %v837
    %v870 = vsub.f32 %v769, %v838
    %v871 = vsub.f32 %v771, %v839
    %v872 = vsub.f32 %v774, %v840
    %v873 = vsub.f32 %v776, %v841
    %v874 = vadd.f32 %v858, 1e-05
    %v875 = vadd.f32 %v859, 1e-05
    %v876 = vadd.f32 %v860, 1e-05
    %v877 = vadd.f32 %v861, 1e-05
    %v878 = vadd.f32 %v862, 1e-05
    %v879 = vadd.f32 %v863, 1e-05
    %v880 = vadd.f32 %v864, 1e-05
    %v881 = vadd.f32 %v865, 1e-05
    %v882 = vrsqrt.pop %v874
    %v883 = vmul.f32 %v882, %v874
    %v884 = vmul.f32 %v883, %v882
    %v885 = vmul.f32 0.5, %v884
    %v886 = vsub.f32 1.5, %v885
    %v887 = vmul.f32 %v882, %v886
    %vm888 = vweird.f32 %v874
    %vm889 = vweird.f32 %v882
    %vm890 = vmor %vm888, %vm889
    %v891 = vsel %vm890, %v882, %v887
    %v892 = vrsqrt.pop %v875
    %v893 = vmul.f32 %v892, %v875
    %v894 = vmul.f32 %v893, %v892
    %v895 = vmul.f32 0.5, %v894
    %v896 = vsub.f32 1.5, %v895
    %v897 = vmul.f32 %v892, %v896
    %vm898 = vweird.f32 %v875
    %vm899 = vweird.f32 %v892
    %vm900 = vmor %vm898, %vm899
    %v901 = vsel %vm900, %v892, %v897
    %v902 = vrsqrt.pop %v876
    %v903 = vmul.f32 %v902, %v876
    %v904 = vmul.f32 %v903, %v902
    %v905 = vmul.f32 0.5, %v904
    %v906 = vsub.f32 1.5, %v905
    %v907 = vmul.f32 %v902, %v906
    %vm908 = vweird.f32 %v876
    %vm909 = vweird.f32 %v902
    %vm910 = vmor %vm908, %vm909
    %v911 = vsel %vm910, %v902, %v907
    %v912 = vrsqrt.pop %v877
    %v913 = vmul.f32 %v912, %v877
    %v914 = vmul.f32 %v913, %v912
    %v915 = vmul.f32 0.5, %v914
    %v916 = vsub.f32 1.5, %v915
    %v917 = vmul.f32 %v912, %v916
    %vm918 = vweird.f32 %v877
    %vm919 = vweird.f32 %v912
    %vm920 = vmor %vm918, %vm919
    %v921 = vsel %vm920, %v912, %v917
    %v922 = vrsqrt.pop %v878
    %v923 = vmul.f32 %v922, %v878
    %v924 = vmul.f32 %v923, %v922
    %v925 = vmul.f32 0.5, %v924
    %v926 = vsub.f32 1.5, %v925
    %v927 = vmul.f32 %v922, %v926
    %vm928 = vweird.f32 %v878
    %vm929 = vweird.f32 %v922
    %vm930 = vmor %vm928, %vm929
    %v931 = vsel %vm930, %v922, %v927
    %v932 = vrsqrt.pop %v879
    %v933 = vmul.f32 %v932, %v879
    %v934 = vmul.f32 %v933, %v932
    %v935 = vmul.f32 0.5, %v934
    %v936 = vsub.f32 1.5, %v935
    %v937 = vmul.f32 %v932, %v936
    %vm938 = vweird.f32 %v879
    %vm939 = vweird.f32 %v932
    %vm940 = vmor %vm938, %vm939
    %v941 = vsel %vm940, %v932, %v937
    %v942 = vrsqrt.pop %v880
    %v943 = vmul.f32 %v942, %v880
    %v944 = vmul.f32 %v943, %v942
    %v945 = vmul.f32 0.5, %v944
    %v946 = vsub.f32 1.5, %v945
    %v947 = vmul.f32 %v942, %v946
    %vm948 = vweird.f32 %v880
    %vm949 = vweird.f32 %v942
    %vm950 = vmor %vm948, %vm949
    %v951 = vsel %vm950, %v942, %v947
    %v952 = vrsqrt.pop %v881
    %v953 = vmul.f32 %v952, %v881
    %v954 = vmul.f32 %v953, %v952
    %v955 = vmul.f32 0.5, %v954
    %v956 = vsub.f32 1.5, %v955
    %v957 = vmul.f32 %v952, %v956
    %vm958 = vweird.f32 %v881
    %vm959 = vweird.f32 %v952
    %vm960 = vmor %vm958, %vm959
    %v961 = vsel %vm960, %v952, %v957
    %v962 = vmul.f32 %v866, %v891
    %v963 = vmul.f32 %v867, %v901
    %v964 = vmul.f32 %v868, %v911
    %v965 = vmul.f32 %v869, %v921
    %v966 = vmul.f32 %v870, %v931
    %v967 = vmul.f32 %v871, %v941
    %v968 = vmul.f32 %v872, %v951
    %v969 = vmul.f32 %v873, %v961
    %v971 = vperm.slane %v59, 0
    %v973 = vmul.f32 %v962, %v971
    %v974 = vmul.f32 %v963, %v971
    %v975 = vmul.f32 %v964, %v971
    %v976 = vmul.f32 %v965, %v971
    %v977 = vmul.f32 %v966, %v971
    %v978 = vmul.f32 %v967, %v971
    %v979 = vmul.f32 %v968, %v971
    %v980 = vmul.f32 %v969, %v971
    %v982 = vperm.slane %v60, 0
    %v984 = vadd.f32 %v973, %v982
    %v985 = vadd.f32 %v974, %v982
    %v986 = vadd.f32 %v975, %v982
    %v987 = vadd.f32 %v976, %v982
    %v988 = vadd.f32 %v977, %v982
    %v989 = vadd.f32 %v978, %v982
    %v990 = vadd.f32 %v979, %v982
    %v991 = vadd.f32 %v980, %v982
    %v992 = vmul.f32 %v984, 0.5
    %v993 = vmul.f32 %v985, 0.5
    %v994 = vmul.f32 %v986, 0.5
    %v995 = vmul.f32 %v987, 0.5
    %v996 = vmul.f32 %v988, 0.5
    %v997 = vmul.f32 %v989, 0.5
    %v998 = vmul.f32 %v990, 0.5
    %v999 = vmul.f32 %v991, 0.5
    %v1000 = vmul.f32 %v984, 0.70710677
    %v1001 = vmul.f32 %v985, 0.70710677
    %v1002 = vmul.f32 %v986, 0.70710677
    %v1003 = vmul.f32 %v987, 0.70710677
    %v1004 = vmul.f32 %v988, 0.70710677
    %v1005 = vmul.f32 %v989, 0.70710677
    %v1006 = vmul.f32 %v990, 0.70710677
    %v1007 = vmul.f32 %v991, 0.70710677
    %v1008 = vmul.f32 %v1000, %v1000
    %v1009 = vmin.f32 16.0, %v1008
    %v1010 = vmul.f32 %v1009, 2.1237322e-06
    %v1011 = vadd.f32 %v1010, 0.00028619796
    %v1012 = vmul.f32 %v1009, %v1011
    %v1013 = vadd.f32 %v1012, 0.0036580483
    %v1014 = vmul.f32 %v1009, %v1013
    %v1015 = vadd.f32 %v1014, 0.05243302
    %v1016 = vmul.f32 %v1009, %v1015
    %v1017 = vadd.f32 %v1016, 0.18741608
    %v1018 = vmul.f32 %v1009, %v1017
    %v1019 = vadd.f32 %v1018, 1.1283791
    %v1020 = vmul.f32 %v1000, %v1019
    %v1021 = vmul.f32 %v1009, 3.8918573e-05
    %v1022 = vadd.f32 %v1021, 0.001143296
    %v1023 = vmul.f32 %v1009, %v1022
    %v1024 = vadd.f32 %v1023, 0.014752088
    %v1025 = vmul.f32 %v1009, %v1024
    %v1026 = vadd.f32 %v1025, 0.112945676
    %v1027 = vmul.f32 %v1009, %v1026
    %v1028 = vadd.f32 %v1027, 0.4994258
    %v1029 = vmul.f32 %v1009, %v1028
    %v1030 = vadd.f32 %v1029, 1.0
    %v1031 = vrcp.pop %v1030
    %v1032 = vmul.f32 %v1030, %v1031
    %v1033 = vsub.f32 1.0, %v1032
    %v1034 = vmul.f32 %v1031, %v1033
    %v1035 = vadd.f32 %v1031, %v1034
    %vm1036 = vweird.f32 %v1030
    %vm1037 = vweird.f32 %v1031
    %vm1038 = vmor %vm1036, %vm1037
    %v1039 = vsel %vm1038, %v1031, %v1035
    %v1040 = vand.u32 2147483647, %v1030
    %vm1041 = vcmp.eq.f32.partialorder %v1040, 8.507059e+37
    %v1042 = vand.u32 %v1030, 2147483648
    %v1043 = vor.u32 1.1754944e-38, %v1042
    %v1044 = vsel %vm1041, %v1043, %v1039
    %v1045 = vmul.f32 %v1020, %v1044
    %v1046 = vmin.f32 %v1045, 1.0
    %v1047 = vmax.f32 %v1046, -1.0
    %v1048 = vmul.f32 %v1001, %v1001
    %v1049 = vmin.f32 16.0, %v1048
    %v1050 = vmul.f32 %v1049, 2.1237322e-06
    %v1051 = vadd.f32 %v1050, 0.00028619796
    %v1052 = vmul.f32 %v1049, %v1051
    %v1053 = vadd.f32 %v1052, 0.0036580483
    %v1054 = vmul.f32 %v1049, %v1053
    %v1055 = vadd.f32 %v1054, 0.05243302
    %v1056 = vmul.f32 %v1049, %v1055
    %v1057 = vadd.f32 %v1056, 0.18741608
    %v1058 = vmul.f32 %v1049, %v1057
    %v1059 = vadd.f32 %v1058, 1.1283791
    %v1060 = vmul.f32 %v1001, %v1059
    %v1061 = vmul.f32 %v1049, 3.8918573e-05
    %v1062 = vadd.f32 %v1061, 0.001143296
    %v1063 = vmul.f32 %v1049, %v1062
    %v1064 = vadd.f32 %v1063, 0.014752088
    %v1065 = vmul.f32 %v1049, %v1064
    %v1066 = vadd.f32 %v1065, 0.112945676
    %v1067 = vmul.f32 %v1049, %v1066
    %v1068 = vadd.f32 %v1067, 0.4994258
    %v1069 = vmul.f32 %v1049, %v1068
    %v1070 = vadd.f32 %v1069, 1.0
    %v1071 = vrcp.pop %v1070
    %v1072 = vmul.f32 %v1070, %v1071
    %v1073 = vsub.f32 1.0, %v1072
    %v1074 = vmul.f32 %v1071, %v1073
    %v1075 = vadd.f32 %v1071, %v1074
    %vm1076 = vweird.f32 %v1070
    %vm1077 = vweird.f32 %v1071
    %vm1078 = vmor %vm1076, %vm1077
    %v1079 = vsel %vm1078, %v1071, %v1075
    %v1080 = vand.u32 2147483647, %v1070
    %vm1081 = vcmp.eq.f32.partialorder %v1080, 8.507059e+37
    %v1082 = vand.u32 %v1070, 2147483648
    %v1083 = vor.u32 1.1754944e-38, %v1082
    %v1084 = vsel %vm1081, %v1083, %v1079
    %v1085 = vmul.f32 %v1060, %v1084
    %v1086 = vmin.f32 %v1085, 1.0
    %v1087 = vmax.f32 %v1086, -1.0
    %v1088 = vmul.f32 %v1002, %v1002
    %v1089 = vmin.f32 16.0, %v1088
    %v1090 = vmul.f32 %v1089, 2.1237322e-06
    %v1091 = vadd.f32 %v1090, 0.00028619796
    %v1092 = vmul.f32 %v1089, %v1091
    %v1093 = vadd.f32 %v1092, 0.0036580483
    %v1094 = vmul.f32 %v1089, %v1093
    %v1095 = vadd.f32 %v1094, 0.05243302
    %v1096 = vmul.f32 %v1089, %v1095
    %v1097 = vadd.f32 %v1096, 0.18741608
    %v1098 = vmul.f32 %v1089, %v1097
    %v1099 = vadd.f32 %v1098, 1.1283791
    %v1100 = vmul.f32 %v1002, %v1099
    %v1101 = vmul.f32 %v1089, 3.8918573e-05
    %v1102 = vadd.f32 %v1101, 0.001143296
    %v1103 = vmul.f32 %v1089, %v1102
    %v1104 = vadd.f32 %v1103, 0.014752088
    %v1105 = vmul.f32 %v1089, %v1104
    %v1106 = vadd.f32 %v1105, 0.112945676
    %v1107 = vmul.f32 %v1089, %v1106
    %v1108 = vadd.f32 %v1107, 0.4994258
    %v1109 = vmul.f32 %v1089, %v1108
    %v1110 = vadd.f32 %v1109, 1.0
    %v1111 = vrcp.pop %v1110
    %v1112 = vmul.f32 %v1110, %v1111
    %v1113 = vsub.f32 1.0, %v1112
    %v1114 = vmul.f32 %v1111, %v1113
    %v1115 = vadd.f32 %v1111, %v1114
    %vm1116 = vweird.f32 %v1110
    %vm1117 = vweird.f32 %v1111
    %vm1118 = vmor %vm1116, %vm1117
    %v1119 = vsel %vm1118, %v1111, %v1115
    %v1120 = vand.u32 2147483647, %v1110
    %vm1121 = vcmp.eq.f32.partialorder %v1120, 8.507059e+37
    %v1122 = vand.u32 %v1110, 2147483648
    %v1123 = vor.u32 1.1754944e-38, %v1122
    %v1124 = vsel %vm1121, %v1123, %v1119
    %v1125 = vmul.f32 %v1100, %v1124
    %v1126 = vmin.f32 %v1125, 1.0
    %v1127 = vmax.f32 %v1126, -1.0
    %v1128 = vmul.f32 %v1003, %v1003
    %v1129 = vmin.f32 16.0, %v1128
    %v1130 = vmul.f32 %v1129, 2.1237322e-06
    %v1131 = vadd.f32 %v1130, 0.00028619796
    %v1132 = vmul.f32 %v1129, %v1131
    %v1133 = vadd.f32 %v1132, 0.0036580483
    %v1134 = vmul.f32 %v1129, %v1133
    %v1135 = vadd.f32 %v1134, 0.05243302
    %v1136 = vmul.f32 %v1129, %v1135
    %v1137 = vadd.f32 %v1136, 0.18741608
    %v1138 = vmul.f32 %v1129, %v1137
    %v1139 = vadd.f32 %v1138, 1.1283791
    %v1140 = vmul.f32 %v1003, %v1139
    %v1141 = vmul.f32 %v1129, 3.8918573e-05
    %v1142 = vadd.f32 %v1141, 0.001143296
    %v1143 = vmul.f32 %v1129, %v1142
    %v1144 = vadd.f32 %v1143, 0.014752088
    %v1145 = vmul.f32 %v1129, %v1144
    %v1146 = vadd.f32 %v1145, 0.112945676
    %v1147 = vmul.f32 %v1129, %v1146
    %v1148 = vadd.f32 %v1147, 0.4994258
    %v1149 = vmul.f32 %v1129, %v1148
    %v1150 = vadd.f32 %v1149, 1.0
    %v1151 = vrcp.pop %v1150
    %v1152 = vmul.f32 %v1150, %v1151
    %v1153 = vsub.f32 1.0, %v1152
    %v1154 = vmul.f32 %v1151, %v1153
    %v1155 = vadd.f32 %v1151, %v1154
    %vm1156 = vweird.f32 %v1150
    %vm1157 = vweird.f32 %v1151
    %vm1158 = vmor %vm1156, %vm1157
    %v1159 = vsel %vm1158, %v1151, %v1155
    %v1160 = vand.u32 2147483647, %v1150
    %vm1161 = vcmp.eq.f32.partialorder %v1160, 8.507059e+37
    %v1162 = vand.u32 %v1150, 2147483648
    %v1163 = vor.u32 1.1754944e-38, %v1162
    %v1164 = vsel %vm1161, %v1163, %v1159
    %v1165 = vmul.f32 %v1140, %v1164
    %v1166 = vmin.f32 %v1165, 1.0
    %v1167 = vmax.f32 %v1166, -1.0
    %v1168 = vmul.f32 %v1004, %v1004
    %v1169 = vmin.f32 16.0, %v1168
    %v1170 = vmul.f32 %v1169, 2.1237322e-06
    %v1171 = vadd.f32 %v1170, 0.00028619796
    %v1172 = vmul.f32 %v1169, %v1171
    %v1173 = vadd.f32 %v1172, 0.0036580483
    %v1174 = vmul.f32 %v1169, %v1173
    %v1175 = vadd.f32 %v1174, 0.05243302
    %v1176 = vmul.f32 %v1169, %v1175
    %v1177 = vadd.f32 %v1176, 0.18741608
    %v1178 = vmul.f32 %v1169, %v1177
    %v1179 = vadd.f32 %v1178, 1.1283791
    %v1180 = vmul.f32 %v1004, %v1179
    %v1181 = vmul.f32 %v1169, 3.8918573e-05
    %v1182 = vadd.f32 %v1181, 0.001143296
    %v1183 = vmul.f32 %v1169, %v1182
    %v1184 = vadd.f32 %v1183, 0.014752088
    %v1185 = vmul.f32 %v1169, %v1184
    %v1186 = vadd.f32 %v1185, 0.112945676
    %v1187 = vmul.f32 %v1169, %v1186
    %v1188 = vadd.f32 %v1187, 0.4994258
    %v1189 = vmul.f32 %v1169, %v1188
    %v1190 = vadd.f32 %v1189, 1.0
    %v1191 = vrcp.pop %v1190
    %v1192 = vmul.f32 %v1190, %v1191
    %v1193 = vsub.f32 1.0, %v1192
    %v1194 = vmul.f32 %v1191, %v1193
    %v1195 = vadd.f32 %v1191, %v1194
    %vm1196 = vweird.f32 %v1190
    %vm1197 = vweird.f32 %v1191
    %vm1198 = vmor %vm1196, %vm1197
    %v1199 = vsel %vm1198, %v1191, %v1195
    %v1200 = vand.u32 2147483647, %v1190
    %vm1201 = vcmp.eq.f32.partialorder %v1200, 8.507059e+37
    %v1202 = vand.u32 %v1190, 2147483648
    %v1203 = vor.u32 1.1754944e-38, %v1202
    %v1204 = vsel %vm1201, %v1203, %v1199
    %v1205 = vmul.f32 %v1180, %v1204
    %v1206 = vmin.f32 %v1205, 1.0
    %v1207 = vmax.f32 %v1206, -1.0
    %v1208 = vmul.f32 %v1005, %v1005
    %v1209 = vmin.f32 16.0, %v1208
    %v1210 = vmul.f32 %v1209, 2.1237322e-06
    %v1211 = vadd.f32 %v1210, 0.00028619796
    %v1212 = vmul.f32 %v1209, %v1211
    %v1213 = vadd.f32 %v1212, 0.0036580483
    %v1214 = vmul.f32 %v1209, %v1213
    %v1215 = vadd.f32 %v1214, 0.05243302
    %v1216 = vmul.f32 %v1209, %v1215
    %v1217 = vadd.f32 %v1216, 0.18741608
    %v1218 = vmul.f32 %v1209, %v1217
    %v1219 = vadd.f32 %v1218, 1.1283791
    %v1220 = vmul.f32 %v1005, %v1219
    %v1221 = vmul.f32 %v1209, 3.8918573e-05
    %v1222 = vadd.f32 %v1221, 0.001143296
    %v1223 = vmul.f32 %v1209, %v1222
    %v1224 = vadd.f32 %v1223, 0.014752088
    %v1225 = vmul.f32 %v1209, %v1224
    %v1226 = vadd.f32 %v1225, 0.112945676
    %v1227 = vmul.f32 %v1209, %v1226
    %v1228 = vadd.f32 %v1227, 0.4994258
    %v1229 = vmul.f32 %v1209, %v1228
    %v1230 = vadd.f32 %v1229, 1.0
    %v1231 = vrcp.pop %v1230
    %v1232 = vmul.f32 %v1230, %v1231
    %v1233 = vsub.f32 1.0, %v1232
    %v1234 = vmul.f32 %v1231, %v1233
    %v1235 = vadd.f32 %v1231, %v1234
    %vm1236 = vweird.f32 %v1230
    %vm1237 = vweird.f32 %v1231
    %vm1238 = vmor %vm1236, %vm1237
    %v1239 = vsel %vm1238, %v1231, %v1235
    %v1240 = vand.u32 2147483647, %v1230
    %vm1241 = vcmp.eq.f32.partialorder %v1240, 8.507059e+37
    %v1242 = vand.u32 %v1230, 2147483648
    %v1243 = vor.u32 1.1754944e-38, %v1242
    %v1244 = vsel %vm1241, %v1243, %v1239
    %v1245 = vmul.f32 %v1220, %v1244
    %v1246 = vmin.f32 %v1245, 1.0
    %v1247 = vmax.f32 %v1246, -1.0
    %v1248 = vmul.f32 %v1006, %v1006
    %v1249 = vmin.f32 16.0, %v1248
    %v1250 = vmul.f32 %v1249, 2.1237322e-06
    %v1251 = vadd.f32 %v1250, 0.00028619796
    %v1252 = vmul.f32 %v1249, %v1251
    %v1253 = vadd.f32 %v1252, 0.0036580483
    %v1254 = vmul.f32 %v1249, %v1253
    %v1255 = vadd.f32 %v1254, 0.05243302
    %v1256 = vmul.f32 %v1249, %v1255
    %v1257 = vadd.f32 %v1256, 0.18741608
    %v1258 = vmul.f32 %v1249, %v1257
    %v1259 = vadd.f32 %v1258, 1.1283791
    %v1260 = vmul.f32 %v1006, %v1259
    %v1261 = vmul.f32 %v1249, 3.8918573e-05
    %v1262 = vadd.f32 %v1261, 0.001143296
    %v1263 = vmul.f32 %v1249, %v1262
    %v1264 = vadd.f32 %v1263, 0.014752088
    %v1265 = vmul.f32 %v1249, %v1264
    %v1266 = vadd.f32 %v1265, 0.112945676
    %v1267 = vmul.f32 %v1249, %v1266
    %v1268 = vadd.f32 %v1267, 0.4994258
    %v1269 = vmul.f32 %v1249, %v1268
    %v1270 = vadd.f32 %v1269, 1.0
    %v1271 = vrcp.pop %v1270
    %v1272 = vmul.f32 %v1270, %v1271
    %v1273 = vsub.f32 1.0, %v1272
    %v1274 = vmul.f32 %v1271, %v1273
    %v1275 = vadd.f32 %v1271, %v1274
    %vm1276 = vweird.f32 %v1270
    %vm1277 = vweird.f32 %v1271
    %vm1278 = vmor %vm1276, %vm1277
    %v1279 = vsel %vm1278, %v1271, %v1275
    %v1280 = vand.u32 2147483647, %v1270
    %vm1281 = vcmp.eq.f32.partialorder %v1280, 8.507059e+37
    %v1282 = vand.u32 %v1270, 2147483648
    %v1283 = vor.u32 1.1754944e-38, %v1282
    %v1284 = vsel %vm1281, %v1283, %v1279
    %v1285 = vmul.f32 %v1260, %v1284
    %v1286 = vmin.f32 %v1285, 1.0
    %v1287 = vmax.f32 %v1286, -1.0
    %v1288 = vmul.f32 %v1007, %v1007
    %v1289 = vmin.f32 16.0, %v1288
    %v1290 = vmul.f32 %v1289, 2.1237322e-06
    %v1291 = vadd.f32 %v1290, 0.00028619796
    %v1292 = vmul.f32 %v1289, %v1291
    %v1293 = vadd.f32 %v1292, 0.0036580483
    %v1294 = vmul.f32 %v1289, %v1293
    %v1295 = vadd.f32 %v1294, 0.05243302
    %v1296 = vmul.f32 %v1289, %v1295
    %v1297 = vadd.f32 %v1296, 0.18741608
    %v1298 = vmul.f32 %v1289, %v1297
    %v1299 = vadd.f32 %v1298, 1.1283791
    %v1300 = vmul.f32 %v1007, %v1299
    %v1301 = vmul.f32 %v1289, 3.8918573e-05
    %v1302 = vadd.f32 %v1301, 0.001143296
    %v1303 = vmul.f32 %v1289, %v1302
    %v1304 = vadd.f32 %v1303, 0.014752088
    %v1305 = vmul.f32 %v1289, %v1304
    %v1306 = vadd.f32 %v1305, 0.112945676
    %v1307 = vmul.f32 %v1289, %v1306
    %v1308 = vadd.f32 %v1307, 0.4994258
    %v1309 = vmul.f32 %v1289, %v1308
    %v1310 = vadd.f32 %v1309, 1.0
    %v1311 = vrcp.pop %v1310
    %v1312 = vmul.f32 %v1310, %v1311
    %v1313 = vsub.f32 1.0, %v1312
    %v1314 = vmul.f32 %v1311, %v1313
    %v1315 = vadd.f32 %v1311, %v1314
    %vm1316 = vweird.f32 %v1310
    %vm1317 = vweird.f32 %v1311
    %vm1318 = vmor %vm1316, %vm1317
    %v1319 = vsel %vm1318, %v1311, %v1315
    %v1320 = vand.u32 2147483647, %v1310
    %vm1321 = vcmp.eq.f32.partialorder %v1320, 8.507059e+37
    %v1322 = vand.u32 %v1310, 2147483648
    %v1323 = vor.u32 1.1754944e-38, %v1322
    %v1324 = vsel %vm1321, %v1323, %v1319
    %v1325 = vmul.f32 %v1300, %v1324
    %v1326 = vmin.f32 %v1325, 1.0
    %v1327 = vmax.f32 %v1326, -1.0
    %v1328 = vadd.f32 %v1047, 1.0
    %v1329 = vadd.f32 %v1087, 1.0
    %v1330 = vadd.f32 %v1127, 1.0
    %v1331 = vadd.f32 %v1167, 1.0
    %v1332 = vadd.f32 %v1207, 1.0
    %v1333 = vadd.f32 %v1247, 1.0
    %v1334 = vadd.f32 %v1287, 1.0
    %v1335 = vadd.f32 %v1327, 1.0
    %v1336 = vmul.f32 %v992, %v1328
    %v1337 = vmul.f32 %v993, %v1329
    %v1338 = vmul.f32 %v994, %v1330
    %v1339 = vmul.f32 %v995, %v1331
    %v1340 = vmul.f32 %v996, %v1332
    %v1341 = vmul.f32 %v997, %v1333
    %v1342 = vmul.f32 %v998, %v1334
    %v1343 = vmul.f32 %v999, %v1335
    %v1344 = vpack.c.bf16 %v1337, %v1336
    %v1345 = vpack.c.bf16 %v1339, %v1338
    %v1346 = vpack.c.bf16 %v1341, %v1340
    %v1347 = vpack.c.bf16 %v1343, %v1342
    %v1349 = vperm.slane %v69, 0
    %v1359 = vunpack.c.l.b16 %v61
    %v1360 = vunpack.c.l.b16 %v62
    %v1361 = vunpack.c.l.b16 %v63
    %v1362 = vunpack.c.l.b16 %v64
    %v1363 = vunpack.c.l.b16 %v65
    %v1364 = vunpack.c.l.b16 %v66
    %v1365 = vunpack.c.l.b16 %v67
    %v1366 = vunpack.c.l.b16 %v68
    %v1367 = vpack.c.b16 %v1360, %v1359
    %v1368 = vpack.c.b16 %v1362, %v1361
    %v1369 = vpack.c.b16 %v1364, %v1363
    %v1370 = vpack.c.b16 %v1366, %v1365
    %v1376 = vsel %vm139, %v1344, 0
    %v1379 = vsel %vm139, %v1345, 0
    %v1382 = vsel %vm139, %v1346, 0
    %v1385 = vsel %vm139, %v1347, 0
    %1387 = vmatpush.bf16.msra.mxu0 0
    %1388 = vmatpush.bf16.msra.mxu0 0
    %1389 = vmatpush.bf16.msra.mxu0 0
    %1390 = vmatpush.bf16.msra.mxu0 0
    %1391 = vmatpush.bf16.msra.mxu0 %v1370
    %1392 = vmatpush.bf16.msra.mxu0 %v1369
    %1393 = vmatpush.bf16.msra.mxu0 %v1368
    %1394 = vmatpush.bf16.msra.mxu0 %v1367
    %1395 = vmatmul.bf16.gmra.mxu0 %v1376
    %v1396 = vpop.f32.mrf.mxu0
    %v1397 = vadd.f32 %v1349, %v1396
    %v1398 = vpop.f32.mrf.mxu0
    %v1399 = vadd.f32 %v1349, %v1398
    %1400 = vmatmul.bf16.gmra.mxu0 %v1379
    %v1401 = vpop.f32.mrf.mxu0
    %v1402 = vadd.f32 %v1349, %v1401
    %v1403 = vpop.f32.mrf.mxu0
    %v1404 = vadd.f32 %v1349, %v1403
    %1405 = vmatmul.bf16.gmra.mxu0 %v1382
    %v1406 = vpop.f32.mrf.mxu0
    %v1407 = vadd.f32 %v1349, %v1406
    %v1408 = vpop.f32.mrf.mxu0
    %v1409 = vadd.f32 %v1349, %v1408
    %1410 = vmatmul.bf16.gmra.mxu0 %v1385
    %v1411 = vpop.f32.mrf.mxu0
    %v1412 = vadd.f32 %v1349, %v1411
    %v1413 = vpop.f32.mrf.mxu0
    %v1414 = vadd.f32 %v1349, %v1413
    %1415 = vdwg.mxu0
    %v1416 = vmul.f32 %v1397, 1.442695
    %v1417 = vpow.pop %v1416
    %v1418 = vmul.f32 %v1399, 1.442695
    %v1419 = vpow.pop %v1418
    %v1420 = vmul.f32 %v1402, 1.442695
    %v1421 = vpow.pop %v1420
    %v1422 = vmul.f32 %v1404, 1.442695
    %v1423 = vpow.pop %v1422
    %v1424 = vmul.f32 %v1407, 1.442695
    %v1425 = vpow.pop %v1424
    %v1426 = vmul.f32 %v1409, 1.442695
    %v1427 = vpow.pop %v1426
    %v1428 = vmul.f32 %v1412, 1.442695
    %v1429 = vpow.pop %v1428
    %v1430 = vmul.f32 %v1414, 1.442695
    %v1431 = vpow.pop %v1430
    %v1432 = vsel %vm42, %v1417, %v1397
    %v1433 = vsel %vm42, %v1419, %v1399
    %v1434 = vsel %vm42, %v1421, %v1402
    %v1435 = vsel %vm42, %v1423, %v1404
    %v1436 = vsel %vm42, %v1425, %v1407
    %v1437 = vsel %vm42, %v1427, %v1409
    %v1438 = vsel %vm42, %v1429, %v1412
    %v1439 = vsel %vm42, %v1431, %v1414
    %1440 = vst [vmem:[#allocation2] sm:$0xff] %v1432
    %1441 = vst [vmem:[#allocation2 + $0x8] sm:$0xff] %v1433
    %1442 = vst [vmem:[#allocation2 + $0x10] sm:$0xff] %v1434
    %1443 = vst [vmem:[#allocation2 + $0x18] sm:$0xff] %v1435
    %1444 = vst [vmem:[#allocation2 + $0x20] sm:$0xff] %v1436
    %1445 = vst [vmem:[#allocation2 + $0x28] sm:$0xff] %v1437
    %1446 = vst [vmem:[#allocation2 + $0x30] sm:$0xff] %v1438
    %1447 = vst [vmem:[#allocation2 + $0x38] sm:$0xff] %v1439
    %s1448 = scalar_lea.vmem %s0, 64
    %v1449 = vld [vmem:[%s1448] sm:$0xff]
    %v1450 = vld [vmem:[%s1448 + $0x8] sm:$0xff]
    %v1451 = vld [vmem:[%s1448 + $0x10] sm:$0xff]
    %v1452 = vld [vmem:[%s1448 + $0x18] sm:$0xff]
    %v1453 = vld [vmem:[%s1448 + $0x20] sm:$0xff]
    %v1454 = vld [vmem:[%s1448 + $0x28] sm:$0xff]
    %v1455 = vld [vmem:[%s1448 + $0x30] sm:$0xff]
    %v1456 = vld [vmem:[%s1448 + $0x38] sm:$0xff]
    %v1457 = vpack.c.bf16 %v1450, %v1449
    %v1458 = vpack.c.bf16 %v1452, %v1451
    %v1459 = vpack.c.bf16 %v1454, %v1453
    %v1460 = vpack.c.bf16 %v1456, %v1455
    %v1462 = vsel %vm97, %v1457, 0
    %v1465 = vsel %vm97, %v1458, 0
    %v1468 = vsel %vm97, %v1459, 0
    %v1471 = vsel %vm97, %v1460, 0
    %1473 = vmatpush.bf16.msra.mxu0 0
    %1474 = vmatpush.bf16.msra.mxu0 0
    %1475 = vmatpush.bf16.msra.mxu0 0
    %1476 = vmatpush.bf16.msra.mxu0 0
    %1477 = vmatpush.bf16.msra.mxu0 0
    %1478 = vmatpush.bf16.msra.mxu0 0
    %1479 = vmatpush.bf16.msra.mxu0 %v94
    %1480 = vmatpush.bf16.msra.mxu0 %v93
    %1481 = vmatmul.bf16.gmra.mxu0 %v1462
    %v1482 = vpop.f32.mrf.mxu0
    %v1483 = vadd.f32 %v83, %v1482
    %v1484 = vpop.f32.mrf.mxu0
    %v1485 = vadd.f32 %v83, %v1484
    %1486 = vmatmul.bf16.gmra.mxu0 %v1465
    %v1487 = vpop.f32.mrf.mxu0
    %v1488 = vadd.f32 %v83, %v1487
    %v1489 = vpop.f32.mrf.mxu0
    %v1490 = vadd.f32 %v83, %v1489
    %1491 = vmatmul.bf16.gmra.mxu0 %v1468
    %v1492 = vpop.f32.mrf.mxu0
    %v1493 = vadd.f32 %v83, %v1492
    %v1494 = vpop.f32.mrf.mxu0
    %v1495 = vadd.f32 %v83, %v1494
    %1496 = vmatmul.bf16.gmra.mxu0 %v1471
    %v1497 = vpop.f32.mrf.mxu0
    %v1498 = vadd.f32 %v83, %v1497
    %v1499 = vpop.f32.mrf.mxu0
    %v1500 = vadd.f32 %v83, %v1499
    %1501 = vdwg.mxu0
    %v1502 = vsel %vm139, %v1483, 0.0
    %1503 = vadd.xlane.f32.xlu0 %v1502
    %v1504 = vpop.xlane.xlu0 %1503
    %v1505 = vsel %vm139, %v1485, 0.0
    %1506 = vadd.xlane.f32.xlu0 %v1505
    %v1507 = vpop.xlane.xlu0 %1506
    %v1508 = vsel %vm139, %v1488, 0.0
    %1509 = vadd.xlane.f32.xlu0 %v1508
    %v1510 = vpop.xlane.xlu0 %1509
    %v1511 = vsel %vm139, %v1490, 0.0
    %1512 = vadd.xlane.f32.xlu0 %v1511
    %v1513 = vpop.xlane.xlu0 %1512
    %v1514 = vsel %vm139, %v1493, 0.0
    %1515 = vadd.xlane.f32.xlu0 %v1514
    %v1516 = vpop.xlane.xlu0 %1515
    %v1517 = vsel %vm139, %v1495, 0.0
    %1518 = vadd.xlane.f32.xlu0 %v1517
    %v1519 = vpop.xlane.xlu0 %1518
    %v1520 = vsel %vm139, %v1498, 0.0
    %1521 = vadd.xlane.f32.xlu0 %v1520
    %v1522 = vpop.xlane.xlu0 %1521
    %v1523 = vsel %vm139, %v1500, 0.0
    %1524 = vadd.xlane.f32.xlu0 %v1523
    %v1525 = vpop.xlane.xlu0 %1524
    %v1526 = vmul.f32 %v1483, %v1483
    %v1527 = vmul.f32 %v1485, %v1485
    %v1528 = vmul.f32 %v1488, %v1488
    %v1529 = vmul.f32 %v1490, %v1490
    %v1530 = vmul.f32 %v1493, %v1493
    %v1531 = vmul.f32 %v1495, %v1495
    %v1532 = vmul.f32 %v1498, %v1498
    %v1533 = vmul.f32 %v1500, %v1500
    %v1534 = vsel %vm139, %v1526, 0.0
    %1535 = vadd.xlane.f32.xlu0 %v1534
    %v1536 = vpop.xlane.xlu0 %1535
    %v1537 = vsel %vm139, %v1527, 0.0
    %1538 = vadd.xlane.f32.xlu0 %v1537
    %v1539 = vpop.xlane.xlu0 %1538
    %v1540 = vsel %vm139, %v1528, 0.0
    %1541 = vadd.xlane.f32.xlu0 %v1540
    %v1542 = vpop.xlane.xlu0 %1541
    %v1543 = vsel %vm139, %v1529, 0.0
    %1544 = vadd.xlane.f32.xlu0 %v1543
    %v1545 = vpop.xlane.xlu0 %1544
    %v1546 = vsel %vm139, %v1530, 0.0
    %1547 = vadd.xlane.f32.xlu0 %v1546
    %v1548 = vpop.xlane.xlu0 %1547
    %v1549 = vsel %vm139, %v1531, 0.0
    %1550 = vadd.xlane.f32.xlu0 %v1549
    %v1551 = vpop.xlane.xlu0 %1550
    %v1552 = vsel %vm139, %v1532, 0.0
    %1553 = vadd.xlane.f32.xlu0 %v1552
    %v1554 = vpop.xlane.xlu0 %1553
    %v1555 = vsel %vm139, %v1533, 0.0
    %1556 = vadd.xlane.f32.xlu0 %v1555
    %v1557 = vpop.xlane.xlu0 %1556
    %v1558 = vmul.f32 %v1504, 0.015625
    %v1559 = vmul.f32 %v1507, 0.015625
    %v1560 = vmul.f32 %v1510, 0.015625
    %v1561 = vmul.f32 %v1513, 0.015625
    %v1562 = vmul.f32 %v1516, 0.015625
    %v1563 = vmul.f32 %v1519, 0.015625
    %v1564 = vmul.f32 %v1522, 0.015625
    %v1565 = vmul.f32 %v1525, 0.015625
    %v1566 = vmul.f32 %v1536, 0.015625
    %v1567 = vmul.f32 %v1539, 0.015625
    %v1568 = vmul.f32 %v1542, 0.015625
    %v1569 = vmul.f32 %v1545, 0.015625
    %v1570 = vmul.f32 %v1548, 0.015625
    %v1571 = vmul.f32 %v1551, 0.015625
    %v1572 = vmul.f32 %v1554, 0.015625
    %v1573 = vmul.f32 %v1557, 0.015625
    %v1574 = vmul.f32 %v1558, %v1558
    %v1575 = vmul.f32 %v1559, %v1559
    %v1576 = vmul.f32 %v1560, %v1560
    %v1577 = vmul.f32 %v1561, %v1561
    %v1578 = vmul.f32 %v1562, %v1562
    %v1579 = vmul.f32 %v1563, %v1563
    %v1580 = vmul.f32 %v1564, %v1564
    %v1581 = vmul.f32 %v1565, %v1565
    %v1582 = vsub.f32 %v1566, %v1574
    %v1583 = vsub.f32 %v1567, %v1575
    %v1584 = vsub.f32 %v1568, %v1576
    %v1585 = vsub.f32 %v1569, %v1577
    %v1586 = vsub.f32 %v1570, %v1578
    %v1587 = vsub.f32 %v1571, %v1579
    %v1588 = vsub.f32 %v1572, %v1580
    %v1589 = vsub.f32 %v1573, %v1581
    %v1590 = vsub.f32 %v1483, %v1558
    %v1591 = vsub.f32 %v1485, %v1559
    %v1592 = vsub.f32 %v1488, %v1560
    %v1593 = vsub.f32 %v1490, %v1561
    %v1594 = vsub.f32 %v1493, %v1562
    %v1595 = vsub.f32 %v1495, %v1563
    %v1596 = vsub.f32 %v1498, %v1564
    %v1597 = vsub.f32 %v1500, %v1565
    %v1598 = vadd.f32 %v1582, 1e-05
    %v1599 = vadd.f32 %v1583, 1e-05
    %v1600 = vadd.f32 %v1584, 1e-05
    %v1601 = vadd.f32 %v1585, 1e-05
    %v1602 = vadd.f32 %v1586, 1e-05
    %v1603 = vadd.f32 %v1587, 1e-05
    %v1604 = vadd.f32 %v1588, 1e-05
    %v1605 = vadd.f32 %v1589, 1e-05
    %v1606 = vrsqrt.pop %v1598
    %v1607 = vmul.f32 %v1606, %v1598
    %v1608 = vmul.f32 %v1607, %v1606
    %v1609 = vmul.f32 0.5, %v1608
    %v1610 = vsub.f32 1.5, %v1609
    %v1611 = vmul.f32 %v1606, %v1610
    %vm1612 = vweird.f32 %v1598
    %vm1613 = vweird.f32 %v1606
    %vm1614 = vmor %vm1612, %vm1613
    %v1615 = vsel %vm1614, %v1606, %v1611
    %v1616 = vrsqrt.pop %v1599
    %v1617 = vmul.f32 %v1616, %v1599
    %v1618 = vmul.f32 %v1617, %v1616
    %v1619 = vmul.f32 0.5, %v1618
    %v1620 = vsub.f32 1.5, %v1619
    %v1621 = vmul.f32 %v1616, %v1620
    %vm1622 = vweird.f32 %v1599
    %vm1623 = vweird.f32 %v1616
    %vm1624 = vmor %vm1622, %vm1623
    %v1625 = vsel %vm1624, %v1616, %v1621
    %v1626 = vrsqrt.pop %v1600
    %v1627 = vmul.f32 %v1626, %v1600
    %v1628 = vmul.f32 %v1627, %v1626
    %v1629 = vmul.f32 0.5, %v1628
    %v1630 = vsub.f32 1.5, %v1629
    %v1631 = vmul.f32 %v1626, %v1630
    %vm1632 = vweird.f32 %v1600
    %vm1633 = vweird.f32 %v1626
    %vm1634 = vmor %vm1632, %vm1633
    %v1635 = vsel %vm1634, %v1626, %v1631
    %v1636 = vrsqrt.pop %v1601
    %v1637 = vmul.f32 %v1636, %v1601
    %v1638 = vmul.f32 %v1637, %v1636
    %v1639 = vmul.f32 0.5, %v1638
    %v1640 = vsub.f32 1.5, %v1639
    %v1641 = vmul.f32 %v1636, %v1640
    %vm1642 = vweird.f32 %v1601
    %vm1643 = vweird.f32 %v1636
    %vm1644 = vmor %vm1642, %vm1643
    %v1645 = vsel %vm1644, %v1636, %v1641
    %v1646 = vrsqrt.pop %v1602
    %v1647 = vmul.f32 %v1646, %v1602
    %v1648 = vmul.f32 %v1647, %v1646
    %v1649 = vmul.f32 0.5, %v1648
    %v1650 = vsub.f32 1.5, %v1649
    %v1651 = vmul.f32 %v1646, %v1650
    %vm1652 = vweird.f32 %v1602
    %vm1653 = vweird.f32 %v1646
    %vm1654 = vmor %vm1652, %vm1653
    %v1655 = vsel %vm1654, %v1646, %v1651
    %v1656 = vrsqrt.pop %v1603
    %v1657 = vmul.f32 %v1656, %v1603
    %v1658 = vmul.f32 %v1657, %v1656
    %v1659 = vmul.f32 0.5, %v1658
    %v1660 = vsub.f32 1.5, %v1659
    %v1661 = vmul.f32 %v1656, %v1660
    %vm1662 = vweird.f32 %v1603
    %vm1663 = vweird.f32 %v1656
    %vm1664 = vmor %vm1662, %vm1663
    %v1665 = vsel %vm1664, %v1656, %v1661
    %v1666 = vrsqrt.pop %v1604
    %v1667 = vmul.f32 %v1666, %v1604
    %v1668 = vmul.f32 %v1667, %v1666
    %v1669 = vmul.f32 0.5, %v1668
    %v1670 = vsub.f32 1.5, %v1669
    %v1671 = vmul.f32 %v1666, %v1670
    %vm1672 = vweird.f32 %v1604
    %vm1673 = vweird.f32 %v1666
    %vm1674 = vmor %vm1672, %vm1673
    %v1675 = vsel %vm1674, %v1666, %v1671
    %v1676 = vrsqrt.pop %v1605
    %v1677 = vmul.f32 %v1676, %v1605
    %v1678 = vmul.f32 %v1677, %v1676
    %v1679 = vmul.f32 0.5, %v1678
    %v1680 = vsub.f32 1.5, %v1679
    %v1681 = vmul.f32 %v1676, %v1680
    %vm1682 = vweird.f32 %v1605
    %vm1683 = vweird.f32 %v1676
    %vm1684 = vmor %vm1682, %vm1683
    %v1685 = vsel %vm1684, %v1676, %v1681
    %v1686 = vmul.f32 %v1590, %v1615
    %v1687 = vmul.f32 %v1591, %v1625
    %v1688 = vmul.f32 %v1592, %v1635
    %v1689 = vmul.f32 %v1593, %v1645
    %v1690 = vmul.f32 %v1594, %v1655
    %v1691 = vmul.f32 %v1595, %v1665
    %v1692 = vmul.f32 %v1596, %v1675
    %v1693 = vmul.f32 %v1597, %v1685
    %v1694 = vmul.f32 %v1686, %v333
    %v1695 = vmul.f32 %v1687, %v333
    %v1696 = vmul.f32 %v1688, %v333
    %v1697 = vmul.f32 %v1689, %v333
    %v1698 = vmul.f32 %v1690, %v333
    %v1699 = vmul.f32 %v1691, %v333
    %v1700 = vmul.f32 %v1692, %v333
    %v1701 = vmul.f32 %v1693, %v333
    %v1702 = vadd.f32 %v1694, %v344
    %v1703 = vadd.f32 %v1695, %v344
    %v1704 = vadd.f32 %v1696, %v344
    %v1705 = vadd.f32 %v1697, %v344
    %v1706 = vadd.f32 %v1698, %v344
    %v1707 = vadd.f32 %v1699, %v344
    %v1708 = vadd.f32 %v1700, %v344
    %v1709 = vadd.f32 %v1701, %v344
    %v1710 = vmul.f32 %v1702, 0.5
    %v1711 = vmul.f32 %v1703, 0.5
    %v1712 = vmul.f32 %v1704, 0.5
    %v1713 = vmul.f32 %v1705, 0.5
    %v1714 = vmul.f32 %v1706, 0.5
    %v1715 = vmul.f32 %v1707, 0.5
    %v1716 = vmul.f32 %v1708, 0.5
    %v1717 = vmul.f32 %v1709, 0.5
    %v1718 = vmul.f32 %v1702, 0.70710677
    %v1719 = vmul.f32 %v1703, 0.70710677
    %v1720 = vmul.f32 %v1704, 0.70710677
    %v1721 = vmul.f32 %v1705, 0.70710677
    %v1722 = vmul.f32 %v1706, 0.70710677
    %v1723 = vmul.f32 %v1707, 0.70710677
    %v1724 = vmul.f32 %v1708, 0.70710677
    %v1725 = vmul.f32 %v1709, 0.70710677
    %v1726 = vmul.f32 %v1718, %v1718
    %v1727 = vmin.f32 16.0, %v1726
    %v1728 = vmul.f32 %v1727, 2.1237322e-06
    %v1729 = vadd.f32 %v1728, 0.00028619796
    %v1730 = vmul.f32 %v1727, %v1729
    %v1731 = vadd.f32 %v1730, 0.0036580483
    %v1732 = vmul.f32 %v1727, %v1731
    %v1733 = vadd.f32 %v1732, 0.05243302
    %v1734 = vmul.f32 %v1727, %v1733
    %v1735 = vadd.f32 %v1734, 0.18741608
    %v1736 = vmul.f32 %v1727, %v1735
    %v1737 = vadd.f32 %v1736, 1.1283791
    %v1738 = vmul.f32 %v1718, %v1737
    %v1739 = vmul.f32 %v1727, 3.8918573e-05
    %v1740 = vadd.f32 %v1739, 0.001143296
    %v1741 = vmul.f32 %v1727, %v1740
    %v1742 = vadd.f32 %v1741, 0.014752088
    %v1743 = vmul.f32 %v1727, %v1742
    %v1744 = vadd.f32 %v1743, 0.112945676
    %v1745 = vmul.f32 %v1727, %v1744
    %v1746 = vadd.f32 %v1745, 0.4994258
    %v1747 = vmul.f32 %v1727, %v1746
    %v1748 = vadd.f32 %v1747, 1.0
    %v1749 = vrcp.pop %v1748
    %v1750 = vmul.f32 %v1748, %v1749
    %v1751 = vsub.f32 1.0, %v1750
    %v1752 = vmul.f32 %v1749, %v1751
    %v1753 = vadd.f32 %v1749, %v1752
    %vm1754 = vweird.f32 %v1748
    %vm1755 = vweird.f32 %v1749
    %vm1756 = vmor %vm1754, %vm1755
    %v1757 = vsel %vm1756, %v1749, %v1753
    %v1758 = vand.u32 2147483647, %v1748
    %vm1759 = vcmp.eq.f32.partialorder %v1758, 8.507059e+37
    %v1760 = vand.u32 %v1748, 2147483648
    %v1761 = vor.u32 1.1754944e-38, %v1760
    %v1762 = vsel %vm1759, %v1761, %v1757
    %v1763 = vmul.f32 %v1738, %v1762
    %v1764 = vmin.f32 %v1763, 1.0
    %v1765 = vmax.f32 %v1764, -1.0
    %v1766 = vmul.f32 %v1719, %v1719
    %v1767 = vmin.f32 16.0, %v1766
    %v1768 = vmul.f32 %v1767, 2.1237322e-06
    %v1769 = vadd.f32 %v1768, 0.00028619796
    %v1770 = vmul.f32 %v1767, %v1769
    %v1771 = vadd.f32 %v1770, 0.0036580483
    %v1772 = vmul.f32 %v1767, %v1771
    %v1773 = vadd.f32 %v1772, 0.05243302
    %v1774 = vmul.f32 %v1767, %v1773
    %v1775 = vadd.f32 %v1774, 0.18741608
    %v1776 = vmul.f32 %v1767, %v1775
    %v1777 = vadd.f32 %v1776, 1.1283791
    %v1778 = vmul.f32 %v1719, %v1777
    %v1779 = vmul.f32 %v1767, 3.8918573e-05
    %v1780 = vadd.f32 %v1779, 0.001143296
    %v1781 = vmul.f32 %v1767, %v1780
    %v1782 = vadd.f32 %v1781, 0.014752088
    %v1783 = vmul.f32 %v1767, %v1782
    %v1784 = vadd.f32 %v1783, 0.112945676
    %v1785 = vmul.f32 %v1767, %v1784
    %v1786 = vadd.f32 %v1785, 0.4994258
    %v1787 = vmul.f32 %v1767, %v1786
    %v1788 = vadd.f32 %v1787, 1.0
    %v1789 = vrcp.pop %v1788
    %v1790 = vmul.f32 %v1788, %v1789
    %v1791 = vsub.f32 1.0, %v1790
    %v1792 = vmul.f32 %v1789, %v1791
    %v1793 = vadd.f32 %v1789, %v1792
    %vm1794 = vweird.f32 %v1788
    %vm1795 = vweird.f32 %v1789
    %vm1796 = vmor %vm1794, %vm1795
    %v1797 = vsel %vm1796, %v1789, %v1793
    %v1798 = vand.u32 2147483647, %v1788
    %vm1799 = vcmp.eq.f32.partialorder %v1798, 8.507059e+37
    %v1800 = vand.u32 %v1788, 2147483648
    %v1801 = vor.u32 1.1754944e-38, %v1800
    %v1802 = vsel %vm1799, %v1801, %v1797
    %v1803 = vmul.f32 %v1778, %v1802
    %v1804 = vmin.f32 %v1803, 1.0
    %v1805 = vmax.f32 %v1804, -1.0
    %v1806 = vmul.f32 %v1720, %v1720
    %v1807 = vmin.f32 16.0, %v1806
    %v1808 = vmul.f32 %v1807, 2.1237322e-06
    %v1809 = vadd.f32 %v1808, 0.00028619796
    %v1810 = vmul.f32 %v1807, %v1809
    %v1811 = vadd.f32 %v1810, 0.0036580483
    %v1812 = vmul.f32 %v1807, %v1811
    %v1813 = vadd.f32 %v1812, 0.05243302
    %v1814 = vmul.f32 %v1807, %v1813
    %v1815 = vadd.f32 %v1814, 0.18741608
    %v1816 = vmul.f32 %v1807, %v1815
    %v1817 = vadd.f32 %v1816, 1.1283791
    %v1818 = vmul.f32 %v1720, %v1817
    %v1819 = vmul.f32 %v1807, 3.8918573e-05
    %v1820 = vadd.f32 %v1819, 0.001143296
    %v1821 = vmul.f32 %v1807, %v1820
    %v1822 = vadd.f32 %v1821, 0.014752088
    %v1823 = vmul.f32 %v1807, %v1822
    %v1824 = vadd.f32 %v1823, 0.112945676
    %v1825 = vmul.f32 %v1807, %v1824
    %v1826 = vadd.f32 %v1825, 0.4994258
    %v1827 = vmul.f32 %v1807, %v1826
    %v1828 = vadd.f32 %v1827, 1.0
    %v1829 = vrcp.pop %v1828
    %v1830 = vmul.f32 %v1828, %v1829
    %v1831 = vsub.f32 1.0, %v1830
    %v1832 = vmul.f32 %v1829, %v1831
    %v1833 = vadd.f32 %v1829, %v1832
    %vm1834 = vweird.f32 %v1828
    %vm1835 = vweird.f32 %v1829
    %vm1836 = vmor %vm1834, %vm1835
    %v1837 = vsel %vm1836, %v1829, %v1833
    %v1838 = vand.u32 2147483647, %v1828
    %vm1839 = vcmp.eq.f32.partialorder %v1838, 8.507059e+37
    %v1840 = vand.u32 %v1828, 2147483648
    %v1841 = vor.u32 1.1754944e-38, %v1840
    %v1842 = vsel %vm1839, %v1841, %v1837
    %v1843 = vmul.f32 %v1818, %v1842
    %v1844 = vmin.f32 %v1843, 1.0
    %v1845 = vmax.f32 %v1844, -1.0
    %v1846 = vmul.f32 %v1721, %v1721
    %v1847 = vmin.f32 16.0, %v1846
    %v1848 = vmul.f32 %v1847, 2.1237322e-06
    %v1849 = vadd.f32 %v1848, 0.00028619796
    %v1850 = vmul.f32 %v1847, %v1849
    %v1851 = vadd.f32 %v1850, 0.0036580483
    %v1852 = vmul.f32 %v1847, %v1851
    %v1853 = vadd.f32 %v1852, 0.05243302
    %v1854 = vmul.f32 %v1847, %v1853
    %v1855 = vadd.f32 %v1854, 0.18741608
    %v1856 = vmul.f32 %v1847, %v1855
    %v1857 = vadd.f32 %v1856, 1.1283791
    %v1858 = vmul.f32 %v1721, %v1857
    %v1859 = vmul.f32 %v1847, 3.8918573e-05
    %v1860 = vadd.f32 %v1859, 0.001143296
    %v1861 = vmul.f32 %v1847, %v1860
    %v1862 = vadd.f32 %v1861, 0.014752088
    %v1863 = vmul.f32 %v1847, %v1862
    %v1864 = vadd.f32 %v1863, 0.112945676
    %v1865 = vmul.f32 %v1847, %v1864
    %v1866 = vadd.f32 %v1865, 0.4994258
    %v1867 = vmul.f32 %v1847, %v1866
    %v1868 = vadd.f32 %v1867, 1.0
    %v1869 = vrcp.pop %v1868
    %v1870 = vmul.f32 %v1868, %v1869
    %v1871 = vsub.f32 1.0, %v1870
    %v1872 = vmul.f32 %v1869, %v1871
    %v1873 = vadd.f32 %v1869, %v1872
    %vm1874 = vweird.f32 %v1868
    %vm1875 = vweird.f32 %v1869
    %vm1876 = vmor %vm1874, %vm1875
    %v1877 = vsel %vm1876, %v1869, %v1873
    %v1878 = vand.u32 2147483647, %v1868
    %vm1879 = vcmp.eq.f32.partialorder %v1878, 8.507059e+37
    %v1880 = vand.u32 %v1868, 2147483648
    %v1881 = vor.u32 1.1754944e-38, %v1880
    %v1882 = vsel %vm1879, %v1881, %v1877
    %v1883 = vmul.f32 %v1858, %v1882
    %v1884 = vmin.f32 %v1883, 1.0
    %v1885 = vmax.f32 %v1884, -1.0
    %v1886 = vmul.f32 %v1722, %v1722
    %v1887 = vmin.f32 16.0, %v1886
    %v1888 = vmul.f32 %v1887, 2.1237322e-06
    %v1889 = vadd.f32 %v1888, 0.00028619796
    %v1890 = vmul.f32 %v1887, %v1889
    %v1891 = vadd.f32 %v1890, 0.0036580483
    %v1892 = vmul.f32 %v1887, %v1891
    %v1893 = vadd.f32 %v1892, 0.05243302
    %v1894 = vmul.f32 %v1887, %v1893
    %v1895 = vadd.f32 %v1894, 0.18741608
    %v1896 = vmul.f32 %v1887, %v1895
    %v1897 = vadd.f32 %v1896, 1.1283791
    %v1898 = vmul.f32 %v1722, %v1897
    %v1899 = vmul.f32 %v1887, 3.8918573e-05
    %v1900 = vadd.f32 %v1899, 0.001143296
    %v1901 = vmul.f32 %v1887, %v1900
    %v1902 = vadd.f32 %v1901, 0.014752088
    %v1903 = vmul.f32 %v1887, %v1902
    %v1904 = vadd.f32 %v1903, 0.112945676
    %v1905 = vmul.f32 %v1887, %v1904
    %v1906 = vadd.f32 %v1905, 0.4994258
    %v1907 = vmul.f32 %v1887, %v1906
    %v1908 = vadd.f32 %v1907, 1.0
    %v1909 = vrcp.pop %v1908
    %v1910 = vmul.f32 %v1908, %v1909
    %v1911 = vsub.f32 1.0, %v1910
    %v1912 = vmul.f32 %v1909, %v1911
    %v1913 = vadd.f32 %v1909, %v1912
    %vm1914 = vweird.f32 %v1908
    %vm1915 = vweird.f32 %v1909
    %vm1916 = vmor %vm1914, %vm1915
    %v1917 = vsel %vm1916, %v1909, %v1913
    %v1918 = vand.u32 2147483647, %v1908
    %vm1919 = vcmp.eq.f32.partialorder %v1918, 8.507059e+37
    %v1920 = vand.u32 %v1908, 2147483648
    %v1921 = vor.u32 1.1754944e-38, %v1920
    %v1922 = vsel %vm1919, %v1921, %v1917
    %v1923 = vmul.f32 %v1898, %v1922
    %v1924 = vmin.f32 %v1923, 1.0
    %v1925 = vmax.f32 %v1924, -1.0
    %v1926 = vmul.f32 %v1723, %v1723
    %v1927 = vmin.f32 16.0, %v1926
    %v1928 = vmul.f32 %v1927, 2.1237322e-06
    %v1929 = vadd.f32 %v1928, 0.00028619796
    %v1930 = vmul.f32 %v1927, %v1929
    %v1931 = vadd.f32 %v1930, 0.0036580483
    %v1932 = vmul.f32 %v1927, %v1931
    %v1933 = vadd.f32 %v1932, 0.05243302
    %v1934 = vmul.f32 %v1927, %v1933
    %v1935 = vadd.f32 %v1934, 0.18741608
    %v1936 = vmul.f32 %v1927, %v1935
    %v1937 = vadd.f32 %v1936, 1.1283791
    %v1938 = vmul.f32 %v1723, %v1937
    %v1939 = vmul.f32 %v1927, 3.8918573e-05
    %v1940 = vadd.f32 %v1939, 0.001143296
    %v1941 = vmul.f32 %v1927, %v1940
    %v1942 = vadd.f32 %v1941, 0.014752088
    %v1943 = vmul.f32 %v1927, %v1942
    %v1944 = vadd.f32 %v1943, 0.112945676
    %v1945 = vmul.f32 %v1927, %v1944
    %v1946 = vadd.f32 %v1945, 0.4994258
    %v1947 = vmul.f32 %v1927, %v1946
    %v1948 = vadd.f32 %v1947, 1.0
    %v1949 = vrcp.pop %v1948
    %v1950 = vmul.f32 %v1948, %v1949
    %v1951 = vsub.f32 1.0, %v1950
    %v1952 = vmul.f32 %v1949, %v1951
    %v1953 = vadd.f32 %v1949, %v1952
    %vm1954 = vweird.f32 %v1948
    %vm1955 = vweird.f32 %v1949
    %vm1956 = vmor %vm1954, %vm1955
    %v1957 = vsel %vm1956, %v1949, %v1953
    %v1958 = vand.u32 2147483647, %v1948
    %vm1959 = vcmp.eq.f32.partialorder %v1958, 8.507059e+37
    %v1960 = vand.u32 %v1948, 2147483648
    %v1961 = vor.u32 1.1754944e-38, %v1960
    %v1962 = vsel %vm1959, %v1961, %v1957
    %v1963 = vmul.f32 %v1938, %v1962
    %v1964 = vmin.f32 %v1963, 1.0
    %v1965 = vmax.f32 %v1964, -1.0
    %v1966 = vmul.f32 %v1724, %v1724
    %v1967 = vmin.f32 16.0, %v1966
    %v1968 = vmul.f32 %v1967, 2.1237322e-06
    %v1969 = vadd.f32 %v1968, 0.00028619796
    %v1970 = vmul.f32 %v1967, %v1969
    %v1971 = vadd.f32 %v1970, 0.0036580483
    %v1972 = vmul.f32 %v1967, %v1971
    %v1973 = vadd.f32 %v1972, 0.05243302
    %v1974 = vmul.f32 %v1967, %v1973
    %v1975 = vadd.f32 %v1974, 0.18741608
    %v1976 = vmul.f32 %v1967, %v1975
    %v1977 = vadd.f32 %v1976, 1.1283791
    %v1978 = vmul.f32 %v1724, %v1977
    %v1979 = vmul.f32 %v1967, 3.8918573e-05
    %v1980 = vadd.f32 %v1979, 0.001143296
    %v1981 = vmul.f32 %v1967, %v1980
    %v1982 = vadd.f32 %v1981, 0.014752088
    %v1983 = vmul.f32 %v1967, %v1982
    %v1984 = vadd.f32 %v1983, 0.112945676
    %v1985 = vmul.f32 %v1967, %v1984
    %v1986 = vadd.f32 %v1985, 0.4994258
    %v1987 = vmul.f32 %v1967, %v1986
    %v1988 = vadd.f32 %v1987, 1.0
    %v1989 = vrcp.pop %v1988
    %v1990 = vmul.f32 %v1988, %v1989
    %v1991 = vsub.f32 1.0, %v1990
    %v1992 = vmul.f32 %v1989, %v1991
    %v1993 = vadd.f32 %v1989, %v1992
    %vm1994 = vweird.f32 %v1988
    %vm1995 = vweird.f32 %v1989
    %vm1996 = vmor %vm1994, %vm1995
    %v1997 = vsel %vm1996, %v1989, %v1993
    %v1998 = vand.u32 2147483647, %v1988
    %vm1999 = vcmp.eq.f32.partialorder %v1998, 8.507059e+37
    %v2000 = vand.u32 %v1988, 2147483648
    %v2001 = vor.u32 1.1754944e-38, %v2000
    %v2002 = vsel %vm1999, %v2001, %v1997
    %v2003 = vmul.f32 %v1978, %v2002
    %v2004 = vmin.f32 %v2003, 1.0
    %v2005 = vmax.f32 %v2004, -1.0
    %v2006 = vmul.f32 %v1725, %v1725
    %v2007 = vmin.f32 16.0, %v2006
    %v2008 = vmul.f32 %v2007, 2.1237322e-06
    %v2009 = vadd.f32 %v2008, 0.00028619796
    %v2010 = vmul.f32 %v2007, %v2009
    %v2011 = vadd.f32 %v2010, 0.0036580483
    %v2012 = vmul.f32 %v2007, %v2011
    %v2013 = vadd.f32 %v2012, 0.05243302
    %v2014 = vmul.f32 %v2007, %v2013
    %v2015 = vadd.f32 %v2014, 0.18741608
    %v2016 = vmul.f32 %v2007, %v2015
    %v2017 = vadd.f32 %v2016, 1.1283791
    %v2018 = vmul.f32 %v1725, %v2017
    %v2019 = vmul.f32 %v2007, 3.8918573e-05
    %v2020 = vadd.f32 %v2019, 0.001143296
    %v2021 = vmul.f32 %v2007, %v2020
    %v2022 = vadd.f32 %v2021, 0.014752088
    %v2023 = vmul.f32 %v2007, %v2022
    %v2024 = vadd.f32 %v2023, 0.112945676
    %v2025 = vmul.f32 %v2007, %v2024
    %v2026 = vadd.f32 %v2025, 0.4994258
    %v2027 = vmul.f32 %v2007, %v2026
    %v2028 = vadd.f32 %v2027, 1.0
    %v2029 = vrcp.pop %v2028
    %v2030 = vmul.f32 %v2028, %v2029
    %v2031 = vsub.f32 1.0, %v2030
    %v2032 = vmul.f32 %v2029, %v2031
    %v2033 = vadd.f32 %v2029, %v2032
    %vm2034 = vweird.f32 %v2028
    %vm2035 = vweird.f32 %v2029
    %vm2036 = vmor %vm2034, %vm2035
    %v2037 = vsel %vm2036, %v2029, %v2033
    %v2038 = vand.u32 2147483647, %v2028
    %vm2039 = vcmp.eq.f32.partialorder %v2038, 8.507059e+37
    %v2040 = vand.u32 %v2028, 2147483648
    %v2041 = vor.u32 1.1754944e-38, %v2040
    %v2042 = vsel %vm2039, %v2041, %v2037
    %v2043 = vmul.f32 %v2018, %v2042
    %v2044 = vmin.f32 %v2043, 1.0
    %v2045 = vmax.f32 %v2044, -1.0
    %v2046 = vadd.f32 %v1765, 1.0
    %v2047 = vadd.f32 %v1805, 1.0
    %v2048 = vadd.f32 %v1845, 1.0
    %v2049 = vadd.f32 %v1885, 1.0
    %v2050 = vadd.f32 %v1925, 1.0
    %v2051 = vadd.f32 %v1965, 1.0
    %v2052 = vadd.f32 %v2005, 1.0
    %v2053 = vadd.f32 %v2045, 1.0
    %v2054 = vmul.f32 %v1710, %v2046
    %v2055 = vmul.f32 %v1711, %v2047
    %v2056 = vmul.f32 %v1712, %v2048
    %v2057 = vmul.f32 %v1713, %v2049
    %v2058 = vmul.f32 %v1714, %v2050
    %v2059 = vmul.f32 %v1715, %v2051
    %v2060 = vmul.f32 %v1716, %v2052
    %v2061 = vmul.f32 %v1717, %v2053
    %v2062 = vpack.c.bf16 %v2055, %v2054
    %v2063 = vpack.c.bf16 %v2057, %v2056
    %v2064 = vpack.c.bf16 %v2059, %v2058
    %v2065 = vpack.c.bf16 %v2061, %v2060
    %v2067 = vsel %vm139, %v2062, 0
    %v2070 = vsel %vm139, %v2063, 0
    %v2073 = vsel %vm139, %v2064, 0
    %v2076 = vsel %vm139, %v2065, 0
    %2078 = vmatpush.bf16.msra.mxu0 0
    %2079 = vmatpush.bf16.msra.mxu0 0
    %2080 = vmatpush.bf16.msra.mxu0 0
    %2081 = vmatpush.bf16.msra.mxu0 0
    %2082 = vmatpush.bf16.msra.mxu0 %v732
    %2083 = vmatpush.bf16.msra.mxu0 %v731
    %2084 = vmatpush.bf16.msra.mxu0 %v730
    %2085 = vmatpush.bf16.msra.mxu0 %v729
    %2086 = vmatmul.bf16.gmra.mxu0 %v2067
    %v2087 = vpop.f32.mrf.mxu0
    %v2088 = vadd.f32 %v711, %v2087
    %v2089 = vpop.f32.mrf.mxu0
    %v2090 = vadd.f32 %v711, %v2089
    %2091 = vmatmul.bf16.gmra.mxu0 %v2070
    %v2092 = vpop.f32.mrf.mxu0
    %v2093 = vadd.f32 %v711, %v2092
    %v2094 = vpop.f32.mrf.mxu0
    %v2095 = vadd.f32 %v711, %v2094
    %2096 = vmatmul.bf16.gmra.mxu0 %v2073
    %v2097 = vpop.f32.mrf.mxu0
    %v2098 = vadd.f32 %v711, %v2097
    %v2099 = vpop.f32.mrf.mxu0
    %v2100 = vadd.f32 %v711, %v2099
    %2101 = vmatmul.bf16.gmra.mxu0 %v2076
    %v2102 = vpop.f32.mrf.mxu0
    %v2103 = vadd.f32 %v711, %v2102
    %v2104 = vpop.f32.mrf.mxu0
    %v2105 = vadd.f32 %v711, %v2104
    %2106 = vdwg.mxu0
    %v2107 = vsel %vm139, %v2088, 0.0
    %2108 = vadd.xlane.f32.xlu0 %v2107
    %v2109 = vpop.xlane.xlu0 %2108
    %v2110 = vsel %vm139, %v2090, 0.0
    %2111 = vadd.xlane.f32.xlu0 %v2110
    %v2112 = vpop.xlane.xlu0 %2111
    %v2113 = vsel %vm139, %v2093, 0.0
    %2114 = vadd.xlane.f32.xlu0 %v2113
    %v2115 = vpop.xlane.xlu0 %2114
    %v2116 = vsel %vm139, %v2095, 0.0
    %2117 = vadd.xlane.f32.xlu0 %v2116
    %v2118 = vpop.xlane.xlu0 %2117
    %v2119 = vsel %vm139, %v2098, 0.0
    %2120 = vadd.xlane.f32.xlu0 %v2119
    %v2121 = vpop.xlane.xlu0 %2120
    %v2122 = vsel %vm139, %v2100, 0.0
    %2123 = vadd.xlane.f32.xlu0 %v2122
    %v2124 = vpop.xlane.xlu0 %2123
    %v2125 = vsel %vm139, %v2103, 0.0
    %2126 = vadd.xlane.f32.xlu0 %v2125
    %v2127 = vpop.xlane.xlu0 %2126
    %v2128 = vsel %vm139, %v2105, 0.0
    %2129 = vadd.xlane.f32.xlu0 %v2128
    %v2130 = vpop.xlane.xlu0 %2129
    %v2131 = vmul.f32 %v2088, %v2088
    %v2132 = vmul.f32 %v2090, %v2090
    %v2133 = vmul.f32 %v2093, %v2093
    %v2134 = vmul.f32 %v2095, %v2095
    %v2135 = vmul.f32 %v2098, %v2098
    %v2136 = vmul.f32 %v2100, %v2100
    %v2137 = vmul.f32 %v2103, %v2103
    %v2138 = vmul.f32 %v2105, %v2105
    %v2139 = vsel %vm139, %v2131, 0.0
    %2140 = vadd.xlane.f32.xlu0 %v2139
    %v2141 = vpop.xlane.xlu0 %2140
    %v2142 = vsel %vm139, %v2132, 0.0
    %2143 = vadd.xlane.f32.xlu0 %v2142
    %v2144 = vpop.xlane.xlu0 %2143
    %v2145 = vsel %vm139, %v2133, 0.0
    %2146 = vadd.xlane.f32.xlu0 %v2145
    %v2147 = vpop.xlane.xlu0 %2146
    %v2148 = vsel %vm139, %v2134, 0.0
    %2149 = vadd.xlane.f32.xlu0 %v2148
    %v2150 = vpop.xlane.xlu0 %2149
    %v2151 = vsel %vm139, %v2135, 0.0
    %2152 = vadd.xlane.f32.xlu0 %v2151
    %v2153 = vpop.xlane.xlu0 %2152
    %v2154 = vsel %vm139, %v2136, 0.0
    %2155 = vadd.xlane.f32.xlu0 %v2154
    %v2156 = vpop.xlane.xlu0 %2155
    %v2157 = vsel %vm139, %v2137, 0.0
    %2158 = vadd.xlane.f32.xlu0 %v2157
    %v2159 = vpop.xlane.xlu0 %2158
    %v2160 = vsel %vm139, %v2138, 0.0
    %2161 = vadd.xlane.f32.xlu0 %v2160
    %v2162 = vpop.xlane.xlu0 %2161
    %v2163 = vmul.f32 %v2109, 0.015625
    %v2164 = vmul.f32 %v2112, 0.015625
    %v2165 = vmul.f32 %v2115, 0.015625
    %v2166 = vmul.f32 %v2118, 0.015625
    %v2167 = vmul.f32 %v2121, 0.015625
    %v2168 = vmul.f32 %v2124, 0.015625
    %v2169 = vmul.f32 %v2127, 0.015625
    %v2170 = vmul.f32 %v2130, 0.015625
    %v2171 = vmul.f32 %v2141, 0.015625
    %v2172 = vmul.f32 %v2144, 0.015625
    %v2173 = vmul.f32 %v2147, 0.015625
    %v2174 = vmul.f32 %v2150, 0.015625
    %v2175 = vmul.f32 %v2153, 0.015625
    %v2176 = vmul.f32 %v2156, 0.015625
    %v2177 = vmul.f32 %v2159, 0.015625
    %v2178 = vmul.f32 %v2162, 0.015625
    %v2179 = vmul.f32 %v2163, %v2163
    %v2180 = vmul.f32 %v2164, %v2164
    %v2181 = vmul.f32 %v2165, %v2165
    %v2182 = vmul.f32 %v2166, %v2166
    %v2183 = vmul.f32 %v2167, %v2167
    %v2184 = vmul.f32 %v2168, %v2168
    %v2185 = vmul.f32 %v2169, %v2169
    %v2186 = vmul.f32 %v2170, %v2170
    %v2187 = vsub.f32 %v2171, %v2179
    %v2188 = vsub.f32 %v2172, %v2180
    %v2189 = vsub.f32 %v2173, %v2181
    %v2190 = vsub.f32 %v2174, %v2182
    %v2191 = vsub.f32 %v2175, %v2183
    %v2192 = vsub.f32 %v2176, %v2184
    %v2193 = vsub.f32 %v2177, %v2185
    %v2194 = vsub.f32 %v2178, %v2186
    %v2195 = vsub.f32 %v2088, %v2163
    %v2196 = vsub.f32 %v2090, %v2164
    %v2197 = vsub.f32 %v2093, %v2165
    %v2198 = vsub.f32 %v2095, %v2166
    %v2199 = vsub.f32 %v2098, %v2167
    %v2200 = vsub.f32 %v2100, %v2168
    %v2201 = vsub.f32 %v2103, %v2169
    %v2202 = vsub.f32 %v2105, %v2170
    %v2203 = vadd.f32 %v2187, 1e-05
    %v2204 = vadd.f32 %v2188, 1e-05
    %v2205 = vadd.f32 %v2189, 1e-05
    %v2206 = vadd.f32 %v2190, 1e-05
    %v2207 = vadd.f32 %v2191, 1e-05
    %v2208 = vadd.f32 %v2192, 1e-05
    %v2209 = vadd.f32 %v2193, 1e-05
    %v2210 = vadd.f32 %v2194, 1e-05
    %v2211 = vrsqrt.pop %v2203
    %v2212 = vmul.f32 %v2211, %v2203
    %v2213 = vmul.f32 %v2212, %v2211
    %v2214 = vmul.f32 0.5, %v2213
    %v2215 = vsub.f32 1.5, %v2214
    %v2216 = vmul.f32 %v2211, %v2215
    %vm2217 = vweird.f32 %v2203
    %vm2218 = vweird.f32 %v2211
    %vm2219 = vmor %vm2217, %vm2218
    %v2220 = vsel %vm2219, %v2211, %v2216
    %v2221 = vrsqrt.pop %v2204
    %v2222 = vmul.f32 %v2221, %v2204
    %v2223 = vmul.f32 %v2222, %v2221
    %v2224 = vmul.f32 0.5, %v2223
    %v2225 = vsub.f32 1.5, %v2224
    %v2226 = vmul.f32 %v2221, %v2225
    %vm2227 = vweird.f32 %v2204
    %vm2228 = vweird.f32 %v2221
    %vm2229 = vmor %vm2227, %vm2228
    %v2230 = vsel %vm2229, %v2221, %v2226
    %v2231 = vrsqrt.pop %v2205
    %v2232 = vmul.f32 %v2231, %v2205
    %v2233 = vmul.f32 %v2232, %v2231
    %v2234 = vmul.f32 0.5, %v2233
    %v2235 = vsub.f32 1.5, %v2234
    %v2236 = vmul.f32 %v2231, %v2235
    %vm2237 = vweird.f32 %v2205
    %vm2238 = vweird.f32 %v2231
    %vm2239 = vmor %vm2237, %vm2238
    %v2240 = vsel %vm2239, %v2231, %v2236
    %v2241 = vrsqrt.pop %v2206
    %v2242 = vmul.f32 %v2241, %v2206
    %v2243 = vmul.f32 %v2242, %v2241
    %v2244 = vmul.f32 0.5, %v2243
    %v2245 = vsub.f32 1.5, %v2244
    %v2246 = vmul.f32 %v2241, %v2245
    %vm2247 = vweird.f32 %v2206
    %vm2248 = vweird.f32 %v2241
    %vm2249 = vmor %vm2247, %vm2248
    %v2250 = vsel %vm2249, %v2241, %v2246
    %v2251 = vrsqrt.pop %v2207
    %v2252 = vmul.f32 %v2251, %v2207
    %v2253 = vmul.f32 %v2252, %v2251
    %v2254 = vmul.f32 0.5, %v2253
    %v2255 = vsub.f32 1.5, %v2254
    %v2256 = vmul.f32 %v2251, %v2255
    %vm2257 = vweird.f32 %v2207
    %vm2258 = vweird.f32 %v2251
    %vm2259 = vmor %vm2257, %vm2258
    %v2260 = vsel %vm2259, %v2251, %v2256
    %v2261 = vrsqrt.pop %v2208
    %v2262 = vmul.f32 %v2261, %v2208
    %v2263 = vmul.f32 %v2262, %v2261
    %v2264 = vmul.f32 0.5, %v2263
    %v2265 = vsub.f32 1.5, %v2264
    %v2266 = vmul.f32 %v2261, %v2265
    %vm2267 = vweird.f32 %v2208
    %vm2268 = vweird.f32 %v2261
    %vm2269 = vmor %vm2267, %vm2268
    %v2270 = vsel %vm2269, %v2261, %v2266
    %v2271 = vrsqrt.pop %v2209
    %v2272 = vmul.f32 %v2271, %v2209
    %v2273 = vmul.f32 %v2272, %v2271
    %v2274 = vmul.f32 0.5, %v2273
    %v2275 = vsub.f32 1.5, %v2274
    %v2276 = vmul.f32 %v2271, %v2275
    %vm2277 = vweird.f32 %v2209
    %vm2278 = vweird.f32 %v2271
    %vm2279 = vmor %vm2277, %vm2278
    %v2280 = vsel %vm2279, %v2271, %v2276
    %v2281 = vrsqrt.pop %v2210
    %v2282 = vmul.f32 %v2281, %v2210
    %v2283 = vmul.f32 %v2282, %v2281
    %v2284 = vmul.f32 0.5, %v2283
    %v2285 = vsub.f32 1.5, %v2284
    %v2286 = vmul.f32 %v2281, %v2285
    %vm2287 = vweird.f32 %v2210
    %vm2288 = vweird.f32 %v2281
    %vm2289 = vmor %vm2287, %vm2288
    %v2290 = vsel %vm2289, %v2281, %v2286
    %v2291 = vmul.f32 %v2195, %v2220
    %v2292 = vmul.f32 %v2196, %v2230
    %v2293 = vmul.f32 %v2197, %v2240
    %v2294 = vmul.f32 %v2198, %v2250
    %v2295 = vmul.f32 %v2199, %v2260
    %v2296 = vmul.f32 %v2200, %v2270
    %v2297 = vmul.f32 %v2201, %v2280
    %v2298 = vmul.f32 %v2202, %v2290
    %v2299 = vmul.f32 %v2291, %v971
    %v2300 = vmul.f32 %v2292, %v971
    %v2301 = vmul.f32 %v2293, %v971
    %v2302 = vmul.f32 %v2294, %v971
    %v2303 = vmul.f32 %v2295, %v971
    %v2304 = vmul.f32 %v2296, %v971
    %v2305 = vmul.f32 %v2297, %v971
    %v2306 = vmul.f32 %v2298, %v971
    %v2307 = vadd.f32 %v2299, %v982
    %v2308 = vadd.f32 %v2300, %v982
    %v2309 = vadd.f32 %v2301, %v982
    %v2310 = vadd.f32 %v2302, %v982
    %v2311 = vadd.f32 %v2303, %v982
    %v2312 = vadd.f32 %v2304, %v982
    %v2313 = vadd.f32 %v2305, %v982
    %v2314 = vadd.f32 %v2306, %v982
    %v2315 = vmul.f32 %v2307, 0.5
    %v2316 = vmul.f32 %v2308, 0.5
    %v2317 = vmul.f32 %v2309, 0.5
    %v2318 = vmul.f32 %v2310, 0.5
    %v2319 = vmul.f32 %v2311, 0.5
    %v2320 = vmul.f32 %v2312, 0.5
    %v2321 = vmul.f32 %v2313, 0.5
    %v2322 = vmul.f32 %v2314, 0.5
    %v2323 = vmul.f32 %v2307, 0.70710677
    %v2324 = vmul.f32 %v2308, 0.70710677
    %v2325 = vmul.f32 %v2309, 0.70710677
    %v2326 = vmul.f32 %v2310, 0.70710677
    %v2327 = vmul.f32 %v2311, 0.70710677
    %v2328 = vmul.f32 %v2312, 0.70710677
    %v2329 = vmul.f32 %v2313, 0.70710677
    %v2330 = vmul.f32 %v2314, 0.70710677
    %v2331 = vmul.f32 %v2323, %v2323
    %v2332 = vmin.f32 16.0, %v2331
    %v2333 = vmul.f32 %v2332, 2.1237322e-06
    %v2334 = vadd.f32 %v2333, 0.00028619796
    %v2335 = vmul.f32 %v2332, %v2334
    %v2336 = vadd.f32 %v2335, 0.0036580483
    %v2337 = vmul.f32 %v2332, %v2336
    %v2338 = vadd.f32 %v2337, 0.05243302
    %v2339 = vmul.f32 %v2332, %v2338
    %v2340 = vadd.f32 %v2339, 0.18741608
    %v2341 = vmul.f32 %v2332, %v2340
    %v2342 = vadd.f32 %v2341, 1.1283791
    %v2343 = vmul.f32 %v2323, %v2342
    %v2344 = vmul.f32 %v2332, 3.8918573e-05
    %v2345 = vadd.f32 %v2344, 0.001143296
    %v2346 = vmul.f32 %v2332, %v2345
    %v2347 = vadd.f32 %v2346, 0.014752088
    %v2348 = vmul.f32 %v2332, %v2347
    %v2349 = vadd.f32 %v2348, 0.112945676
    %v2350 = vmul.f32 %v2332, %v2349
    %v2351 = vadd.f32 %v2350, 0.4994258
    %v2352 = vmul.f32 %v2332, %v2351
    %v2353 = vadd.f32 %v2352, 1.0
    %v2354 = vrcp.pop %v2353
    %v2355 = vmul.f32 %v2353, %v2354
    %v2356 = vsub.f32 1.0, %v2355
    %v2357 = vmul.f32 %v2354, %v2356
    %v2358 = vadd.f32 %v2354, %v2357
    %vm2359 = vweird.f32 %v2353
    %vm2360 = vweird.f32 %v2354
    %vm2361 = vmor %vm2359, %vm2360
    %v2362 = vsel %vm2361, %v2354, %v2358
    %v2363 = vand.u32 2147483647, %v2353
    %vm2364 = vcmp.eq.f32.partialorder %v2363, 8.507059e+37
    %v2365 = vand.u32 %v2353, 2147483648
    %v2366 = vor.u32 1.1754944e-38, %v2365
    %v2367 = vsel %vm2364, %v2366, %v2362
    %v2368 = vmul.f32 %v2343, %v2367
    %v2369 = vmin.f32 %v2368, 1.0
    %v2370 = vmax.f32 %v2369, -1.0
    %v2371 = vmul.f32 %v2324, %v2324
    %v2372 = vmin.f32 16.0, %v2371
    %v2373 = vmul.f32 %v2372, 2.1237322e-06
    %v2374 = vadd.f32 %v2373, 0.00028619796
    %v2375 = vmul.f32 %v2372, %v2374
    %v2376 = vadd.f32 %v2375, 0.0036580483
    %v2377 = vmul.f32 %v2372, %v2376
    %v2378 = vadd.f32 %v2377, 0.05243302
    %v2379 = vmul.f32 %v2372, %v2378
    %v2380 = vadd.f32 %v2379, 0.18741608
    %v2381 = vmul.f32 %v2372, %v2380
    %v2382 = vadd.f32 %v2381, 1.1283791
    %v2383 = vmul.f32 %v2324, %v2382
    %v2384 = vmul.f32 %v2372, 3.8918573e-05
    %v2385 = vadd.f32 %v2384, 0.001143296
    %v2386 = vmul.f32 %v2372, %v2385
    %v2387 = vadd.f32 %v2386, 0.014752088
    %v2388 = vmul.f32 %v2372, %v2387
    %v2389 = vadd.f32 %v2388, 0.112945676
    %v2390 = vmul.f32 %v2372, %v2389
    %v2391 = vadd.f32 %v2390, 0.4994258
    %v2392 = vmul.f32 %v2372, %v2391
    %v2393 = vadd.f32 %v2392, 1.0
    %v2394 = vrcp.pop %v2393
    %v2395 = vmul.f32 %v2393, %v2394
    %v2396 = vsub.f32 1.0, %v2395
    %v2397 = vmul.f32 %v2394, %v2396
    %v2398 = vadd.f32 %v2394, %v2397
    %vm2399 = vweird.f32 %v2393
    %vm2400 = vweird.f32 %v2394
    %vm2401 = vmor %vm2399, %vm2400
    %v2402 = vsel %vm2401, %v2394, %v2398
    %v2403 = vand.u32 2147483647, %v2393
    %vm2404 = vcmp.eq.f32.partialorder %v2403, 8.507059e+37
    %v2405 = vand.u32 %v2393, 2147483648
    %v2406 = vor.u32 1.1754944e-38, %v2405
    %v2407 = vsel %vm2404, %v2406, %v2402
    %v2408 = vmul.f32 %v2383, %v2407
    %v2409 = vmin.f32 %v2408, 1.0
    %v2410 = vmax.f32 %v2409, -1.0
    %v2411 = vmul.f32 %v2325, %v2325
    %v2412 = vmin.f32 16.0, %v2411
    %v2413 = vmul.f32 %v2412, 2.1237322e-06
    %v2414 = vadd.f32 %v2413, 0.00028619796
    %v2415 = vmul.f32 %v2412, %v2414
    %v2416 = vadd.f32 %v2415, 0.0036580483
    %v2417 = vmul.f32 %v2412, %v2416
    %v2418 = vadd.f32 %v2417, 0.05243302
    %v2419 = vmul.f32 %v2412, %v2418
    %v2420 = vadd.f32 %v2419, 0.18741608
    %v2421 = vmul.f32 %v2412, %v2420
    %v2422 = vadd.f32 %v2421, 1.1283791
    %v2423 = vmul.f32 %v2325, %v2422
    %v2424 = vmul.f32 %v2412, 3.8918573e-05
    %v2425 = vadd.f32 %v2424, 0.001143296
    %v2426 = vmul.f32 %v2412, %v2425
    %v2427 = vadd.f32 %v2426, 0.014752088
    %v2428 = vmul.f32 %v2412, %v2427
    %v2429 = vadd.f32 %v2428, 0.112945676
    %v2430 = vmul.f32 %v2412, %v2429
    %v2431 = vadd.f32 %v2430, 0.4994258
    %v2432 = vmul.f32 %v2412, %v2431
    %v2433 = vadd.f32 %v2432, 1.0
    %v2434 = vrcp.pop %v2433
    %v2435 = vmul.f32 %v2433, %v2434
    %v2436 = vsub.f32 1.0, %v2435
    %v2437 = vmul.f32 %v2434, %v2436
    %v2438 = vadd.f32 %v2434, %v2437
    %vm2439 = vweird.f32 %v2433
    %vm2440 = vweird.f32 %v2434
    %vm2441 = vmor %vm2439, %vm2440
    %v2442 = vsel %vm2441, %v2434, %v2438
    %v2443 = vand.u32 2147483647, %v2433
    %vm2444 = vcmp.eq.f32.partialorder %v2443, 8.507059e+37
    %v2445 = vand.u32 %v2433, 2147483648
    %v2446 = vor.u32 1.1754944e-38, %v2445
    %v2447 = vsel %vm2444, %v2446, %v2442
    %v2448 = vmul.f32 %v2423, %v2447
    %v2449 = vmin.f32 %v2448, 1.0
    %v2450 = vmax.f32 %v2449, -1.0
    %v2451 = vmul.f32 %v2326, %v2326
    %v2452 = vmin.f32 16.0, %v2451
    %v2453 = vmul.f32 %v2452, 2.1237322e-06
    %v2454 = vadd.f32 %v2453, 0.00028619796
    %v2455 = vmul.f32 %v2452, %v2454
    %v2456 = vadd.f32 %v2455, 0.0036580483
    %v2457 = vmul.f32 %v2452, %v2456
    %v2458 = vadd.f32 %v2457, 0.05243302
    %v2459 = vmul.f32 %v2452, %v2458
    %v2460 = vadd.f32 %v2459, 0.18741608
    %v2461 = vmul.f32 %v2452, %v2460
    %v2462 = vadd.f32 %v2461, 1.1283791
    %v2463 = vmul.f32 %v2326, %v2462
    %v2464 = vmul.f32 %v2452, 3.8918573e-05
    %v2465 = vadd.f32 %v2464, 0.001143296
    %v2466 = vmul.f32 %v2452, %v2465
    %v2467 = vadd.f32 %v2466, 0.014752088
    %v2468 = vmul.f32 %v2452, %v2467
    %v2469 = vadd.f32 %v2468, 0.112945676
    %v2470 = vmul.f32 %v2452, %v2469
    %v2471 = vadd.f32 %v2470, 0.4994258
    %v2472 = vmul.f32 %v2452, %v2471
    %v2473 = vadd.f32 %v2472, 1.0
    %v2474 = vrcp.pop %v2473
    %v2475 = vmul.f32 %v2473, %v2474
    %v2476 = vsub.f32 1.0, %v2475
    %v2477 = vmul.f32 %v2474, %v2476
    %v2478 = vadd.f32 %v2474, %v2477
    %vm2479 = vweird.f32 %v2473
    %vm2480 = vweird.f32 %v2474
    %vm2481 = vmor %vm2479, %vm2480
    %v2482 = vsel %vm2481, %v2474, %v2478
    %v2483 = vand.u32 2147483647, %v2473
    %vm2484 = vcmp.eq.f32.partialorder %v2483, 8.507059e+37
    %v2485 = vand.u32 %v2473, 2147483648
    %v2486 = vor.u32 1.1754944e-38, %v2485
    %v2487 = vsel %vm2484, %v2486, %v2482
    %v2488 = vmul.f32 %v2463, %v2487
    %v2489 = vmin.f32 %v2488, 1.0
    %v2490 = vmax.f32 %v2489, -1.0
    %v2491 = vmul.f32 %v2327, %v2327
    %v2492 = vmin.f32 16.0, %v2491
    %v2493 = vmul.f32 %v2492, 2.1237322e-06
    %v2494 = vadd.f32 %v2493, 0.00028619796
    %v2495 = vmul.f32 %v2492, %v2494
    %v2496 = vadd.f32 %v2495, 0.0036580483
    %v2497 = vmul.f32 %v2492, %v2496
    %v2498 = vadd.f32 %v2497, 0.05243302
    %v2499 = vmul.f32 %v2492, %v2498
    %v2500 = vadd.f32 %v2499, 0.18741608
    %v2501 = vmul.f32 %v2492, %v2500
    %v2502 = vadd.f32 %v2501, 1.1283791
    %v2503 = vmul.f32 %v2327, %v2502
    %v2504 = vmul.f32 %v2492, 3.8918573e-05
    %v2505 = vadd.f32 %v2504, 0.001143296
    %v2506 = vmul.f32 %v2492, %v2505
    %v2507 = vadd.f32 %v2506, 0.014752088
    %v2508 = vmul.f32 %v2492, %v2507
    %v2509 = vadd.f32 %v2508, 0.112945676
    %v2510 = vmul.f32 %v2492, %v2509
    %v2511 = vadd.f32 %v2510, 0.4994258
    %v2512 = vmul.f32 %v2492, %v2511
    %v2513 = vadd.f32 %v2512, 1.0
    %v2514 = vrcp.pop %v2513
    %v2515 = vmul.f32 %v2513, %v2514
    %v2516 = vsub.f32 1.0, %v2515
    %v2517 = vmul.f32 %v2514, %v2516
    %v2518 = vadd.f32 %v2514, %v2517
    %vm2519 = vweird.f32 %v2513
    %vm2520 = vweird.f32 %v2514
    %vm2521 = vmor %vm2519, %vm2520
    %v2522 = vsel %vm2521, %v2514, %v2518
    %v2523 = vand.u32 2147483647, %v2513
    %vm2524 = vcmp.eq.f32.partialorder %v2523, 8.507059e+37
    %v2525 = vand.u32 %v2513, 2147483648
    %v2526 = vor.u32 1.1754944e-38, %v2525
    %v2527 = vsel %vm2524, %v2526, %v2522
    %v2528 = vmul.f32 %v2503, %v2527
    %v2529 = vmin.f32 %v2528, 1.0
    %v2530 = vmax.f32 %v2529, -1.0
    %v2531 = vmul.f32 %v2328, %v2328
    %v2532 = vmin.f32 16.0, %v2531
    %v2533 = vmul.f32 %v2532, 2.1237322e-06
    %v2534 = vadd.f32 %v2533, 0.00028619796
    %v2535 = vmul.f32 %v2532, %v2534
    %v2536 = vadd.f32 %v2535, 0.0036580483
    %v2537 = vmul.f32 %v2532, %v2536
    %v2538 = vadd.f32 %v2537, 0.05243302
    %v2539 = vmul.f32 %v2532, %v2538
    %v2540 = vadd.f32 %v2539, 0.18741608
    %v2541 = vmul.f32 %v2532, %v2540
    %v2542 = vadd.f32 %v2541, 1.1283791
    %v2543 = vmul.f32 %v2328, %v2542
    %v2544 = vmul.f32 %v2532, 3.8918573e-05
    %v2545 = vadd.f32 %v2544, 0.001143296
    %v2546 = vmul.f32 %v2532, %v2545
    %v2547 = vadd.f32 %v2546, 0.014752088
    %v2548 = vmul.f32 %v2532, %v2547
    %v2549 = vadd.f32 %v2548, 0.112945676
    %v2550 = vmul.f32 %v2532, %v2549
    %v2551 = vadd.f32 %v2550, 0.4994258
    %v2552 = vmul.f32 %v2532, %v2551
    %v2553 = vadd.f32 %v2552, 1.0
    %v2554 = vrcp.pop %v2553
    %v2555 = vmul.f32 %v2553, %v2554
    %v2556 = vsub.f32 1.0, %v2555
    %v2557 = vmul.f32 %v2554, %v2556
    %v2558 = vadd.f32 %v2554, %v2557
    %vm2559 = vweird.f32 %v2553
    %vm2560 = vweird.f32 %v2554
    %vm2561 = vmor %vm2559, %vm2560
    %v2562 = vsel %vm2561, %v2554, %v2558
    %v2563 = vand.u32 2147483647, %v2553
    %vm2564 = vcmp.eq.f32.partialorder %v2563, 8.507059e+37
    %v2565 = vand.u32 %v2553, 2147483648
    %v2566 = vor.u32 1.1754944e-38, %v2565
    %v2567 = vsel %vm2564, %v2566, %v2562
    %v2568 = vmul.f32 %v2543, %v2567
    %v2569 = vmin.f32 %v2568, 1.0
    %v2570 = vmax.f32 %v2569, -1.0
    %v2571 = vmul.f32 %v2329, %v2329
    %v2572 = vmin.f32 16.0, %v2571
    %v2573 = vmul.f32 %v2572, 2.1237322e-06
    %v2574 = vadd.f32 %v2573, 0.00028619796
    %v2575 = vmul.f32 %v2572, %v2574
    %v2576 = vadd.f32 %v2575, 0.0036580483
    %v2577 = vmul.f32 %v2572, %v2576
    %v2578 = vadd.f32 %v2577, 0.05243302
    %v2579 = vmul.f32 %v2572, %v2578
    %v2580 = vadd.f32 %v2579, 0.18741608
    %v2581 = vmul.f32 %v2572, %v2580
    %v2582 = vadd.f32 %v2581, 1.1283791
    %v2583 = vmul.f32 %v2329, %v2582
    %v2584 = vmul.f32 %v2572, 3.8918573e-05
    %v2585 = vadd.f32 %v2584, 0.001143296
    %v2586 = vmul.f32 %v2572, %v2585
    %v2587 = vadd.f32 %v2586, 0.014752088
    %v2588 = vmul.f32 %v2572, %v2587
    %v2589 = vadd.f32 %v2588, 0.112945676
    %v2590 = vmul.f32 %v2572, %v2589
    %v2591 = vadd.f32 %v2590, 0.4994258
    %v2592 = vmul.f32 %v2572, %v2591
    %v2593 = vadd.f32 %v2592, 1.0
    %v2594 = vrcp.pop %v2593
    %v2595 = vmul.f32 %v2593, %v2594
    %v2596 = vsub.f32 1.0, %v2595
    %v2597 = vmul.f32 %v2594, %v2596
    %v2598 = vadd.f32 %v2594, %v2597
    %vm2599 = vweird.f32 %v2593
    %vm2600 = vweird.f32 %v2594
    %vm2601 = vmor %vm2599, %vm2600
    %v2602 = vsel %vm2601, %v2594, %v2598
    %v2603 = vand.u32 2147483647, %v2593
    %vm2604 = vcmp.eq.f32.partialorder %v2603, 8.507059e+37
    %v2605 = vand.u32 %v2593, 2147483648
    %v2606 = vor.u32 1.1754944e-38, %v2605
    %v2607 = vsel %vm2604, %v2606, %v2602
    %v2608 = vmul.f32 %v2583, %v2607
    %v2609 = vmin.f32 %v2608, 1.0
    %v2610 = vmax.f32 %v2609, -1.0
    %v2611 = vmul.f32 %v2330, %v2330
    %v2612 = vmin.f32 16.0, %v2611
    %v2613 = vmul.f32 %v2612, 2.1237322e-06
    %v2614 = vadd.f32 %v2613, 0.00028619796
    %v2615 = vmul.f32 %v2612, %v2614
    %v2616 = vadd.f32 %v2615, 0.0036580483
    %v2617 = vmul.f32 %v2612, %v2616
    %v2618 = vadd.f32 %v2617, 0.05243302
    %v2619 = vmul.f32 %v2612, %v2618
    %v2620 = vadd.f32 %v2619, 0.18741608
    %v2621 = vmul.f32 %v2612, %v2620
    %v2622 = vadd.f32 %v2621, 1.1283791
    %v2623 = vmul.f32 %v2330, %v2622
    %v2624 = vmul.f32 %v2612, 3.8918573e-05
    %v2625 = vadd.f32 %v2624, 0.001143296
    %v2626 = vmul.f32 %v2612, %v2625
    %v2627 = vadd.f32 %v2626, 0.014752088
    %v2628 = vmul.f32 %v2612, %v2627
    %v2629 = vadd.f32 %v2628, 0.112945676
    %v2630 = vmul.f32 %v2612, %v2629
    %v2631 = vadd.f32 %v2630, 0.4994258
    %v2632 = vmul.f32 %v2612, %v2631
    %v2633 = vadd.f32 %v2632, 1.0
    %v2634 = vrcp.pop %v2633
    %v2635 = vmul.f32 %v2633, %v2634
    %v2636 = vsub.f32 1.0, %v2635
    %v2637 = vmul.f32 %v2634, %v2636
    %v2638 = vadd.f32 %v2634, %v2637
    %vm2639 = vweird.f32 %v2633
    %vm2640 = vweird.f32 %v2634
    %vm2641 = vmor %vm2639, %vm2640
    %v2642 = vsel %vm2641, %v2634, %v2638
    %v2643 = vand.u32 2147483647, %v2633
    %vm2644 = vcmp.eq.f32.partialorder %v2643, 8.507059e+37
    %v2645 = vand.u32 %v2633, 2147483648
    %v2646 = vor.u32 1.1754944e-38, %v2645
    %v2647 = vsel %vm2644, %v2646, %v2642
    %v2648 = vmul.f32 %v2623, %v2647
    %v2649 = vmin.f32 %v2648, 1.0
    %v2650 = vmax.f32 %v2649, -1.0
    %v2651 = vadd.f32 %v2370, 1.0
    %v2652 = vadd.f32 %v2410, 1.0
    %v2653 = vadd.f32 %v2450, 1.0
    %v2654 = vadd.f32 %v2490, 1.0
    %v2655 = vadd.f32 %v2530, 1.0
    %v2656 = vadd.f32 %v2570, 1.0
    %v2657 = vadd.f32 %v2610, 1.0
    %v2658 = vadd.f32 %v2650, 1.0
    %v2659 = vmul.f32 %v2315, %v2651
    %v2660 = vmul.f32 %v2316, %v2652
    %v2661 = vmul.f32 %v2317, %v2653
    %v2662 = vmul.f32 %v2318, %v2654
    %v2663 = vmul.f32 %v2319, %v2655
    %v2664 = vmul.f32 %v2320, %v2656
    %v2665 = vmul.f32 %v2321, %v2657
    %v2666 = vmul.f32 %v2322, %v2658
    %v2667 = vpack.c.bf16 %v2660, %v2659
    %v2668 = vpack.c.bf16 %v2662, %v2661
    %v2669 = vpack.c.bf16 %v2664, %v2663
    %v2670 = vpack.c.bf16 %v2666, %v2665
    %v2672 = vsel %vm139, %v2667, 0
    %v2675 = vsel %vm139, %v2668, 0
    %v2678 = vsel %vm139, %v2669, 0
    %v2681 = vsel %vm139, %v2670, 0
    %2683 = vmatpush.bf16.msra.mxu0 0
    %2684 = vmatpush.bf16.msra.mxu0 0
    %2685 = vmatpush.bf16.msra.mxu0 0
    %2686 = vmatpush.bf16.msra.mxu0 0
    %2687 = vmatpush.bf16.msra.mxu0 %v1370
    %2688 = vmatpush.bf16.msra.mxu0 %v1369
    %2689 = vmatpush.bf16.msra.mxu0 %v1368
    %2690 = vmatpush.bf16.msra.mxu0 %v1367
    %2691 = vmatmul.bf16.gmra.mxu0 %v2672
    %v2692 = vpop.f32.mrf.mxu0
    %v2693 = vadd.f32 %v1349, %v2692
    %v2694 = vpop.f32.mrf.mxu0
    %v2695 = vadd.f32 %v1349, %v2694
    %2696 = vmatmul.bf16.gmra.mxu0 %v2675
    %v2697 = vpop.f32.mrf.mxu0
    %v2698 = vadd.f32 %v1349, %v2697
    %v2699 = vpop.f32.mrf.mxu0
    %v2700 = vadd.f32 %v1349, %v2699
    %2701 = vmatmul.bf16.gmra.mxu0 %v2678
    %v2702 = vpop.f32.mrf.mxu0
    %v2703 = vadd.f32 %v1349, %v2702
    %v2704 = vpop.f32.mrf.mxu0
    %v2705 = vadd.f32 %v1349, %v2704
    %2706 = vmatmul.bf16.gmra.mxu0 %v2681
    %v2707 = vpop.f32.mrf.mxu0
    %v2708 = vadd.f32 %v1349, %v2707
    %v2709 = vpop.f32.mrf.mxu0
    %v2710 = vadd.f32 %v1349, %v2709
    %2711 = vdwg.mxu0
    %v2712 = vmul.f32 %v2693, 1.442695
    %v2713 = vpow.pop %v2712
    %v2714 = vmul.f32 %v2695, 1.442695
    %v2715 = vpow.pop %v2714
    %v2716 = vmul.f32 %v2698, 1.442695
    %v2717 = vpow.pop %v2716
    %v2718 = vmul.f32 %v2700, 1.442695
    %v2719 = vpow.pop %v2718
    %v2720 = vmul.f32 %v2703, 1.442695
    %v2721 = vpow.pop %v2720
    %v2722 = vmul.f32 %v2705, 1.442695
    %v2723 = vpow.pop %v2722
    %v2724 = vmul.f32 %v2708, 1.442695
    %v2725 = vpow.pop %v2724
    %v2726 = vmul.f32 %v2710, 1.442695
    %v2727 = vpow.pop %v2726
    %v2728 = vsel %vm42, %v2713, %v2693
    %v2729 = vsel %vm42, %v2715, %v2695
    %v2730 = vsel %vm42, %v2717, %v2698
    %v2731 = vsel %vm42, %v2719, %v2700
    %v2732 = vsel %vm42, %v2721, %v2703
    %v2733 = vsel %vm42, %v2723, %v2705
    %v2734 = vsel %vm42, %v2725, %v2708
    %v2735 = vsel %vm42, %v2727, %v2710
    %s2736 = scalar_lea.vmem [#allocation2], 64
    %2737 = vst [vmem:[%s2736] sm:$0xff] %v2728
    %2738 = vst [vmem:[%s2736 + $0x8] sm:$0xff] %v2729
    %2739 = vst [vmem:[%s2736 + $0x10] sm:$0xff] %v2730
    %2740 = vst [vmem:[%s2736 + $0x18] sm:$0xff] %v2731
    %2741 = vst [vmem:[%s2736 + $0x20] sm:$0xff] %v2732
    %2742 = vst [vmem:[%s2736 + $0x28] sm:$0xff] %v2733
    %2743 = vst [vmem:[%s2736 + $0x30] sm:$0xff] %v2734
    %2744 = vst [vmem:[%s2736 + $0x38] sm:$0xff] %v2735
    %s2745 = scalar_lea.vmem %s0, 128
    %v2746 = vld [vmem:[%s2745] sm:$0xff]
    %v2747 = vld [vmem:[%s2745 + $0x8] sm:$0xff]
    %v2748 = vld [vmem:[%s2745 + $0x10] sm:$0xff]
    %v2749 = vld [vmem:[%s2745 + $0x18] sm:$0xff]
    %v2750 = vld [vmem:[%s2745 + $0x20] sm:$0xff]
    %v2751 = vld [vmem:[%s2745 + $0x28] sm:$0xff]
    %v2752 = vld [vmem:[%s2745 + $0x30] sm:$0xff]
    %v2753 = vld [vmem:[%s2745 + $0x38] sm:$0xff]
    %v2754 = vpack.c.bf16 %v2747, %v2746
    %v2755 = vpack.c.bf16 %v2749, %v2748
    %v2756 = vpack.c.bf16 %v2751, %v2750
    %v2757 = vpack.c.bf16 %v2753, %v2752
    %v2759 = vsel %vm97, %v2754, 0
    %v2762 = vsel %vm97, %v2755, 0
    %v2765 = vsel %vm97, %v2756, 0
    %v2768 = vsel %vm97, %v2757, 0
    %2770 = vmatpush.bf16.msra.mxu0 0
    %2771 = vmatpush.bf16.msra.mxu0 0
    %2772 = vmatpush.bf16.msra.mxu0 0
    %2773 = vmatpush.bf16.msra.mxu0 0
    %2774 = vmatpush.bf16.msra.mxu0 0
    %2775 = vmatpush.bf16.msra.mxu0 0
    %2776 = vmatpush.bf16.msra.mxu0 %v94
    %2777 = vmatpush.bf16.msra.mxu0 %v93
    %2778 = vmatmul.bf16.gmra.mxu0 %v2759
    %v2779 = vpop.f32.mrf.mxu0
    %v2780 = vadd.f32 %v83, %v2779
    %v2781 = vpop.f32.mrf.mxu0
    %v2782 = vadd.f32 %v83, %v2781
    %2783 = vmatmul.bf16.gmra.mxu0 %v2762
    %v2784 = vpop.f32.mrf.mxu0
    %v2785 = vadd.f32 %v83, %v2784
    %v2786 = vpop.f32.mrf.mxu0
    %v2787 = vadd.f32 %v83, %v2786
    %2788 = vmatmul.bf16.gmra.mxu0 %v2765
    %v2789 = vpop.f32.mrf.mxu0
    %v2790 = vadd.f32 %v83, %v2789
    %v2791 = vpop.f32.mrf.mxu0
    %v2792 = vadd.f32 %v83, %v2791
    %2793 = vmatmul.bf16.gmra.mxu0 %v2768
    %v2794 = vpop.f32.mrf.mxu0
    %v2795 = vadd.f32 %v83, %v2794
    %v2796 = vpop.f32.mrf.mxu0
    %v2797 = vadd.f32 %v83, %v2796
    %2798 = vdwg.mxu0
    %v2799 = vsel %vm139, %v2780, 0.0
    %2800 = vadd.xlane.f32.xlu0 %v2799
    %v2801 = vpop.xlane.xlu0 %2800
    %v2802 = vsel %vm139, %v2782, 0.0
    %2803 = vadd.xlane.f32.xlu0 %v2802
    %v2804 = vpop.xlane.xlu0 %2803
    %v2805 = vsel %vm139, %v2785, 0.0
    %2806 = vadd.xlane.f32.xlu0 %v2805
    %v2807 = vpop.xlane.xlu0 %2806
    %v2808 = vsel %vm139, %v2787, 0.0
    %2809 = vadd.xlane.f32.xlu0 %v2808
    %v2810 = vpop.xlane.xlu0 %2809
    %v2811 = vsel %vm139, %v2790, 0.0
    %2812 = vadd.xlane.f32.xlu0 %v2811
    %v2813 = vpop.xlane.xlu0 %2812
    %v2814 = vsel %vm139, %v2792, 0.0
    %2815 = vadd.xlane.f32.xlu0 %v2814
    %v2816 = vpop.xlane.xlu0 %2815
    %v2817 = vsel %vm139, %v2795, 0.0
    %2818 = vadd.xlane.f32.xlu0 %v2817
    %v2819 = vpop.xlane.xlu0 %2818
    %v2820 = vsel %vm139, %v2797, 0.0
    %2821 = vadd.xlane.f32.xlu0 %v2820
    %v2822 = vpop.xlane.xlu0 %2821
    %v2823 = vmul.f32 %v2780, %v2780
    %v2824 = vmul.f32 %v2782, %v2782
    %v2825 = vmul.f32 %v2785, %v2785
    %v2826 = vmul.f32 %v2787, %v2787
    %v2827 = vmul.f32 %v2790, %v2790
    %v2828 = vmul.f32 %v2792, %v2792
    %v2829 = vmul.f32 %v2795, %v2795
    %v2830 = vmul.f32 %v2797, %v2797
    %v2831 = vsel %vm139, %v2823, 0.0
    %2832 = vadd.xlane.f32.xlu0 %v2831
    %v2833 = vpop.xlane.xlu0 %2832
    %v2834 = vsel %vm139, %v2824, 0.0
    %2835 = vadd.xlane.f32.xlu0 %v2834
    %v2836 = vpop.xlane.xlu0 %2835
    %v2837 = vsel %vm139, %v2825, 0.0
    %2838 = vadd.xlane.f32.xlu0 %v2837
    %v2839 = vpop.xlane.xlu0 %2838
    %v2840 = vsel %vm139, %v2826, 0.0
    %2841 = vadd.xlane.f32.xlu0 %v2840
    %v2842 = vpop.xlane.xlu0 %2841
    %v2843 = vsel %vm139, %v2827, 0.0
    %2844 = vadd.xlane.f32.xlu0 %v2843
    %v2845 = vpop.xlane.xlu0 %2844
    %v2846 = vsel %vm139, %v2828, 0.0
    %2847 = vadd.xlane.f32.xlu0 %v2846
    %v2848 = vpop.xlane.xlu0 %2847
    %v2849 = vsel %vm139, %v2829, 0.0
    %2850 = vadd.xlane.f32.xlu0 %v2849
    %v2851 = vpop.xlane.xlu0 %2850
    %v2852 = vsel %vm139, %v2830, 0.0
    %2853 = vadd.xlane.f32.xlu0 %v2852
    %v2854 = vpop.xlane.xlu0 %2853
    %v2855 = vmul.f32 %v2801, 0.015625
    %v2856 = vmul.f32 %v2804, 0.015625
    %v2857 = vmul.f32 %v2807, 0.015625
    %v2858 = vmul.f32 %v2810, 0.015625
    %v2859 = vmul.f32 %v2813, 0.015625
    %v2860 = vmul.f32 %v2816, 0.015625
    %v2861 = vmul.f32 %v2819, 0.015625
    %v2862 = vmul.f32 %v2822, 0.015625
    %v2863 = vmul.f32 %v2833, 0.015625
    %v2864 = vmul.f32 %v2836, 0.015625
    %v2865 = vmul.f32 %v2839, 0.015625
    %v2866 = vmul.f32 %v2842, 0.015625
    %v2867 = vmul.f32 %v2845, 0.015625
    %v2868 = vmul.f32 %v2848, 0.015625
    %v2869 = vmul.f32 %v2851, 0.015625
    %v2870 = vmul.f32 %v2854, 0.015625
    %v2871 = vmul.f32 %v2855, %v2855
    %v2872 = vmul.f32 %v2856, %v2856
    %v2873 = vmul.f32 %v2857, %v2857
    %v2874 = vmul.f32 %v2858, %v2858
    %v2875 = vmul.f32 %v2859, %v2859
    %v2876 = vmul.f32 %v2860, %v2860
    %v2877 = vmul.f32 %v2861, %v2861
    %v2878 = vmul.f32 %v2862, %v2862
    %v2879 = vsub.f32 %v2863, %v2871
    %v2880 = vsub.f32 %v2864, %v2872
    %v2881 = vsub.f32 %v2865, %v2873
    %v2882 = vsub.f32 %v2866, %v2874
    %v2883 = vsub.f32 %v2867, %v2875
    %v2884 = vsub.f32 %v2868, %v2876
    %v2885 = vsub.f32 %v2869, %v2877
    %v2886 = vsub.f32 %v2870, %v2878
    %v2887 = vsub.f32 %v2780, %v2855
    %v2888 = vsub.f32 %v2782, %v2856
    %v2889 = vsub.f32 %v2785, %v2857
    %v2890 = vsub.f32 %v2787, %v2858
    %v2891 = vsub.f32 %v2790, %v2859
    %v2892 = vsub.f32 %v2792, %v2860
    %v2893 = vsub.f32 %v2795, %v2861
    %v2894 = vsub.f32 %v2797, %v2862
    %v2895 = vadd.f32 %v2879, 1e-05
    %v2896 = vadd.f32 %v2880, 1e-05
    %v2897 = vadd.f32 %v2881, 1e-05
    %v2898 = vadd.f32 %v2882, 1e-05
    %v2899 = vadd.f32 %v2883, 1e-05
    %v2900 = vadd.f32 %v2884, 1e-05
    %v2901 = vadd.f32 %v2885, 1e-05
    %v2902 = vadd.f32 %v2886, 1e-05
    %v2903 = vrsqrt.pop %v2895
    %v2904 = vmul.f32 %v2903, %v2895
    %v2905 = vmul.f32 %v2904, %v2903
    %v2906 = vmul.f32 0.5, %v2905
    %v2907 = vsub.f32 1.5, %v2906
    %v2908 = vmul.f32 %v2903, %v2907
    %vm2909 = vweird.f32 %v2895
    %vm2910 = vweird.f32 %v2903
    %vm2911 = vmor %vm2909, %vm2910
    %v2912 = vsel %vm2911, %v2903, %v2908
    %v2913 = vrsqrt.pop %v2896
    %v2914 = vmul.f32 %v2913, %v2896
    %v2915 = vmul.f32 %v2914, %v2913
    %v2916 = vmul.f32 0.5, %v2915
    %v2917 = vsub.f32 1.5, %v2916
    %v2918 = vmul.f32 %v2913, %v2917
    %vm2919 = vweird.f32 %v2896
    %vm2920 = vweird.f32 %v2913
    %vm2921 = vmor %vm2919, %vm2920
    %v2922 = vsel %vm2921, %v2913, %v2918
    %v2923 = vrsqrt.pop %v2897
    %v2924 = vmul.f32 %v2923, %v2897
    %v2925 = vmul.f32 %v2924, %v2923
    %v2926 = vmul.f32 0.5, %v2925
    %v2927 = vsub.f32 1.5, %v2926
    %v2928 = vmul.f32 %v2923, %v2927
    %vm2929 = vweird.f32 %v2897
    %vm2930 = vweird.f32 %v2923
    %vm2931 = vmor %vm2929, %vm2930
    %v2932 = vsel %vm2931, %v2923, %v2928
    %v2933 = vrsqrt.pop %v2898
    %v2934 = vmul.f32 %v2933, %v2898
    %v2935 = vmul.f32 %v2934, %v2933
    %v2936 = vmul.f32 0.5, %v2935
    %v2937 = vsub.f32 1.5, %v2936
    %v2938 = vmul.f32 %v2933, %v2937
    %vm2939 = vweird.f32 %v2898
    %vm2940 = vweird.f32 %v2933
    %vm2941 = vmor %vm2939, %vm2940
    %v2942 = vsel %vm2941, %v2933, %v2938
    %v2943 = vrsqrt.pop %v2899
    %v2944 = vmul.f32 %v2943, %v2899
    %v2945 = vmul.f32 %v2944, %v2943
    %v2946 = vmul.f32 0.5, %v2945
    %v2947 = vsub.f32 1.5, %v2946
    %v2948 = vmul.f32 %v2943, %v2947
    %vm2949 = vweird.f32 %v2899
    %vm2950 = vweird.f32 %v2943
    %vm2951 = vmor %vm2949, %vm2950
    %v2952 = vsel %vm2951, %v2943, %v2948
    %v2953 = vrsqrt.pop %v2900
    %v2954 = vmul.f32 %v2953, %v2900
    %v2955 = vmul.f32 %v2954, %v2953
    %v2956 = vmul.f32 0.5, %v2955
    %v2957 = vsub.f32 1.5, %v2956
    %v2958 = vmul.f32 %v2953, %v2957
    %vm2959 = vweird.f32 %v2900
    %vm2960 = vweird.f32 %v2953
    %vm2961 = vmor %vm2959, %vm2960
    %v2962 = vsel %vm2961, %v2953, %v2958
    %v2963 = vrsqrt.pop %v2901
    %v2964 = vmul.f32 %v2963, %v2901
    %v2965 = vmul.f32 %v2964, %v2963
    %v2966 = vmul.f32 0.5, %v2965
    %v2967 = vsub.f32 1.5, %v2966
    %v2968 = vmul.f32 %v2963, %v2967
    %vm2969 = vweird.f32 %v2901
    %vm2970 = vweird.f32 %v2963
    %vm2971 = vmor %vm2969, %vm2970
    %v2972 = vsel %vm2971, %v2963, %v2968
    %v2973 = vrsqrt.pop %v2902
    %v2974 = vmul.f32 %v2973, %v2902
    %v2975 = vmul.f32 %v2974, %v2973
    %v2976 = vmul.f32 0.5, %v2975
    %v2977 = vsub.f32 1.5, %v2976
    %v2978 = vmul.f32 %v2973, %v2977
    %vm2979 = vweird.f32 %v2902
    %vm2980 = vweird.f32 %v2973
    %vm2981 = vmor %vm2979, %vm2980
    %v2982 = vsel %vm2981, %v2973, %v2978
    %v2983 = vmul.f32 %v2887, %v2912
    %v2984 = vmul.f32 %v2888, %v2922
    %v2985 = vmul.f32 %v2889, %v2932
    %v2986 = vmul.f32 %v2890, %v2942
    %v2987 = vmul.f32 %v2891, %v2952
    %v2988 = vmul.f32 %v2892, %v2962
    %v2989 = vmul.f32 %v2893, %v2972
    %v2990 = vmul.f32 %v2894, %v2982
    %v2991 = vmul.f32 %v2983, %v333
    %v2992 = vmul.f32 %v2984, %v333
    %v2993 = vmul.f32 %v2985, %v333
    %v2994 = vmul.f32 %v2986, %v333
    %v2995 = vmul.f32 %v2987, %v333
    %v2996 = vmul.f32 %v2988, %v333
    %v2997 = vmul.f32 %v2989, %v333
    %v2998 = vmul.f32 %v2990, %v333
    %v2999 = vadd.f32 %v2991, %v344
    %v3000 = vadd.f32 %v2992, %v344
    %v3001 = vadd.f32 %v2993, %v344
    %v3002 = vadd.f32 %v2994, %v344
    %v3003 = vadd.f32 %v2995, %v344
    %v3004 = vadd.f32 %v2996, %v344
    %v3005 = vadd.f32 %v2997, %v344
    %v3006 = vadd.f32 %v2998, %v344
    %v3007 = vmul.f32 %v2999, 0.5
    %v3008 = vmul.f32 %v3000, 0.5
    %v3009 = vmul.f32 %v3001, 0.5
    %v3010 = vmul.f32 %v3002, 0.5
    %v3011 = vmul.f32 %v3003, 0.5
    %v3012 = vmul.f32 %v3004, 0.5
    %v3013 = vmul.f32 %v3005, 0.5
    %v3014 = vmul.f32 %v3006, 0.5
    %v3015 = vmul.f32 %v2999, 0.70710677
    %v3016 = vmul.f32 %v3000, 0.70710677
    %v3017 = vmul.f32 %v3001, 0.70710677
    %v3018 = vmul.f32 %v3002, 0.70710677
    %v3019 = vmul.f32 %v3003, 0.70710677
    %v3020 = vmul.f32 %v3004, 0.70710677
    %v3021 = vmul.f32 %v3005, 0.70710677
    %v3022 = vmul.f32 %v3006, 0.70710677
    %v3023 = vmul.f32 %v3015, %v3015
    %v3024 = vmin.f32 16.0, %v3023
    %v3025 = vmul.f32 %v3024, 2.1237322e-06
    %v3026 = vadd.f32 %v3025, 0.00028619796
    %v3027 = vmul.f32 %v3024, %v3026
    %v3028 = vadd.f32 %v3027, 0.0036580483
    %v3029 = vmul.f32 %v3024, %v3028
    %v3030 = vadd.f32 %v3029, 0.05243302
    %v3031 = vmul.f32 %v3024, %v3030
    %v3032 = vadd.f32 %v3031, 0.18741608
    %v3033 = vmul.f32 %v3024, %v3032
    %v3034 = vadd.f32 %v3033, 1.1283791
    %v3035 = vmul.f32 %v3015, %v3034
    %v3036 = vmul.f32 %v3024, 3.8918573e-05
    %v3037 = vadd.f32 %v3036, 0.001143296
    %v3038 = vmul.f32 %v3024, %v3037
    %v3039 = vadd.f32 %v3038, 0.014752088
    %v3040 = vmul.f32 %v3024, %v3039
    %v3041 = vadd.f32 %v3040, 0.112945676
    %v3042 = vmul.f32 %v3024, %v3041
    %v3043 = vadd.f32 %v3042, 0.4994258
    %v3044 = vmul.f32 %v3024, %v3043
    %v3045 = vadd.f32 %v3044, 1.0
    %v3046 = vrcp.pop %v3045
    %v3047 = vmul.f32 %v3045, %v3046
    %v3048 = vsub.f32 1.0, %v3047
    %v3049 = vmul.f32 %v3046, %v3048
    %v3050 = vadd.f32 %v3046, %v3049
    %vm3051 = vweird.f32 %v3045
    %vm3052 = vweird.f32 %v3046
    %vm3053 = vmor %vm3051, %vm3052
    %v3054 = vsel %vm3053, %v3046, %v3050
    %v3055 = vand.u32 2147483647, %v3045
    %vm3056 = vcmp.eq.f32.partialorder %v3055, 8.507059e+37
    %v3057 = vand.u32 %v3045, 2147483648
    %v3058 = vor.u32 1.1754944e-38, %v3057
    %v3059 = vsel %vm3056, %v3058, %v3054
    %v3060 = vmul.f32 %v3035, %v3059
    %v3061 = vmin.f32 %v3060, 1.0
    %v3062 = vmax.f32 %v3061, -1.0
    %v3063 = vmul.f32 %v3016, %v3016
    %v3064 = vmin.f32 16.0, %v3063
    %v3065 = vmul.f32 %v3064, 2.1237322e-06
    %v3066 = vadd.f32 %v3065, 0.00028619796
    %v3067 = vmul.f32 %v3064, %v3066
    %v3068 = vadd.f32 %v3067, 0.0036580483
    %v3069 = vmul.f32 %v3064, %v3068
    %v3070 = vadd.f32 %v3069, 0.05243302
    %v3071 = vmul.f32 %v3064, %v3070
    %v3072 = vadd.f32 %v3071, 0.18741608
    %v3073 = vmul.f32 %v3064, %v3072
    %v3074 = vadd.f32 %v3073, 1.1283791
    %v3075 = vmul.f32 %v3016, %v3074
    %v3076 = vmul.f32 %v3064, 3.8918573e-05
    %v3077 = vadd.f32 %v3076, 0.001143296
    %v3078 = vmul.f32 %v3064, %v3077
    %v3079 = vadd.f32 %v3078, 0.014752088
    %v3080 = vmul.f32 %v3064, %v3079
    %v3081 = vadd.f32 %v3080, 0.112945676
    %v3082 = vmul.f32 %v3064, %v3081
    %v3083 = vadd.f32 %v3082, 0.4994258
    %v3084 = vmul.f32 %v3064, %v3083
    %v3085 = vadd.f32 %v3084, 1.0
    %v3086 = vrcp.pop %v3085
    %v3087 = vmul.f32 %v3085, %v3086
    %v3088 = vsub.f32 1.0, %v3087
    %v3089 = vmul.f32 %v3086, %v3088
    %v3090 = vadd.f32 %v3086, %v3089
    %vm3091 = vweird.f32 %v3085
    %vm3092 = vweird.f32 %v3086
    %vm3093 = vmor %vm3091, %vm3092
    %v3094 = vsel %vm3093, %v3086, %v3090
    %v3095 = vand.u32 2147483647, %v3085
    %vm3096 = vcmp.eq.f32.partialorder %v3095, 8.507059e+37
    %v3097 = vand.u32 %v3085, 2147483648
    %v3098 = vor.u32 1.1754944e-38, %v3097
    %v3099 = vsel %vm3096, %v3098, %v3094
    %v3100 = vmul.f32 %v3075, %v3099
    %v3101 = vmin.f32 %v3100, 1.0
    %v3102 = vmax.f32 %v3101, -1.0
    %v3103 = vmul.f32 %v3017, %v3017
    %v3104 = vmin.f32 16.0, %v3103
    %v3105 = vmul.f32 %v3104, 2.1237322e-06
    %v3106 = vadd.f32 %v3105, 0.00028619796
    %v3107 = vmul.f32 %v3104, %v3106
    %v3108 = vadd.f32 %v3107, 0.0036580483
    %v3109 = vmul.f32 %v3104, %v3108
    %v3110 = vadd.f32 %v3109, 0.05243302
    %v3111 = vmul.f32 %v3104, %v3110
    %v3112 = vadd.f32 %v3111, 0.18741608
    %v3113 = vmul.f32 %v3104, %v3112
    %v3114 = vadd.f32 %v3113, 1.1283791
    %v3115 = vmul.f32 %v3017, %v3114
    %v3116 = vmul.f32 %v3104, 3.8918573e-05
    %v3117 = vadd.f32 %v3116, 0.001143296
    %v3118 = vmul.f32 %v3104, %v3117
    %v3119 = vadd.f32 %v3118, 0.014752088
    %v3120 = vmul.f32 %v3104, %v3119
    %v3121 = vadd.f32 %v3120, 0.112945676
    %v3122 = vmul.f32 %v3104, %v3121
    %v3123 = vadd.f32 %v3122, 0.4994258
    %v3124 = vmul.f32 %v3104, %v3123
    %v3125 = vadd.f32 %v3124, 1.0
    %v3126 = vrcp.pop %v3125
    %v3127 = vmul.f32 %v3125, %v3126
    %v3128 = vsub.f32 1.0, %v3127
    %v3129 = vmul.f32 %v3126, %v3128
    %v3130 = vadd.f32 %v3126, %v3129
    %vm3131 = vweird.f32 %v3125
    %vm3132 = vweird.f32 %v3126
    %vm3133 = vmor %vm3131, %vm3132
    %v3134 = vsel %vm3133, %v3126, %v3130
    %v3135 = vand.u32 2147483647, %v3125
    %vm3136 = vcmp.eq.f32.partialorder %v3135, 8.507059e+37
    %v3137 = vand.u32 %v3125, 2147483648
    %v3138 = vor.u32 1.1754944e-38, %v3137
    %v3139 = vsel %vm3136, %v3138, %v3134
    %v3140 = vmul.f32 %v3115, %v3139
    %v3141 = vmin.f32 %v3140, 1.0
    %v3142 = vmax.f32 %v3141, -1.0
    %v3143 = vmul.f32 %v3018, %v3018
    %v3144 = vmin.f32 16.0, %v3143
    %v3145 = vmul.f32 %v3144, 2.1237322e-06
    %v3146 = vadd.f32 %v3145, 0.00028619796
    %v3147 = vmul.f32 %v3144, %v3146
    %v3148 = vadd.f32 %v3147, 0.0036580483
    %v3149 = vmul.f32 %v3144, %v3148
    %v3150 = vadd.f32 %v3149, 0.05243302
    %v3151 = vmul.f32 %v3144, %v3150
    %v3152 = vadd.f32 %v3151, 0.18741608
    %v3153 = vmul.f32 %v3144, %v3152
    %v3154 = vadd.f32 %v3153, 1.1283791
    %v3155 = vmul.f32 %v3018, %v3154
    %v3156 = vmul.f32 %v3144, 3.8918573e-05
    %v3157 = vadd.f32 %v3156, 0.001143296
    %v3158 = vmul.f32 %v3144, %v3157
    %v3159 = vadd.f32 %v3158, 0.014752088
    %v3160 = vmul.f32 %v3144, %v3159
    %v3161 = vadd.f32 %v3160, 0.112945676
    %v3162 = vmul.f32 %v3144, %v3161
    %v3163 = vadd.f32 %v3162, 0.4994258
    %v3164 = vmul.f32 %v3144, %v3163
    %v3165 = vadd.f32 %v3164, 1.0
    %v3166 = vrcp.pop %v3165
    %v3167 = vmul.f32 %v3165, %v3166
    %v3168 = vsub.f32 1.0, %v3167
    %v3169 = vmul.f32 %v3166, %v3168
    %v3170 = vadd.f32 %v3166, %v3169
    %vm3171 = vweird.f32 %v3165
    %vm3172 = vweird.f32 %v3166
    %vm3173 = vmor %vm3171, %vm3172
    %v3174 = vsel %vm3173, %v3166, %v3170
    %v3175 = vand.u32 2147483647, %v3165
    %vm3176 = vcmp.eq.f32.partialorder %v3175, 8.507059e+37
    %v3177 = vand.u32 %v3165, 2147483648
    %v3178 = vor.u32 1.1754944e-38, %v3177
    %v3179 = vsel %vm3176, %v3178, %v3174
    %v3180 = vmul.f32 %v3155, %v3179
    %v3181 = vmin.f32 %v3180, 1.0
    %v3182 = vmax.f32 %v3181, -1.0
    %v3183 = vmul.f32 %v3019, %v3019
    %v3184 = vmin.f32 16.0, %v3183
    %v3185 = vmul.f32 %v3184, 2.1237322e-06
    %v3186 = vadd.f32 %v3185, 0.00028619796
    %v3187 = vmul.f32 %v3184, %v3186
    %v3188 = vadd.f32 %v3187, 0.0036580483
    %v3189 = vmul.f32 %v3184, %v3188
    %v3190 = vadd.f32 %v3189, 0.05243302
    %v3191 = vmul.f32 %v3184, %v3190
    %v3192 = vadd.f32 %v3191, 0.18741608
    %v3193 = vmul.f32 %v3184, %v3192
    %v3194 = vadd.f32 %v3193, 1.1283791
    %v3195 = vmul.f32 %v3019, %v3194
    %v3196 = vmul.f32 %v3184, 3.8918573e-05
    %v3197 = vadd.f32 %v3196, 0.001143296
    %v3198 = vmul.f32 %v3184, %v3197
    %v3199 = vadd.f32 %v3198, 0.014752088
    %v3200 = vmul.f32 %v3184, %v3199
    %v3201 = vadd.f32 %v3200, 0.112945676
    %v3202 = vmul.f32 %v3184, %v3201
    %v3203 = vadd.f32 %v3202, 0.4994258
    %v3204 = vmul.f32 %v3184, %v3203
    %v3205 = vadd.f32 %v3204, 1.0
    %v3206 = vrcp.pop %v3205
    %v3207 = vmul.f32 %v3205, %v3206
    %v3208 = vsub.f32 1.0, %v3207
    %v3209 = vmul.f32 %v3206, %v3208
    %v3210 = vadd.f32 %v3206, %v3209
    %vm3211 = vweird.f32 %v3205
    %vm3212 = vweird.f32 %v3206
    %vm3213 = vmor %vm3211, %vm3212
    %v3214 = vsel %vm3213, %v3206, %v3210
    %v3215 = vand.u32 2147483647, %v3205
    %vm3216 = vcmp.eq.f32.partialorder %v3215, 8.507059e+37
    %v3217 = vand.u32 %v3205, 2147483648
    %v3218 = vor.u32 1.1754944e-38, %v3217
    %v3219 = vsel %vm3216, %v3218, %v3214
    %v3220 = vmul.f32 %v3195, %v3219
    %v3221 = vmin.f32 %v3220, 1.0
    %v3222 = vmax.f32 %v3221, -1.0
    %v3223 = vmul.f32 %v3020, %v3020
    %v3224 = vmin.f32 16.0, %v3223
    %v3225 = vmul.f32 %v3224, 2.1237322e-06
    %v3226 = vadd.f32 %v3225, 0.00028619796
    %v3227 = vmul.f32 %v3224, %v3226
    %v3228 = vadd.f32 %v3227, 0.0036580483
    %v3229 = vmul.f32 %v3224, %v3228
    %v3230 = vadd.f32 %v3229, 0.05243302
    %v3231 = vmul.f32 %v3224, %v3230
    %v3232 = vadd.f32 %v3231, 0.18741608
    %v3233 = vmul.f32 %v3224, %v3232
    %v3234 = vadd.f32 %v3233, 1.1283791
    %v3235 = vmul.f32 %v3020, %v3234
    %v3236 = vmul.f32 %v3224, 3.8918573e-05
    %v3237 = vadd.f32 %v3236, 0.001143296
    %v3238 = vmul.f32 %v3224, %v3237
    %v3239 = vadd.f32 %v3238, 0.014752088
    %v3240 = vmul.f32 %v3224, %v3239
    %v3241 = vadd.f32 %v3240, 0.112945676
    %v3242 = vmul.f32 %v3224, %v3241
    %v3243 = vadd.f32 %v3242, 0.4994258
    %v3244 = vmul.f32 %v3224, %v3243
    %v3245 = vadd.f32 %v3244, 1.0
    %v3246 = vrcp.pop %v3245
    %v3247 = vmul.f32 %v3245, %v3246
    %v3248 = vsub.f32 1.0, %v3247
    %v3249 = vmul.f32 %v3246, %v3248
    %v3250 = vadd.f32 %v3246, %v3249
    %vm3251 = vweird.f32 %v3245
    %vm3252 = vweird.f32 %v3246
    %vm3253 = vmor %vm3251, %vm3252
    %v3254 = vsel %vm3253, %v3246, %v3250
    %v3255 = vand.u32 2147483647, %v3245
    %vm3256 = vcmp.eq.f32.partialorder %v3255, 8.507059e+37
    %v3257 = vand.u32 %v3245, 2147483648
    %v3258 = vor.u32 1.1754944e-38, %v3257
    %v3259 = vsel %vm3256, %v3258, %v3254
    %v3260 = vmul.f32 %v3235, %v3259
    %v3261 = vmin.f32 %v3260, 1.0
    %v3262 = vmax.f32 %v3261, -1.0
    %v3263 = vmul.f32 %v3021, %v3021
    %v3264 = vmin.f32 16.0, %v3263
    %v3265 = vmul.f32 %v3264, 2.1237322e-06
    %v3266 = vadd.f32 %v3265, 0.00028619796
    %v3267 = vmul.f32 %v3264, %v3266
    %v3268 = vadd.f32 %v3267, 0.0036580483
    %v3269 = vmul.f32 %v3264, %v3268
    %v3270 = vadd.f32 %v3269, 0.05243302
    %v3271 = vmul.f32 %v3264, %v3270
    %v3272 = vadd.f32 %v3271, 0.18741608
    %v3273 = vmul.f32 %v3264, %v3272
    %v3274 = vadd.f32 %v3273, 1.1283791
    %v3275 = vmul.f32 %v3021, %v3274
    %v3276 = vmul.f32 %v3264, 3.8918573e-05
    %v3277 = vadd.f32 %v3276, 0.001143296
    %v3278 = vmul.f32 %v3264, %v3277
    %v3279 = vadd.f32 %v3278, 0.014752088
    %v3280 = vmul.f32 %v3264, %v3279
    %v3281 = vadd.f32 %v3280, 0.112945676
    %v3282 = vmul.f32 %v3264, %v3281
    %v3283 = vadd.f32 %v3282, 0.4994258
    %v3284 = vmul.f32 %v3264, %v3283
    %v3285 = vadd.f32 %v3284, 1.0
    %v3286 = vrcp.pop %v3285
    %v3287 = vmul.f32 %v3285, %v3286
    %v3288 = vsub.f32 1.0, %v3287
    %v3289 = vmul.f32 %v3286, %v3288
    %v3290 = vadd.f32 %v3286, %v3289
    %vm3291 = vweird.f32 %v3285
    %vm3292 = vweird.f32 %v3286
    %vm3293 = vmor %vm3291, %vm3292
    %v3294 = vsel %vm3293, %v3286, %v3290
    %v3295 = vand.u32 2147483647, %v3285
    %vm3296 = vcmp.eq.f32.partialorder %v3295, 8.507059e+37
    %v3297 = vand.u32 %v3285, 2147483648
    %v3298 = vor.u32 1.1754944e-38, %v3297
    %v3299 = vsel %vm3296, %v3298, %v3294
    %v3300 = vmul.f32 %v3275, %v3299
    %v3301 = vmin.f32 %v3300, 1.0
    %v3302 = vmax.f32 %v3301, -1.0
    %v3303 = vmul.f32 %v3022, %v3022
    %v3304 = vmin.f32 16.0, %v3303
    %v3305 = vmul.f32 %v3304, 2.1237322e-06
    %v3306 = vadd.f32 %v3305, 0.00028619796
    %v3307 = vmul.f32 %v3304, %v3306
    %v3308 = vadd.f32 %v3307, 0.0036580483
    %v3309 = vmul.f32 %v3304, %v3308
    %v3310 = vadd.f32 %v3309, 0.05243302
    %v3311 = vmul.f32 %v3304, %v3310
    %v3312 = vadd.f32 %v3311, 0.18741608
    %v3313 = vmul.f32 %v3304, %v3312
    %v3314 = vadd.f32 %v3313, 1.1283791
    %v3315 = vmul.f32 %v3022, %v3314
    %v3316 = vmul.f32 %v3304, 3.8918573e-05
    %v3317 = vadd.f32 %v3316, 0.001143296
    %v3318 = vmul.f32 %v3304, %v3317
    %v3319 = vadd.f32 %v3318, 0.014752088
    %v3320 = vmul.f32 %v3304, %v3319
    %v3321 = vadd.f32 %v3320, 0.112945676
    %v3322 = vmul.f32 %v3304, %v3321
    %v3323 = vadd.f32 %v3322, 0.4994258
    %v3324 = vmul.f32 %v3304, %v3323
    %v3325 = vadd.f32 %v3324, 1.0
    %v3326 = vrcp.pop %v3325
    %v3327 = vmul.f32 %v3325, %v3326
    %v3328 = vsub.f32 1.0, %v3327
    %v3329 = vmul.f32 %v3326, %v3328
    %v3330 = vadd.f32 %v3326, %v3329
    %vm3331 = vweird.f32 %v3325
    %vm3332 = vweird.f32 %v3326
    %vm3333 = vmor %vm3331, %vm3332
    %v3334 = vsel %vm3333, %v3326, %v3330
    %v3335 = vand.u32 2147483647, %v3325
    %vm3336 = vcmp.eq.f32.partialorder %v3335, 8.507059e+37
    %v3337 = vand.u32 %v3325, 2147483648
    %v3338 = vor.u32 1.1754944e-38, %v3337
    %v3339 = vsel %vm3336, %v3338, %v3334
    %v3340 = vmul.f32 %v3315, %v3339
    %v3341 = vmin.f32 %v3340, 1.0
    %v3342 = vmax.f32 %v3341, -1.0
    %v3343 = vadd.f32 %v3062, 1.0
    %v3344 = vadd.f32 %v3102, 1.0
    %v3345 = vadd.f32 %v3142, 1.0
    %v3346 = vadd.f32 %v3182, 1.0
    %v3347 = vadd.f32 %v3222, 1.0
    %v3348 = vadd.f32 %v3262, 1.0
    %v3349 = vadd.f32 %v3302, 1.0
    %v3350 = vadd.f32 %v3342, 1.0
    %v3351 = vmul.f32 %v3007, %v3343
    %v3352 = vmul.f32 %v3008, %v3344
    %v3353 = vmul.f32 %v3009, %v3345
    %v3354 = vmul.f32 %v3010, %v3346
    %v3355 = vmul.f32 %v3011, %v3347
    %v3356 = vmul.f32 %v3012, %v3348
    %v3357 = vmul.f32 %v3013, %v3349
    %v3358 = vmul.f32 %v3014, %v3350
    %v3359 = vpack.c.bf16 %v3352, %v3351
    %v3360 = vpack.c.bf16 %v3354, %v3353
    %v3361 = vpack.c.bf16 %v3356, %v3355
    %v3362 = vpack.c.bf16 %v3358, %v3357
    %v3364 = vsel %vm139, %v3359, 0
    %v3367 = vsel %vm139, %v3360, 0
    %v3370 = vsel %vm139, %v3361, 0
    %v3373 = vsel %vm139, %v3362, 0
    %3375 = vmatpush.bf16.msra.mxu0 0
    %3376 = vmatpush.bf16.msra.mxu0 0
    %3377 = vmatpush.bf16.msra.mxu0 0
    %3378 = vmatpush.bf16.msra.mxu0 0
    %3379 = vmatpush.bf16.msra.mxu0 %v732
    %3380 = vmatpush.bf16.msra.mxu0 %v731
    %3381 = vmatpush.bf16.msra.mxu0 %v730
    %3382 = vmatpush.bf16.msra.mxu0 %v729
    %3383 = vmatmul.bf16.gmra.mxu0 %v3364
    %v3384 = vpop.f32.mrf.mxu0
    %v3385 = vadd.f32 %v711, %v3384
    %v3386 = vpop.f32.mrf.mxu0
    %v3387 = vadd.f32 %v711, %v3386
    %3388 = vmatmul.bf16.gmra.mxu0 %v3367
    %v3389 = vpop.f32.mrf.mxu0
    %v3390 = vadd.f32 %v711, %v3389
    %v3391 = vpop.f32.mrf.mxu0
    %v3392 = vadd.f32 %v711, %v3391
    %3393 = vmatmul.bf16.gmra.mxu0 %v3370
    %v3394 = vpop.f32.mrf.mxu0
    %v3395 = vadd.f32 %v711, %v3394
    %v3396 = vpop.f32.mrf.mxu0
    %v3397 = vadd.f32 %v711, %v3396
    %3398 = vmatmul.bf16.gmra.mxu0 %v3373
    %v3399 = vpop.f32.mrf.mxu0
    %v3400 = vadd.f32 %v711, %v3399
    %v3401 = vpop.f32.mrf.mxu0
    %v3402 = vadd.f32 %v711, %v3401
    %3403 = vdwg.mxu0
    %v3404 = vsel %vm139, %v3385, 0.0
    %3405 = vadd.xlane.f32.xlu0 %v3404
    %v3406 = vpop.xlane.xlu0 %3405
    %v3407 = vsel %vm139, %v3387, 0.0
    %3408 = vadd.xlane.f32.xlu0 %v3407
    %v3409 = vpop.xlane.xlu0 %3408
    %v3410 = vsel %vm139, %v3390, 0.0
    %3411 = vadd.xlane.f32.xlu0 %v3410
    %v3412 = vpop.xlane.xlu0 %3411
    %v3413 = vsel %vm139, %v3392, 0.0
    %3414 = vadd.xlane.f32.xlu0 %v3413
    %v3415 = vpop.xlane.xlu0 %3414
    %v3416 = vsel %vm139, %v3395, 0.0
    %3417 = vadd.xlane.f32.xlu0 %v3416
    %v3418 = vpop.xlane.xlu0 %3417
    %v3419 = vsel %vm139, %v3397, 0.0
    %3420 = vadd.xlane.f32.xlu0 %v3419
    %v3421 = vpop.xlane.xlu0 %3420
    %v3422 = vsel %vm139, %v3400, 0.0
    %3423 = vadd.xlane.f32.xlu0 %v3422
    %v3424 = vpop.xlane.xlu0 %3423
    %v3425 = vsel %vm139, %v3402, 0.0
    %3426 = vadd.xlane.f32.xlu0 %v3425
    %v3427 = vpop.xlane.xlu0 %3426
    %v3428 = vmul.f32 %v3385, %v3385
    %v3429 = vmul.f32 %v3387, %v3387
    %v3430 = vmul.f32 %v3390, %v3390
    %v3431 = vmul.f32 %v3392, %v3392
    %v3432 = vmul.f32 %v3395, %v3395
    %v3433 = vmul.f32 %v3397, %v3397
    %v3434 = vmul.f32 %v3400, %v3400
    %v3435 = vmul.f32 %v3402, %v3402
    %v3436 = vsel %vm139, %v3428, 0.0
    %3437 = vadd.xlane.f32.xlu0 %v3436
    %v3438 = vpop.xlane.xlu0 %3437
    %v3439 = vsel %vm139, %v3429, 0.0
    %3440 = vadd.xlane.f32.xlu0 %v3439
    %v3441 = vpop.xlane.xlu0 %3440
    %v3442 = vsel %vm139, %v3430, 0.0
    %3443 = vadd.xlane.f32.xlu0 %v3442
    %v3444 = vpop.xlane.xlu0 %3443
    %v3445 = vsel %vm139, %v3431, 0.0
    %3446 = vadd.xlane.f32.xlu0 %v3445
    %v3447 = vpop.xlane.xlu0 %3446
    %v3448 = vsel %vm139, %v3432, 0.0
    %3449 = vadd.xlane.f32.xlu0 %v3448
    %v3450 = vpop.xlane.xlu0 %3449
    %v3451 = vsel %vm139, %v3433, 0.0
    %3452 = vadd.xlane.f32.xlu0 %v3451
    %v3453 = vpop.xlane.xlu0 %3452
    %v3454 = vsel %vm139, %v3434, 0.0
    %3455 = vadd.xlane.f32.xlu0 %v3454
    %v3456 = vpop.xlane.xlu0 %3455
    %v3457 = vsel %vm139, %v3435, 0.0
    %3458 = vadd.xlane.f32.xlu0 %v3457
    %v3459 = vpop.xlane.xlu0 %3458
    %v3460 = vmul.f32 %v3406, 0.015625
    %v3461 = vmul.f32 %v3409, 0.015625
    %v3462 = vmul.f32 %v3412, 0.015625
    %v3463 = vmul.f32 %v3415, 0.015625
    %v3464 = vmul.f32 %v3418, 0.015625
    %v3465 = vmul.f32 %v3421, 0.015625
    %v3466 = vmul.f32 %v3424, 0.015625
    %v3467 = vmul.f32 %v3427, 0.015625
    %v3468 = vmul.f32 %v3438, 0.015625
    %v3469 = vmul.f32 %v3441, 0.015625
    %v3470 = vmul.f32 %v3444, 0.015625
    %v3471 = vmul.f32 %v3447, 0.015625
    %v3472 = vmul.f32 %v3450, 0.015625
    %v3473 = vmul.f32 %v3453, 0.015625
    %v3474 = vmul.f32 %v3456, 0.015625
    %v3475 = vmul.f32 %v3459, 0.015625
    %v3476 = vmul.f32 %v3460, %v3460
    %v3477 = vmul.f32 %v3461, %v3461
    %v3478 = vmul.f32 %v3462, %v3462
    %v3479 = vmul.f32 %v3463, %v3463
    %v3480 = vmul.f32 %v3464, %v3464
    %v3481 = vmul.f32 %v3465, %v3465
    %v3482 = vmul.f32 %v3466, %v3466
    %v3483 = vmul.f32 %v3467, %v3467
    %v3484 = vsub.f32 %v3468, %v3476
    %v3485 = vsub.f32 %v3469, %v3477
    %v3486 = vsub.f32 %v3470, %v3478
    %v3487 = vsub.f32 %v3471, %v3479
    %v3488 = vsub.f32 %v3472, %v3480
    %v3489 = vsub.f32 %v3473, %v3481
    %v3490 = vsub.f32 %v3474, %v3482
    %v3491 = vsub.f32 %v3475, %v3483
    %v3492 = vsub.f32 %v3385, %v3460
    %v3493 = vsub.f32 %v3387, %v3461
    %v3494 = vsub.f32 %v3390, %v3462
    %v3495 = vsub.f32 %v3392, %v3463
    %v3496 = vsub.f32 %v3395, %v3464
    %v3497 = vsub.f32 %v3397, %v3465
    %v3498 = vsub.f32 %v3400, %v3466
    %v3499 = vsub.f32 %v3402, %v3467
    %v3500 = vadd.f32 %v3484, 1e-05
    %v3501 = vadd.f32 %v3485, 1e-05
    %v3502 = vadd.f32 %v3486, 1e-05
    %v3503 = vadd.f32 %v3487, 1e-05
    %v3504 = vadd.f32 %v3488, 1e-05
    %v3505 = vadd.f32 %v3489, 1e-05
    %v3506 = vadd.f32 %v3490, 1e-05
    %v3507 = vadd.f32 %v3491, 1e-05
    %v3508 = vrsqrt.pop %v3500
    %v3509 = vmul.f32 %v3508, %v3500
    %v3510 = vmul.f32 %v3509, %v3508
    %v3511 = vmul.f32 0.5, %v3510
    %v3512 = vsub.f32 1.5, %v3511
    %v3513 = vmul.f32 %v3508, %v3512
    %vm3514 = vweird.f32 %v3500
    %vm3515 = vweird.f32 %v3508
    %vm3516 = vmor %vm3514, %vm3515
    %v3517 = vsel %vm3516, %v3508, %v3513
    %v3518 = vrsqrt.pop %v3501
    %v3519 = vmul.f32 %v3518, %v3501
    %v3520 = vmul.f32 %v3519, %v3518
    %v3521 = vmul.f32 0.5, %v3520
    %v3522 = vsub.f32 1.5, %v3521
    %v3523 = vmul.f32 %v3518, %v3522
    %vm3524 = vweird.f32 %v3501
    %vm3525 = vweird.f32 %v3518
    %vm3526 = vmor %vm3524, %vm3525
    %v3527 = vsel %vm3526, %v3518, %v3523
    %v3528 = vrsqrt.pop %v3502
    %v3529 = vmul.f32 %v3528, %v3502
    %v3530 = vmul.f32 %v3529, %v3528
    %v3531 = vmul.f32 0.5, %v3530
    %v3532 = vsub.f32 1.5, %v3531
    %v3533 = vmul.f32 %v3528, %v3532
    %vm3534 = vweird.f32 %v3502
    %vm3535 = vweird.f32 %v3528
    %vm3536 = vmor %vm3534, %vm3535
    %v3537 = vsel %vm3536, %v3528, %v3533
    %v3538 = vrsqrt.pop %v3503
    %v3539 = vmul.f32 %v3538, %v3503
    %v3540 = vmul.f32 %v3539, %v3538
    %v3541 = vmul.f32 0.5, %v3540
    %v3542 = vsub.f32 1.5, %v3541
    %v3543 = vmul.f32 %v3538, %v3542
    %vm3544 = vweird.f32 %v3503
    %vm3545 = vweird.f32 %v3538
    %vm3546 = vmor %vm3544, %vm3545
    %v3547 = vsel %vm3546, %v3538, %v3543
    %v3548 = vrsqrt.pop %v3504
    %v3549 = vmul.f32 %v3548, %v3504
    %v3550 = vmul.f32 %v3549, %v3548
    %v3551 = vmul.f32 0.5, %v3550
    %v3552 = vsub.f32 1.5, %v3551
    %v3553 = vmul.f32 %v3548, %v3552
    %vm3554 = vweird.f32 %v3504
    %vm3555 = vweird.f32 %v3548
    %vm3556 = vmor %vm3554, %vm3555
    %v3557 = vsel %vm3556, %v3548, %v3553
    %v3558 = vrsqrt.pop %v3505
    %v3559 = vmul.f32 %v3558, %v3505
    %v3560 = vmul.f32 %v3559, %v3558
    %v3561 = vmul.f32 0.5, %v3560
    %v3562 = vsub.f32 1.5, %v3561
    %v3563 = vmul.f32 %v3558, %v3562
    %vm3564 = vweird.f32 %v3505
    %vm3565 = vweird.f32 %v3558
    %vm3566 = vmor %vm3564, %vm3565
    %v3567 = vsel %vm3566, %v3558, %v3563
    %v3568 = vrsqrt.pop %v3506
    %v3569 = vmul.f32 %v3568, %v3506
    %v3570 = vmul.f32 %v3569, %v3568
    %v3571 = vmul.f32 0.5, %v3570
    %v3572 = vsub.f32 1.5, %v3571
    %v3573 = vmul.f32 %v3568, %v3572
    %vm3574 = vweird.f32 %v3506
    %vm3575 = vweird.f32 %v3568
    %vm3576 = vmor %vm3574, %vm3575
    %v3577 = vsel %vm3576, %v3568, %v3573
    %v3578 = vrsqrt.pop %v3507
    %v3579 = vmul.f32 %v3578, %v3507
    %v3580 = vmul.f32 %v3579, %v3578
    %v3581 = vmul.f32 0.5, %v3580
    %v3582 = vsub.f32 1.5, %v3581
    %v3583 = vmul.f32 %v3578, %v3582
    %vm3584 = vweird.f32 %v3507
    %vm3585 = vweird.f32 %v3578
    %vm3586 = vmor %vm3584, %vm3585
    %v3587 = vsel %vm3586, %v3578, %v3583
    %v3588 = vmul.f32 %v3492, %v3517
    %v3589 = vmul.f32 %v3493, %v3527
    %v3590 = vmul.f32 %v3494, %v3537
    %v3591 = vmul.f32 %v3495, %v3547
    %v3592 = vmul.f32 %v3496, %v3557
    %v3593 = vmul.f32 %v3497, %v3567
    %v3594 = vmul.f32 %v3498, %v3577
    %v3595 = vmul.f32 %v3499, %v3587
    %v3596 = vmul.f32 %v3588, %v971
    %v3597 = vmul.f32 %v3589, %v971
    %v3598 = vmul.f32 %v3590, %v971
    %v3599 = vmul.f32 %v3591, %v971
    %v3600 = vmul.f32 %v3592, %v971
    %v3601 = vmul.f32 %v3593, %v971
    %v3602 = vmul.f32 %v3594, %v971
    %v3603 = vmul.f32 %v3595, %v971
    %v3604 = vadd.f32 %v3596, %v982
    %v3605 = vadd.f32 %v3597, %v982
    %v3606 = vadd.f32 %v3598, %v982
    %v3607 = vadd.f32 %v3599, %v982
    %v3608 = vadd.f32 %v3600, %v982
    %v3609 = vadd.f32 %v3601, %v982
    %v3610 = vadd.f32 %v3602, %v982
    %v3611 = vadd.f32 %v3603, %v982
    %v3612 = vmul.f32 %v3604, 0.5
    %v3613 = vmul.f32 %v3605, 0.5
    %v3614 = vmul.f32 %v3606, 0.5
    %v3615 = vmul.f32 %v3607, 0.5
    %v3616 = vmul.f32 %v3608, 0.5
    %v3617 = vmul.f32 %v3609, 0.5
    %v3618 = vmul.f32 %v3610, 0.5
    %v3619 = vmul.f32 %v3611, 0.5
    %v3620 = vmul.f32 %v3604, 0.70710677
    %v3621 = vmul.f32 %v3605, 0.70710677
    %v3622 = vmul.f32 %v3606, 0.70710677
    %v3623 = vmul.f32 %v3607, 0.70710677
    %v3624 = vmul.f32 %v3608, 0.70710677
    %v3625 = vmul.f32 %v3609, 0.70710677
    %v3626 = vmul.f32 %v3610, 0.70710677
    %v3627 = vmul.f32 %v3611, 0.70710677
    %v3628 = vmul.f32 %v3620, %v3620
    %v3629 = vmin.f32 16.0, %v3628
    %v3630 = vmul.f32 %v3629, 2.1237322e-06
    %v3631 = vadd.f32 %v3630, 0.00028619796
    %v3632 = vmul.f32 %v3629, %v3631
    %v3633 = vadd.f32 %v3632, 0.0036580483
    %v3634 = vmul.f32 %v3629, %v3633
    %v3635 = vadd.f32 %v3634, 0.05243302
    %v3636 = vmul.f32 %v3629, %v3635
    %v3637 = vadd.f32 %v3636, 0.18741608
    %v3638 = vmul.f32 %v3629, %v3637
    %v3639 = vadd.f32 %v3638, 1.1283791
    %v3640 = vmul.f32 %v3620, %v3639
    %v3641 = vmul.f32 %v3629, 3.8918573e-05
    %v3642 = vadd.f32 %v3641, 0.001143296
    %v3643 = vmul.f32 %v3629, %v3642
    %v3644 = vadd.f32 %v3643, 0.014752088
    %v3645 = vmul.f32 %v3629, %v3644
    %v3646 = vadd.f32 %v3645, 0.112945676
    %v3647 = vmul.f32 %v3629, %v3646
    %v3648 = vadd.f32 %v3647, 0.4994258
    %v3649 = vmul.f32 %v3629, %v3648
    %v3650 = vadd.f32 %v3649, 1.0
    %v3651 = vrcp.pop %v3650
    %v3652 = vmul.f32 %v3650, %v3651
    %v3653 = vsub.f32 1.0, %v3652
    %v3654 = vmul.f32 %v3651, %v3653
    %v3655 = vadd.f32 %v3651, %v3654
    %vm3656 = vweird.f32 %v3650
    %vm3657 = vweird.f32 %v3651
    %vm3658 = vmor %vm3656, %vm3657
    %v3659 = vsel %vm3658, %v3651, %v3655
    %v3660 = vand.u32 2147483647, %v3650
    %vm3661 = vcmp.eq.f32.partialorder %v3660, 8.507059e+37
    %v3662 = vand.u32 %v3650, 2147483648
    %v3663 = vor.u32 1.1754944e-38, %v3662
    %v3664 = vsel %vm3661, %v3663, %v3659
    %v3665 = vmul.f32 %v3640, %v3664
    %v3666 = vmin.f32 %v3665, 1.0
    %v3667 = vmax.f32 %v3666, -1.0
    %v3668 = vmul.f32 %v3621, %v3621
    %v3669 = vmin.f32 16.0, %v3668
    %v3670 = vmul.f32 %v3669, 2.1237322e-06
    %v3671 = vadd.f32 %v3670, 0.00028619796
    %v3672 = vmul.f32 %v3669, %v3671
    %v3673 = vadd.f32 %v3672, 0.0036580483
    %v3674 = vmul.f32 %v3669, %v3673
    %v3675 = vadd.f32 %v3674, 0.05243302
    %v3676 = vmul.f32 %v3669, %v3675
    %v3677 = vadd.f32 %v3676, 0.18741608
    %v3678 = vmul.f32 %v3669, %v3677
    %v3679 = vadd.f32 %v3678, 1.1283791
    %v3680 = vmul.f32 %v3621, %v3679
    %v3681 = vmul.f32 %v3669, 3.8918573e-05
    %v3682 = vadd.f32 %v3681, 0.001143296
    %v3683 = vmul.f32 %v3669, %v3682
    %v3684 = vadd.f32 %v3683, 0.014752088
    %v3685 = vmul.f32 %v3669, %v3684
    %v3686 = vadd.f32 %v3685, 0.112945676
    %v3687 = vmul.f32 %v3669, %v3686
    %v3688 = vadd.f32 %v3687, 0.4994258
    %v3689 = vmul.f32 %v3669, %v3688
    %v3690 = vadd.f32 %v3689, 1.0
    %v3691 = vrcp.pop %v3690
    %v3692 = vmul.f32 %v3690, %v3691
    %v3693 = vsub.f32 1.0, %v3692
    %v3694 = vmul.f32 %v3691, %v3693
    %v3695 = vadd.f32 %v3691, %v3694
    %vm3696 = vweird.f32 %v3690
    %vm3697 = vweird.f32 %v3691
    %vm3698 = vmor %vm3696, %vm3697
    %v3699 = vsel %vm3698, %v3691, %v3695
    %v3700 = vand.u32 2147483647, %v3690
    %vm3701 = vcmp.eq.f32.partialorder %v3700, 8.507059e+37
    %v3702 = vand.u32 %v3690, 2147483648
    %v3703 = vor.u32 1.1754944e-38, %v3702
    %v3704 = vsel %vm3701, %v3703, %v3699
    %v3705 = vmul.f32 %v3680, %v3704
    %v3706 = vmin.f32 %v3705, 1.0
    %v3707 = vmax.f32 %v3706, -1.0
    %v3708 = vmul.f32 %v3622, %v3622
    %v3709 = vmin.f32 16.0, %v3708
    %v3710 = vmul.f32 %v3709, 2.1237322e-06
    %v3711 = vadd.f32 %v3710, 0.00028619796
    %v3712 = vmul.f32 %v3709, %v3711
    %v3713 = vadd.f32 %v3712, 0.0036580483
    %v3714 = vmul.f32 %v3709, %v3713
    %v3715 = vadd.f32 %v3714, 0.05243302
    %v3716 = vmul.f32 %v3709, %v3715
    %v3717 = vadd.f32 %v3716, 0.18741608
    %v3718 = vmul.f32 %v3709, %v3717
    %v3719 = vadd.f32 %v3718, 1.1283791
    %v3720 = vmul.f32 %v3622, %v3719
    %v3721 = vmul.f32 %v3709, 3.8918573e-05
    %v3722 = vadd.f32 %v3721, 0.001143296
    %v3723 = vmul.f32 %v3709, %v3722
    %v3724 = vadd.f32 %v3723, 0.014752088
    %v3725 = vmul.f32 %v3709, %v3724
    %v3726 = vadd.f32 %v3725, 0.112945676
    %v3727 = vmul.f32 %v3709, %v3726
    %v3728 = vadd.f32 %v3727, 0.4994258
    %v3729 = vmul.f32 %v3709, %v3728
    %v3730 = vadd.f32 %v3729, 1.0
    %v3731 = vrcp.pop %v3730
    %v3732 = vmul.f32 %v3730, %v3731
    %v3733 = vsub.f32 1.0, %v3732
    %v3734 = vmul.f32 %v3731, %v3733
    %v3735 = vadd.f32 %v3731, %v3734
    %vm3736 = vweird.f32 %v3730
    %vm3737 = vweird.f32 %v3731
    %vm3738 = vmor %vm3736, %vm3737
    %v3739 = vsel %vm3738, %v3731, %v3735
    %v3740 = vand.u32 2147483647, %v3730
    %vm3741 = vcmp.eq.f32.partialorder %v3740, 8.507059e+37
    %v3742 = vand.u32 %v3730, 2147483648
    %v3743 = vor.u32 1.1754944e-38, %v3742
    %v3744 = vsel %vm3741, %v3743, %v3739
    %v3745 = vmul.f32 %v3720, %v3744
    %v3746 = vmin.f32 %v3745, 1.0
    %v3747 = vmax.f32 %v3746, -1.0
    %v3748 = vmul.f32 %v3623, %v3623
    %v3749 = vmin.f32 16.0, %v3748
    %v3750 = vmul.f32 %v3749, 2.1237322e-06
    %v3751 = vadd.f32 %v3750, 0.00028619796
    %v3752 = vmul.f32 %v3749, %v3751
    %v3753 = vadd.f32 %v3752, 0.0036580483
    %v3754 = vmul.f32 %v3749, %v3753
    %v3755 = vadd.f32 %v3754, 0.05243302
    %v3756 = vmul.f32 %v3749, %v3755
    %v3757 = vadd.f32 %v3756, 0.18741608
    %v3758 = vmul.f32 %v3749, %v3757
    %v3759 = vadd.f32 %v3758, 1.1283791
    %v3760 = vmul.f32 %v3623, %v3759
    %v3761 = vmul.f32 %v3749, 3.8918573e-05
    %v3762 = vadd.f32 %v3761, 0.001143296
    %v3763 = vmul.f32 %v3749, %v3762
    %v3764 = vadd.f32 %v3763, 0.014752088
    %v3765 = vmul.f32 %v3749, %v3764
    %v3766 = vadd.f32 %v3765, 0.112945676
    %v3767 = vmul.f32 %v3749, %v3766
    %v3768 = vadd.f32 %v3767, 0.4994258
    %v3769 = vmul.f32 %v3749, %v3768
    %v3770 = vadd.f32 %v3769, 1.0
    %v3771 = vrcp.pop %v3770
    %v3772 = vmul.f32 %v3770, %v3771
    %v3773 = vsub.f32 1.0, %v3772
    %v3774 = vmul.f32 %v3771, %v3773
    %v3775 = vadd.f32 %v3771, %v3774
    %vm3776 = vweird.f32 %v3770
    %vm3777 = vweird.f32 %v3771
    %vm3778 = vmor %vm3776, %vm3777
    %v3779 = vsel %vm3778, %v3771, %v3775
    %v3780 = vand.u32 2147483647, %v3770
    %vm3781 = vcmp.eq.f32.partialorder %v3780, 8.507059e+37
    %v3782 = vand.u32 %v3770, 2147483648
    %v3783 = vor.u32 1.1754944e-38, %v3782
    %v3784 = vsel %vm3781, %v3783, %v3779
    %v3785 = vmul.f32 %v3760, %v3784
    %v3786 = vmin.f32 %v3785, 1.0
    %v3787 = vmax.f32 %v3786, -1.0
    %v3788 = vmul.f32 %v3624, %v3624
    %v3789 = vmin.f32 16.0, %v3788
    %v3790 = vmul.f32 %v3789, 2.1237322e-06
    %v3791 = vadd.f32 %v3790, 0.00028619796
    %v3792 = vmul.f32 %v3789, %v3791
    %v3793 = vadd.f32 %v3792, 0.0036580483
    %v3794 = vmul.f32 %v3789, %v3793
    %v3795 = vadd.f32 %v3794, 0.05243302
    %v3796 = vmul.f32 %v3789, %v3795
    %v3797 = vadd.f32 %v3796, 0.18741608
    %v3798 = vmul.f32 %v3789, %v3797
    %v3799 = vadd.f32 %v3798, 1.1283791
    %v3800 = vmul.f32 %v3624, %v3799
    %v3801 = vmul.f32 %v3789, 3.8918573e-05
    %v3802 = vadd.f32 %v3801, 0.001143296
    %v3803 = vmul.f32 %v3789, %v3802
    %v3804 = vadd.f32 %v3803, 0.014752088
    %v3805 = vmul.f32 %v3789, %v3804
    %v3806 = vadd.f32 %v3805, 0.112945676
    %v3807 = vmul.f32 %v3789, %v3806
    %v3808 = vadd.f32 %v3807, 0.4994258
    %v3809 = vmul.f32 %v3789, %v3808
    %v3810 = vadd.f32 %v3809, 1.0
    %v3811 = vrcp.pop %v3810
    %v3812 = vmul.f32 %v3810, %v3811
    %v3813 = vsub.f32 1.0, %v3812
    %v3814 = vmul.f32 %v3811, %v3813
    %v3815 = vadd.f32 %v3811, %v3814
    %vm3816 = vweird.f32 %v3810
    %vm3817 = vweird.f32 %v3811
    %vm3818 = vmor %vm3816, %vm3817
    %v3819 = vsel %vm3818, %v3811, %v3815
    %v3820 = vand.u32 2147483647, %v3810
    %vm3821 = vcmp.eq.f32.partialorder %v3820, 8.507059e+37
    %v3822 = vand.u32 %v3810, 2147483648
    %v3823 = vor.u32 1.1754944e-38, %v3822
    %v3824 = vsel %vm3821, %v3823, %v3819
    %v3825 = vmul.f32 %v3800, %v3824
    %v3826 = vmin.f32 %v3825, 1.0
    %v3827 = vmax.f32 %v3826, -1.0
    %v3828 = vmul.f32 %v3625, %v3625
    %v3829 = vmin.f32 16.0, %v3828
    %v3830 = vmul.f32 %v3829, 2.1237322e-06
    %v3831 = vadd.f32 %v3830, 0.00028619796
    %v3832 = vmul.f32 %v3829, %v3831
    %v3833 = vadd.f32 %v3832, 0.0036580483
    %v3834 = vmul.f32 %v3829, %v3833
    %v3835 = vadd.f32 %v3834, 0.05243302
    %v3836 = vmul.f32 %v3829, %v3835
    %v3837 = vadd.f32 %v3836, 0.18741608
    %v3838 = vmul.f32 %v3829, %v3837
    %v3839 = vadd.f32 %v3838, 1.1283791
    %v3840 = vmul.f32 %v3625, %v3839
    %v3841 = vmul.f32 %v3829, 3.8918573e-05
    %v3842 = vadd.f32 %v3841, 0.001143296
    %v3843 = vmul.f32 %v3829, %v3842
    %v3844 = vadd.f32 %v3843, 0.014752088
    %v3845 = vmul.f32 %v3829, %v3844
    %v3846 = vadd.f32 %v3845, 0.112945676
    %v3847 = vmul.f32 %v3829, %v3846
    %v3848 = vadd.f32 %v3847, 0.4994258
    %v3849 = vmul.f32 %v3829, %v3848
    %v3850 = vadd.f32 %v3849, 1.0
    %v3851 = vrcp.pop %v3850
    %v3852 = vmul.f32 %v3850, %v3851
    %v3853 = vsub.f32 1.0, %v3852
    %v3854 = vmul.f32 %v3851, %v3853
    %v3855 = vadd.f32 %v3851, %v3854
    %vm3856 = vweird.f32 %v3850
    %vm3857 = vweird.f32 %v3851
    %vm3858 = vmor %vm3856, %vm3857
    %v3859 = vsel %vm3858, %v3851, %v3855
    %v3860 = vand.u32 2147483647, %v3850
    %vm3861 = vcmp.eq.f32.partialorder %v3860, 8.507059e+37
    %v3862 = vand.u32 %v3850, 2147483648
    %v3863 = vor.u32 1.1754944e-38, %v3862
    %v3864 = vsel %vm3861, %v3863, %v3859
    %v3865 = vmul.f32 %v3840, %v3864
    %v3866 = vmin.f32 %v3865, 1.0
    %v3867 = vmax.f32 %v3866, -1.0
    %v3868 = vmul.f32 %v3626, %v3626
    %v3869 = vmin.f32 16.0, %v3868
    %v3870 = vmul.f32 %v3869, 2.1237322e-06
    %v3871 = vadd.f32 %v3870, 0.00028619796
    %v3872 = vmul.f32 %v3869, %v3871
    %v3873 = vadd.f32 %v3872, 0.0036580483
    %v3874 = vmul.f32 %v3869, %v3873
    %v3875 = vadd.f32 %v3874, 0.05243302
    %v3876 = vmul.f32 %v3869, %v3875
    %v3877 = vadd.f32 %v3876, 0.18741608
    %v3878 = vmul.f32 %v3869, %v3877
    %v3879 = vadd.f32 %v3878, 1.1283791
    %v3880 = vmul.f32 %v3626, %v3879
    %v3881 = vmul.f32 %v3869, 3.8918573e-05
    %v3882 = vadd.f32 %v3881, 0.001143296
    %v3883 = vmul.f32 %v3869, %v3882
    %v3884 = vadd.f32 %v3883, 0.014752088
    %v3885 = vmul.f32 %v3869, %v3884
    %v3886 = vadd.f32 %v3885, 0.112945676
    %v3887 = vmul.f32 %v3869, %v3886
    %v3888 = vadd.f32 %v3887, 0.4994258
    %v3889 = vmul.f32 %v3869, %v3888
    %v3890 = vadd.f32 %v3889, 1.0
    %v3891 = vrcp.pop %v3890
    %v3892 = vmul.f32 %v3890, %v3891
    %v3893 = vsub.f32 1.0, %v3892
    %v3894 = vmul.f32 %v3891, %v3893
    %v3895 = vadd.f32 %v3891, %v3894
    %vm3896 = vweird.f32 %v3890
    %vm3897 = vweird.f32 %v3891
    %vm3898 = vmor %vm3896, %vm3897
    %v3899 = vsel %vm3898, %v3891, %v3895
    %v3900 = vand.u32 2147483647, %v3890
    %vm3901 = vcmp.eq.f32.partialorder %v3900, 8.507059e+37
    %v3902 = vand.u32 %v3890, 2147483648
    %v3903 = vor.u32 1.1754944e-38, %v3902
    %v3904 = vsel %vm3901, %v3903, %v3899
    %v3905 = vmul.f32 %v3880, %v3904
    %v3906 = vmin.f32 %v3905, 1.0
    %v3907 = vmax.f32 %v3906, -1.0
    %v3908 = vmul.f32 %v3627, %v3627
    %v3909 = vmin.f32 16.0, %v3908
    %v3910 = vmul.f32 %v3909, 2.1237322e-06
    %v3911 = vadd.f32 %v3910, 0.00028619796
    %v3912 = vmul.f32 %v3909, %v3911
    %v3913 = vadd.f32 %v3912, 0.0036580483
    %v3914 = vmul.f32 %v3909, %v3913
    %v3915 = vadd.f32 %v3914, 0.05243302
    %v3916 = vmul.f32 %v3909, %v3915
    %v3917 = vadd.f32 %v3916, 0.18741608
    %v3918 = vmul.f32 %v3909, %v3917
    %v3919 = vadd.f32 %v3918, 1.1283791
    %v3920 = vmul.f32 %v3627, %v3919
    %v3921 = vmul.f32 %v3909, 3.8918573e-05
    %v3922 = vadd.f32 %v3921, 0.001143296
    %v3923 = vmul.f32 %v3909, %v3922
    %v3924 = vadd.f32 %v3923, 0.014752088
    %v3925 = vmul.f32 %v3909, %v3924
    %v3926 = vadd.f32 %v3925, 0.112945676
    %v3927 = vmul.f32 %v3909, %v3926
    %v3928 = vadd.f32 %v3927, 0.4994258
    %v3929 = vmul.f32 %v3909, %v3928
    %v3930 = vadd.f32 %v3929, 1.0
    %v3931 = vrcp.pop %v3930
    %v3932 = vmul.f32 %v3930, %v3931
    %v3933 = vsub.f32 1.0, %v3932
    %v3934 = vmul.f32 %v3931, %v3933
    %v3935 = vadd.f32 %v3931, %v3934
    %vm3936 = vweird.f32 %v3930
    %vm3937 = vweird.f32 %v3931
    %vm3938 = vmor %vm3936, %vm3937
    %v3939 = vsel %vm3938, %v3931, %v3935
    %v3940 = vand.u32 2147483647, %v3930
    %vm3941 = vcmp.eq.f32.partialorder %v3940, 8.507059e+37
    %v3942 = vand.u32 %v3930, 2147483648
    %v3943 = vor.u32 1.1754944e-38, %v3942
    %v3944 = vsel %vm3941, %v3943, %v3939
    %v3945 = vmul.f32 %v3920, %v3944
    %v3946 = vmin.f32 %v3945, 1.0
    %v3947 = vmax.f32 %v3946, -1.0
    %v3948 = vadd.f32 %v3667, 1.0
    %v3949 = vadd.f32 %v3707, 1.0
    %v3950 = vadd.f32 %v3747, 1.0
    %v3951 = vadd.f32 %v3787, 1.0
    %v3952 = vadd.f32 %v3827, 1.0
    %v3953 = vadd.f32 %v3867, 1.0
    %v3954 = vadd.f32 %v3907, 1.0
    %v3955 = vadd.f32 %v3947, 1.0
    %v3956 = vmul.f32 %v3612, %v3948
    %v3957 = vmul.f32 %v3613, %v3949
    %v3958 = vmul.f32 %v3614, %v3950
    %v3959 = vmul.f32 %v3615, %v3951
    %v3960 = vmul.f32 %v3616, %v3952
    %v3961 = vmul.f32 %v3617, %v3953
    %v3962 = vmul.f32 %v3618, %v3954
    %v3963 = vmul.f32 %v3619, %v3955
    %v3964 = vpack.c.bf16 %v3957, %v3956
    %v3965 = vpack.c.bf16 %v3959, %v3958
    %v3966 = vpack.c.bf16 %v3961, %v3960
    %v3967 = vpack.c.bf16 %v3963, %v3962
    %v3969 = vsel %vm139, %v3964, 0
    %v3972 = vsel %vm139, %v3965, 0
    %v3975 = vsel %vm139, %v3966, 0
    %v3978 = vsel %vm139, %v3967, 0
    %3980 = vmatpush.bf16.msra.mxu0 0
    %3981 = vmatpush.bf16.msra.mxu0 0
    %3982 = vmatpush.bf16.msra.mxu0 0
    %3983 = vmatpush.bf16.msra.mxu0 0
    %3984 = vmatpush.bf16.msra.mxu0 %v1370
    %3985 = vmatpush.bf16.msra.mxu0 %v1369
    %3986 = vmatpush.bf16.msra.mxu0 %v1368
    %3987 = vmatpush.bf16.msra.mxu0 %v1367
    %3988 = vmatmul.bf16.gmra.mxu0 %v3969
    %v3989 = vpop.f32.mrf.mxu0
    %v3990 = vadd.f32 %v1349, %v3989
    %v3991 = vpop.f32.mrf.mxu0
    %v3992 = vadd.f32 %v1349, %v3991
    %3993 = vmatmul.bf16.gmra.mxu0 %v3972
    %v3994 = vpop.f32.mrf.mxu0
    %v3995 = vadd.f32 %v1349, %v3994
    %v3996 = vpop.f32.mrf.mxu0
    %v3997 = vadd.f32 %v1349, %v3996
    %3998 = vmatmul.bf16.gmra.mxu0 %v3975
    %v3999 = vpop.f32.mrf.mxu0
    %v4000 = vadd.f32 %v1349, %v3999
    %v4001 = vpop.f32.mrf.mxu0
    %v4002 = vadd.f32 %v1349, %v4001
    %4003 = vmatmul.bf16.gmra.mxu0 %v3978
    %v4004 = vpop.f32.mrf.mxu0
    %v4005 = vadd.f32 %v1349, %v4004
    %v4006 = vpop.f32.mrf.mxu0
    %v4007 = vadd.f32 %v1349, %v4006
    %4008 = vdwg.mxu0
    %v4009 = vmul.f32 %v3990, 1.442695
    %v4010 = vpow.pop %v4009
    %v4011 = vmul.f32 %v3992, 1.442695
    %v4012 = vpow.pop %v4011
    %v4013 = vmul.f32 %v3995, 1.442695
    %v4014 = vpow.pop %v4013
    %v4015 = vmul.f32 %v3997, 1.442695
    %v4016 = vpow.pop %v4015
    %v4017 = vmul.f32 %v4000, 1.442695
    %v4018 = vpow.pop %v4017
    %v4019 = vmul.f32 %v4002, 1.442695
    %v4020 = vpow.pop %v4019
    %v4021 = vmul.f32 %v4005, 1.442695
    %v4022 = vpow.pop %v4021
    %v4023 = vmul.f32 %v4007, 1.442695
    %v4024 = vpow.pop %v4023
    %v4025 = vsel %vm42, %v4010, %v3990
    %v4026 = vsel %vm42, %v4012, %v3992
    %v4027 = vsel %vm42, %v4014, %v3995
    %v4028 = vsel %vm42, %v4016, %v3997
    %v4029 = vsel %vm42, %v4018, %v4000
    %v4030 = vsel %vm42, %v4020, %v4002
    %v4031 = vsel %vm42, %v4022, %v4005
    %v4032 = vsel %vm42, %v4024, %v4007
    %s4033 = scalar_lea.vmem [#allocation2], 128
    %4034 = vst [vmem:[%s4033] sm:$0xff] %v4025
    %4035 = vst [vmem:[%s4033 + $0x8] sm:$0xff] %v4026
    %4036 = vst [vmem:[%s4033 + $0x10] sm:$0xff] %v4027
    %4037 = vst [vmem:[%s4033 + $0x18] sm:$0xff] %v4028
    %4038 = vst [vmem:[%s4033 + $0x20] sm:$0xff] %v4029
    %4039 = vst [vmem:[%s4033 + $0x28] sm:$0xff] %v4030
    %4040 = vst [vmem:[%s4033 + $0x30] sm:$0xff] %v4031
    %4041 = vst [vmem:[%s4033 + $0x38] sm:$0xff] %v4032
    %s4042 = scalar_lea.vmem %s0, 192
    %v4043 = vld [vmem:[%s4042] sm:$0xff]
    %v4044 = vld [vmem:[%s4042 + $0x8] sm:$0xff]
    %v4045 = vld [vmem:[%s4042 + $0x10] sm:$0xff]
    %v4046 = vld [vmem:[%s4042 + $0x18] sm:$0xff]
    %v4047 = vld [vmem:[%s4042 + $0x20] sm:$0xff]
    %v4048 = vld [vmem:[%s4042 + $0x28] sm:$0xff]
    %v4049 = vld [vmem:[%s4042 + $0x30] sm:$0xff]
    %v4050 = vld [vmem:[%s4042 + $0x38] sm:$0xff]
    %v4051 = vpack.c.bf16 %v4044, %v4043
    %v4052 = vpack.c.bf16 %v4046, %v4045
    %v4053 = vpack.c.bf16 %v4048, %v4047
    %v4054 = vpack.c.bf16 %v4050, %v4049
    %v4056 = vsel %vm97, %v4051, 0
    %v4059 = vsel %vm97, %v4052, 0
    %v4062 = vsel %vm97, %v4053, 0
    %v4065 = vsel %vm97, %v4054, 0
    %4067 = vmatpush.bf16.msra.mxu0 0
    %4068 = vmatpush.bf16.msra.mxu0 0
    %4069 = vmatpush.bf16.msra.mxu0 0
    %4070 = vmatpush.bf16.msra.mxu0 0
    %4071 = vmatpush.bf16.msra.mxu0 0
    %4072 = vmatpush.bf16.msra.mxu0 0
    %4073 = vmatpush.bf16.msra.mxu0 %v94
    %4074 = vmatpush.bf16.msra.mxu0 %v93
    %4075 = vmatmul.bf16.gmra.mxu0 %v4056
    %v4076 = vpop.f32.mrf.mxu0
    %v4077 = vadd.f32 %v83, %v4076
    %v4078 = vpop.f32.mrf.mxu0
    %v4079 = vadd.f32 %v83, %v4078
    %4080 = vmatmul.bf16.gmra.mxu0 %v4059
    %v4081 = vpop.f32.mrf.mxu0
    %v4082 = vadd.f32 %v83, %v4081
    %v4083 = vpop.f32.mrf.mxu0
    %v4084 = vadd.f32 %v83, %v4083
    %4085 = vmatmul.bf16.gmra.mxu0 %v4062
    %v4086 = vpop.f32.mrf.mxu0
    %v4087 = vadd.f32 %v83, %v4086
    %v4088 = vpop.f32.mrf.mxu0
    %v4089 = vadd.f32 %v83, %v4088
    %4090 = vmatmul.bf16.gmra.mxu0 %v4065
    %v4091 = vpop.f32.mrf.mxu0
    %v4092 = vadd.f32 %v83, %v4091
    %v4093 = vpop.f32.mrf.mxu0
    %v4094 = vadd.f32 %v83, %v4093
    %4095 = vdwg.mxu0
    %v4096 = vsel %vm139, %v4077, 0.0
    %4097 = vadd.xlane.f32.xlu0 %v4096
    %v4098 = vpop.xlane.xlu0 %4097
    %v4099 = vsel %vm139, %v4079, 0.0
    %4100 = vadd.xlane.f32.xlu0 %v4099
    %v4101 = vpop.xlane.xlu0 %4100
    %v4102 = vsel %vm139, %v4082, 0.0
    %4103 = vadd.xlane.f32.xlu0 %v4102
    %v4104 = vpop.xlane.xlu0 %4103
    %v4105 = vsel %vm139, %v4084, 0.0
    %4106 = vadd.xlane.f32.xlu0 %v4105
    %v4107 = vpop.xlane.xlu0 %4106
    %v4108 = vsel %vm139, %v4087, 0.0
    %4109 = vadd.xlane.f32.xlu0 %v4108
    %v4110 = vpop.xlane.xlu0 %4109
    %v4111 = vsel %vm139, %v4089, 0.0
    %4112 = vadd.xlane.f32.xlu0 %v4111
    %v4113 = vpop.xlane.xlu0 %4112
    %v4114 = vsel %vm139, %v4092, 0.0
    %4115 = vadd.xlane.f32.xlu0 %v4114
    %v4116 = vpop.xlane.xlu0 %4115
    %v4117 = vsel %vm139, %v4094, 0.0
    %4118 = vadd.xlane.f32.xlu0 %v4117
    %v4119 = vpop.xlane.xlu0 %4118
    %v4120 = vmul.f32 %v4077, %v4077
    %v4121 = vmul.f32 %v4079, %v4079
    %v4122 = vmul.f32 %v4082, %v4082
    %v4123 = vmul.f32 %v4084, %v4084
    %v4124 = vmul.f32 %v4087, %v4087
    %v4125 = vmul.f32 %v4089, %v4089
    %v4126 = vmul.f32 %v4092, %v4092
    %v4127 = vmul.f32 %v4094, %v4094
    %v4128 = vsel %vm139, %v4120, 0.0
    %4129 = vadd.xlane.f32.xlu0 %v4128
    %v4130 = vpop.xlane.xlu0 %4129
    %v4131 = vsel %vm139, %v4121, 0.0
    %4132 = vadd.xlane.f32.xlu0 %v4131
    %v4133 = vpop.xlane.xlu0 %4132
    %v4134 = vsel %vm139, %v4122, 0.0
    %4135 = vadd.xlane.f32.xlu0 %v4134
    %v4136 = vpop.xlane.xlu0 %4135
    %v4137 = vsel %vm139, %v4123, 0.0
    %4138 = vadd.xlane.f32.xlu0 %v4137
    %v4139 = vpop.xlane.xlu0 %4138
    %v4140 = vsel %vm139, %v4124, 0.0
    %4141 = vadd.xlane.f32.xlu0 %v4140
    %v4142 = vpop.xlane.xlu0 %4141
    %v4143 = vsel %vm139, %v4125, 0.0
    %4144 = vadd.xlane.f32.xlu0 %v4143
    %v4145 = vpop.xlane.xlu0 %4144
    %v4146 = vsel %vm139, %v4126, 0.0
    %4147 = vadd.xlane.f32.xlu0 %v4146
    %v4148 = vpop.xlane.xlu0 %4147
    %v4149 = vsel %vm139, %v4127, 0.0
    %4150 = vadd.xlane.f32.xlu0 %v4149
    %v4151 = vpop.xlane.xlu0 %4150
    %v4152 = vmul.f32 %v4098, 0.015625
    %v4153 = vmul.f32 %v4101, 0.015625
    %v4154 = vmul.f32 %v4104, 0.015625
    %v4155 = vmul.f32 %v4107, 0.015625
    %v4156 = vmul.f32 %v4110, 0.015625
    %v4157 = vmul.f32 %v4113, 0.015625
    %v4158 = vmul.f32 %v4116, 0.015625
    %v4159 = vmul.f32 %v4119, 0.015625
    %v4160 = vmul.f32 %v4130, 0.015625
    %v4161 = vmul.f32 %v4133, 0.015625
    %v4162 = vmul.f32 %v4136, 0.015625
    %v4163 = vmul.f32 %v4139, 0.015625
    %v4164 = vmul.f32 %v4142, 0.015625
    %v4165 = vmul.f32 %v4145, 0.015625
    %v4166 = vmul.f32 %v4148, 0.015625
    %v4167 = vmul.f32 %v4151, 0.015625
    %v4168 = vmul.f32 %v4152, %v4152
    %v4169 = vmul.f32 %v4153, %v4153
    %v4170 = vmul.f32 %v4154, %v4154
    %v4171 = vmul.f32 %v4155, %v4155
    %v4172 = vmul.f32 %v4156, %v4156
    %v4173 = vmul.f32 %v4157, %v4157
    %v4174 = vmul.f32 %v4158, %v4158
    %v4175 = vmul.f32 %v4159, %v4159
    %v4176 = vsub.f32 %v4160, %v4168
    %v4177 = vsub.f32 %v4161, %v4169
    %v4178 = vsub.f32 %v4162, %v4170
    %v4179 = vsub.f32 %v4163, %v4171
    %v4180 = vsub.f32 %v4164, %v4172
    %v4181 = vsub.f32 %v4165, %v4173
    %v4182 = vsub.f32 %v4166, %v4174
    %v4183 = vsub.f32 %v4167, %v4175
    %v4184 = vsub.f32 %v4077, %v4152
    %v4185 = vsub.f32 %v4079, %v4153
    %v4186 = vsub.f32 %v4082, %v4154
    %v4187 = vsub.f32 %v4084, %v4155
    %v4188 = vsub.f32 %v4087, %v4156
    %v4189 = vsub.f32 %v4089, %v4157
    %v4190 = vsub.f32 %v4092, %v4158
    %v4191 = vsub.f32 %v4094, %v4159
    %v4192 = vadd.f32 %v4176, 1e-05
    %v4193 = vadd.f32 %v4177, 1e-05
    %v4194 = vadd.f32 %v4178, 1e-05
    %v4195 = vadd.f32 %v4179, 1e-05
    %v4196 = vadd.f32 %v4180, 1e-05
    %v4197 = vadd.f32 %v4181, 1e-05
    %v4198 = vadd.f32 %v4182, 1e-05
    %v4199 = vadd.f32 %v4183, 1e-05
    %v4200 = vrsqrt.pop %v4192
    %v4201 = vmul.f32 %v4200, %v4192
    %v4202 = vmul.f32 %v4201, %v4200
    %v4203 = vmul.f32 0.5, %v4202
    %v4204 = vsub.f32 1.5, %v4203
    %v4205 = vmul.f32 %v4200, %v4204
    %vm4206 = vweird.f32 %v4192
    %vm4207 = vweird.f32 %v4200
    %vm4208 = vmor %vm4206, %vm4207
    %v4209 = vsel %vm4208, %v4200, %v4205
    %v4210 = vrsqrt.pop %v4193
    %v4211 = vmul.f32 %v4210, %v4193
    %v4212 = vmul.f32 %v4211, %v4210
    %v4213 = vmul.f32 0.5, %v4212
    %v4214 = vsub.f32 1.5, %v4213
    %v4215 = vmul.f32 %v4210, %v4214
    %vm4216 = vweird.f32 %v4193
    %vm4217 = vweird.f32 %v4210
    %vm4218 = vmor %vm4216, %vm4217
    %v4219 = vsel %vm4218, %v4210, %v4215
    %v4220 = vrsqrt.pop %v4194
    %v4221 = vmul.f32 %v4220, %v4194
    %v4222 = vmul.f32 %v4221, %v4220
    %v4223 = vmul.f32 0.5, %v4222
    %v4224 = vsub.f32 1.5, %v4223
    %v4225 = vmul.f32 %v4220, %v4224
    %vm4226 = vweird.f32 %v4194
    %vm4227 = vweird.f32 %v4220
    %vm4228 = vmor %vm4226, %vm4227
    %v4229 = vsel %vm4228, %v4220, %v4225
    %v4230 = vrsqrt.pop %v4195
    %v4231 = vmul.f32 %v4230, %v4195
    %v4232 = vmul.f32 %v4231, %v4230
    %v4233 = vmul.f32 0.5, %v4232
    %v4234 = vsub.f32 1.5, %v4233
    %v4235 = vmul.f32 %v4230, %v4234
    %vm4236 = vweird.f32 %v4195
    %vm4237 = vweird.f32 %v4230
    %vm4238 = vmor %vm4236, %vm4237
    %v4239 = vsel %vm4238, %v4230, %v4235
    %v4240 = vrsqrt.pop %v4196
    %v4241 = vmul.f32 %v4240, %v4196
    %v4242 = vmul.f32 %v4241, %v4240
    %v4243 = vmul.f32 0.5, %v4242
    %v4244 = vsub.f32 1.5, %v4243
    %v4245 = vmul.f32 %v4240, %v4244
    %vm4246 = vweird.f32 %v4196
    %vm4247 = vweird.f32 %v4240
    %vm4248 = vmor %vm4246, %vm4247
    %v4249 = vsel %vm4248, %v4240, %v4245
    %v4250 = vrsqrt.pop %v4197
    %v4251 = vmul.f32 %v4250, %v4197
    %v4252 = vmul.f32 %v4251, %v4250
    %v4253 = vmul.f32 0.5, %v4252
    %v4254 = vsub.f32 1.5, %v4253
    %v4255 = vmul.f32 %v4250, %v4254
    %vm4256 = vweird.f32 %v4197
    %vm4257 = vweird.f32 %v4250
    %vm4258 = vmor %vm4256, %vm4257
    %v4259 = vsel %vm4258, %v4250, %v4255
    %v4260 = vrsqrt.pop %v4198
    %v4261 = vmul.f32 %v4260, %v4198
    %v4262 = vmul.f32 %v4261, %v4260
    %v4263 = vmul.f32 0.5, %v4262
    %v4264 = vsub.f32 1.5, %v4263
    %v4265 = vmul.f32 %v4260, %v4264
    %vm4266 = vweird.f32 %v4198
    %vm4267 = vweird.f32 %v4260
    %vm4268 = vmor %vm4266, %vm4267
    %v4269 = vsel %vm4268, %v4260, %v4265
    %v4270 = vrsqrt.pop %v4199
    %v4271 = vmul.f32 %v4270, %v4199
    %v4272 = vmul.f32 %v4271, %v4270
    %v4273 = vmul.f32 0.5, %v4272
    %v4274 = vsub.f32 1.5, %v4273
    %v4275 = vmul.f32 %v4270, %v4274
    %vm4276 = vweird.f32 %v4199
    %vm4277 = vweird.f32 %v4270
    %vm4278 = vmor %vm4276, %vm4277
    %v4279 = vsel %vm4278, %v4270, %v4275
    %v4280 = vmul.f32 %v4184, %v4209
    %v4281 = vmul.f32 %v4185, %v4219
    %v4282 = vmul.f32 %v4186, %v4229
    %v4283 = vmul.f32 %v4187, %v4239
    %v4284 = vmul.f32 %v4188, %v4249
    %v4285 = vmul.f32 %v4189, %v4259
    %v4286 = vmul.f32 %v4190, %v4269
    %v4287 = vmul.f32 %v4191, %v4279
    %v4288 = vmul.f32 %v4280, %v333
    %v4289 = vmul.f32 %v4281, %v333
    %v4290 = vmul.f32 %v4282, %v333
    %v4291 = vmul.f32 %v4283, %v333
    %v4292 = vmul.f32 %v4284, %v333
    %v4293 = vmul.f32 %v4285, %v333
    %v4294 = vmul.f32 %v4286, %v333
    %v4295 = vmul.f32 %v4287, %v333
    %v4296 = vadd.f32 %v4288, %v344
    %v4297 = vadd.f32 %v4289, %v344
    %v4298 = vadd.f32 %v4290, %v344
    %v4299 = vadd.f32 %v4291, %v344
    %v4300 = vadd.f32 %v4292, %v344
    %v4301 = vadd.f32 %v4293, %v344
    %v4302 = vadd.f32 %v4294, %v344
    %v4303 = vadd.f32 %v4295, %v344
    %v4304 = vmul.f32 %v4296, 0.5
    %v4305 = vmul.f32 %v4297, 0.5
    %v4306 = vmul.f32 %v4298, 0.5
    %v4307 = vmul.f32 %v4299, 0.5
    %v4308 = vmul.f32 %v4300, 0.5
    %v4309 = vmul.f32 %v4301, 0.5
    %v4310 = vmul.f32 %v4302, 0.5
    %v4311 = vmul.f32 %v4303, 0.5
    %v4312 = vmul.f32 %v4296, 0.70710677
    %v4313 = vmul.f32 %v4297, 0.70710677
    %v4314 = vmul.f32 %v4298, 0.70710677
    %v4315 = vmul.f32 %v4299, 0.70710677
    %v4316 = vmul.f32 %v4300, 0.70710677
    %v4317 = vmul.f32 %v4301, 0.70710677
    %v4318 = vmul.f32 %v4302, 0.70710677
    %v4319 = vmul.f32 %v4303, 0.70710677
    %v4320 = vmul.f32 %v4312, %v4312
    %v4321 = vmin.f32 16.0, %v4320
    %v4322 = vmul.f32 %v4321, 2.1237322e-06
    %v4323 = vadd.f32 %v4322, 0.00028619796
    %v4324 = vmul.f32 %v4321, %v4323
    %v4325 = vadd.f32 %v4324, 0.0036580483
    %v4326 = vmul.f32 %v4321, %v4325
    %v4327 = vadd.f32 %v4326, 0.05243302
    %v4328 = vmul.f32 %v4321, %v4327
    %v4329 = vadd.f32 %v4328, 0.18741608
    %v4330 = vmul.f32 %v4321, %v4329
    %v4331 = vadd.f32 %v4330, 1.1283791
    %v4332 = vmul.f32 %v4312, %v4331
    %v4333 = vmul.f32 %v4321, 3.8918573e-05
    %v4334 = vadd.f32 %v4333, 0.001143296
    %v4335 = vmul.f32 %v4321, %v4334
    %v4336 = vadd.f32 %v4335, 0.014752088
    %v4337 = vmul.f32 %v4321, %v4336
    %v4338 = vadd.f32 %v4337, 0.112945676
    %v4339 = vmul.f32 %v4321, %v4338
    %v4340 = vadd.f32 %v4339, 0.4994258
    %v4341 = vmul.f32 %v4321, %v4340
    %v4342 = vadd.f32 %v4341, 1.0
    %v4343 = vrcp.pop %v4342
    %v4344 = vmul.f32 %v4342, %v4343
    %v4345 = vsub.f32 1.0, %v4344
    %v4346 = vmul.f32 %v4343, %v4345
    %v4347 = vadd.f32 %v4343, %v4346
    %vm4348 = vweird.f32 %v4342
    %vm4349 = vweird.f32 %v4343
    %vm4350 = vmor %vm4348, %vm4349
    %v4351 = vsel %vm4350, %v4343, %v4347
    %v4352 = vand.u32 2147483647, %v4342
    %vm4353 = vcmp.eq.f32.partialorder %v4352, 8.507059e+37
    %v4354 = vand.u32 %v4342, 2147483648
    %v4355 = vor.u32 1.1754944e-38, %v4354
    %v4356 = vsel %vm4353, %v4355, %v4351
    %v4357 = vmul.f32 %v4332, %v4356
    %v4358 = vmin.f32 %v4357, 1.0
    %v4359 = vmax.f32 %v4358, -1.0
    %v4360 = vmul.f32 %v4313, %v4313
    %v4361 = vmin.f32 16.0, %v4360
    %v4362 = vmul.f32 %v4361, 2.1237322e-06
    %v4363 = vadd.f32 %v4362, 0.00028619796
    %v4364 = vmul.f32 %v4361, %v4363
    %v4365 = vadd.f32 %v4364, 0.0036580483
    %v4366 = vmul.f32 %v4361, %v4365
    %v4367 = vadd.f32 %v4366, 0.05243302
    %v4368 = vmul.f32 %v4361, %v4367
    %v4369 = vadd.f32 %v4368, 0.18741608
    %v4370 = vmul.f32 %v4361, %v4369
    %v4371 = vadd.f32 %v4370, 1.1283791
    %v4372 = vmul.f32 %v4313, %v4371
    %v4373 = vmul.f32 %v4361, 3.8918573e-05
    %v4374 = vadd.f32 %v4373, 0.001143296
    %v4375 = vmul.f32 %v4361, %v4374
    %v4376 = vadd.f32 %v4375, 0.014752088
    %v4377 = vmul.f32 %v4361, %v4376
    %v4378 = vadd.f32 %v4377, 0.112945676
    %v4379 = vmul.f32 %v4361, %v4378
    %v4380 = vadd.f32 %v4379, 0.4994258
    %v4381 = vmul.f32 %v4361, %v4380
    %v4382 = vadd.f32 %v4381, 1.0
    %v4383 = vrcp.pop %v4382
    %v4384 = vmul.f32 %v4382, %v4383
    %v4385 = vsub.f32 1.0, %v4384
    %v4386 = vmul.f32 %v4383, %v4385
    %v4387 = vadd.f32 %v4383, %v4386
    %vm4388 = vweird.f32 %v4382
    %vm4389 = vweird.f32 %v4383
    %vm4390 = vmor %vm4388, %vm4389
    %v4391 = vsel %vm4390, %v4383, %v4387
    %v4392 = vand.u32 2147483647, %v4382
    %vm4393 = vcmp.eq.f32.partialorder %v4392, 8.507059e+37
    %v4394 = vand.u32 %v4382, 2147483648
    %v4395 = vor.u32 1.1754944e-38, %v4394
    %v4396 = vsel %vm4393, %v4395, %v4391
    %v4397 = vmul.f32 %v4372, %v4396
    %v4398 = vmin.f32 %v4397, 1.0
    %v4399 = vmax.f32 %v4398, -1.0
    %v4400 = vmul.f32 %v4314, %v4314
    %v4401 = vmin.f32 16.0, %v4400
    %v4402 = vmul.f32 %v4401, 2.1237322e-06
    %v4403 = vadd.f32 %v4402, 0.00028619796
    %v4404 = vmul.f32 %v4401, %v4403
    %v4405 = vadd.f32 %v4404, 0.0036580483
    %v4406 = vmul.f32 %v4401, %v4405
    %v4407 = vadd.f32 %v4406, 0.05243302
    %v4408 = vmul.f32 %v4401, %v4407
    %v4409 = vadd.f32 %v4408, 0.18741608
    %v4410 = vmul.f32 %v4401, %v4409
    %v4411 = vadd.f32 %v4410, 1.1283791
    %v4412 = vmul.f32 %v4314, %v4411
    %v4413 = vmul.f32 %v4401, 3.8918573e-05
    %v4414 = vadd.f32 %v4413, 0.001143296
    %v4415 = vmul.f32 %v4401, %v4414
    %v4416 = vadd.f32 %v4415, 0.014752088
    %v4417 = vmul.f32 %v4401, %v4416
    %v4418 = vadd.f32 %v4417, 0.112945676
    %v4419 = vmul.f32 %v4401, %v4418
    %v4420 = vadd.f32 %v4419, 0.4994258
    %v4421 = vmul.f32 %v4401, %v4420
    %v4422 = vadd.f32 %v4421, 1.0
    %v4423 = vrcp.pop %v4422
    %v4424 = vmul.f32 %v4422, %v4423
    %v4425 = vsub.f32 1.0, %v4424
    %v4426 = vmul.f32 %v4423, %v4425
    %v4427 = vadd.f32 %v4423, %v4426
    %vm4428 = vweird.f32 %v4422
    %vm4429 = vweird.f32 %v4423
    %vm4430 = vmor %vm4428, %vm4429
    %v4431 = vsel %vm4430, %v4423, %v4427
    %v4432 = vand.u32 2147483647, %v4422
    %vm4433 = vcmp.eq.f32.partialorder %v4432, 8.507059e+37
    %v4434 = vand.u32 %v4422, 2147483648
    %v4435 = vor.u32 1.1754944e-38, %v4434
    %v4436 = vsel %vm4433, %v4435, %v4431
    %v4437 = vmul.f32 %v4412, %v4436
    %v4438 = vmin.f32 %v4437, 1.0
    %v4439 = vmax.f32 %v4438, -1.0
    %v4440 = vmul.f32 %v4315, %v4315
    %v4441 = vmin.f32 16.0, %v4440
    %v4442 = vmul.f32 %v4441, 2.1237322e-06
    %v4443 = vadd.f32 %v4442, 0.00028619796
    %v4444 = vmul.f32 %v4441, %v4443
    %v4445 = vadd.f32 %v4444, 0.0036580483
    %v4446 = vmul.f32 %v4441, %v4445
    %v4447 = vadd.f32 %v4446, 0.05243302
    %v4448 = vmul.f32 %v4441, %v4447
    %v4449 = vadd.f32 %v4448, 0.18741608
    %v4450 = vmul.f32 %v4441, %v4449
    %v4451 = vadd.f32 %v4450, 1.1283791
    %v4452 = vmul.f32 %v4315, %v4451
    %v4453 = vmul.f32 %v4441, 3.8918573e-05
    %v4454 = vadd.f32 %v4453, 0.001143296
    %v4455 = vmul.f32 %v4441, %v4454
    %v4456 = vadd.f32 %v4455, 0.014752088
    %v4457 = vmul.f32 %v4441, %v4456
    %v4458 = vadd.f32 %v4457, 0.112945676
    %v4459 = vmul.f32 %v4441, %v4458
    %v4460 = vadd.f32 %v4459, 0.4994258
    %v4461 = vmul.f32 %v4441, %v4460
    %v4462 = vadd.f32 %v4461, 1.0
    %v4463 = vrcp.pop %v4462
    %v4464 = vmul.f32 %v4462, %v4463
    %v4465 = vsub.f32 1.0, %v4464
    %v4466 = vmul.f32 %v4463, %v4465
    %v4467 = vadd.f32 %v4463, %v4466
    %vm4468 = vweird.f32 %v4462
    %vm4469 = vweird.f32 %v4463
    %vm4470 = vmor %vm4468, %vm4469
    %v4471 = vsel %vm4470, %v4463, %v4467
    %v4472 = vand.u32 2147483647, %v4462
    %vm4473 = vcmp.eq.f32.partialorder %v4472, 8.507059e+37
    %v4474 = vand.u32 %v4462, 2147483648
    %v4475 = vor.u32 1.1754944e-38, %v4474
    %v4476 = vsel %vm4473, %v4475, %v4471
    %v4477 = vmul.f32 %v4452, %v4476
    %v4478 = vmin.f32 %v4477, 1.0
    %v4479 = vmax.f32 %v4478, -1.0
    %v4480 = vmul.f32 %v4316, %v4316
    %v4481 = vmin.f32 16.0, %v4480
    %v4482 = vmul.f32 %v4481, 2.1237322e-06
    %v4483 = vadd.f32 %v4482, 0.00028619796
    %v4484 = vmul.f32 %v4481, %v4483
    %v4485 = vadd.f32 %v4484, 0.0036580483
    %v4486 = vmul.f32 %v4481, %v4485
    %v4487 = vadd.f32 %v4486, 0.05243302
    %v4488 = vmul.f32 %v4481, %v4487
    %v4489 = vadd.f32 %v4488, 0.18741608
    %v4490 = vmul.f32 %v4481, %v4489
    %v4491 = vadd.f32 %v4490, 1.1283791
    %v4492 = vmul.f32 %v4316, %v4491
    %v4493 = vmul.f32 %v4481, 3.8918573e-05
    %v4494 = vadd.f32 %v4493, 0.001143296
    %v4495 = vmul.f32 %v4481, %v4494
    %v4496 = vadd.f32 %v4495, 0.014752088
    %v4497 = vmul.f32 %v4481, %v4496
    %v4498 = vadd.f32 %v4497, 0.112945676
    %v4499 = vmul.f32 %v4481, %v4498
    %v4500 = vadd.f32 %v4499, 0.4994258
    %v4501 = vmul.f32 %v4481, %v4500
    %v4502 = vadd.f32 %v4501, 1.0
    %v4503 = vrcp.pop %v4502
    %v4504 = vmul.f32 %v4502, %v4503
    %v4505 = vsub.f32 1.0, %v4504
    %v4506 = vmul.f32 %v4503, %v4505
    %v4507 = vadd.f32 %v4503, %v4506
    %vm4508 = vweird.f32 %v4502
    %vm4509 = vweird.f32 %v4503
    %vm4510 = vmor %vm4508, %vm4509
    %v4511 = vsel %vm4510, %v4503, %v4507
    %v4512 = vand.u32 2147483647, %v4502
    %vm4513 = vcmp.eq.f32.partialorder %v4512, 8.507059e+37
    %v4514 = vand.u32 %v4502, 2147483648
    %v4515 = vor.u32 1.1754944e-38, %v4514
    %v4516 = vsel %vm4513, %v4515, %v4511
    %v4517 = vmul.f32 %v4492, %v4516
    %v4518 = vmin.f32 %v4517, 1.0
    %v4519 = vmax.f32 %v4518, -1.0
    %v4520 = vmul.f32 %v4317, %v4317
    %v4521 = vmin.f32 16.0, %v4520
    %v4522 = vmul.f32 %v4521, 2.1237322e-06
    %v4523 = vadd.f32 %v4522, 0.00028619796
    %v4524 = vmul.f32 %v4521, %v4523
    %v4525 = vadd.f32 %v4524, 0.0036580483
    %v4526 = vmul.f32 %v4521, %v4525
    %v4527 = vadd.f32 %v4526, 0.05243302
    %v4528 = vmul.f32 %v4521, %v4527
    %v4529 = vadd.f32 %v4528, 0.18741608
    %v4530 = vmul.f32 %v4521, %v4529
    %v4531 = vadd.f32 %v4530, 1.1283791
    %v4532 = vmul.f32 %v4317, %v4531
    %v4533 = vmul.f32 %v4521, 3.8918573e-05
    %v4534 = vadd.f32 %v4533, 0.001143296
    %v4535 = vmul.f32 %v4521, %v4534
    %v4536 = vadd.f32 %v4535, 0.014752088
    %v4537 = vmul.f32 %v4521, %v4536
    %v4538 = vadd.f32 %v4537, 0.112945676
    %v4539 = vmul.f32 %v4521, %v4538
    %v4540 = vadd.f32 %v4539, 0.4994258
    %v4541 = vmul.f32 %v4521, %v4540
    %v4542 = vadd.f32 %v4541, 1.0
    %v4543 = vrcp.pop %v4542
    %v4544 = vmul.f32 %v4542, %v4543
    %v4545 = vsub.f32 1.0, %v4544
    %v4546 = vmul.f32 %v4543, %v4545
    %v4547 = vadd.f32 %v4543, %v4546
    %vm4548 = vweird.f32 %v4542
    %vm4549 = vweird.f32 %v4543
    %vm4550 = vmor %vm4548, %vm4549
    %v4551 = vsel %vm4550, %v4543, %v4547
    %v4552 = vand.u32 2147483647, %v4542
    %vm4553 = vcmp.eq.f32.partialorder %v4552, 8.507059e+37
    %v4554 = vand.u32 %v4542, 2147483648
    %v4555 = vor.u32 1.1754944e-38, %v4554
    %v4556 = vsel %vm4553, %v4555, %v4551
    %v4557 = vmul.f32 %v4532, %v4556
    %v4558 = vmin.f32 %v4557, 1.0
    %v4559 = vmax.f32 %v4558, -1.0
    %v4560 = vmul.f32 %v4318, %v4318
    %v4561 = vmin.f32 16.0, %v4560
    %v4562 = vmul.f32 %v4561, 2.1237322e-06
    %v4563 = vadd.f32 %v4562, 0.00028619796
    %v4564 = vmul.f32 %v4561, %v4563
    %v4565 = vadd.f32 %v4564, 0.0036580483
    %v4566 = vmul.f32 %v4561, %v4565
    %v4567 = vadd.f32 %v4566, 0.05243302
    %v4568 = vmul.f32 %v4561, %v4567
    %v4569 = vadd.f32 %v4568, 0.18741608
    %v4570 = vmul.f32 %v4561, %v4569
    %v4571 = vadd.f32 %v4570, 1.1283791
    %v4572 = vmul.f32 %v4318, %v4571
    %v4573 = vmul.f32 %v4561, 3.8918573e-05
    %v4574 = vadd.f32 %v4573, 0.001143296
    %v4575 = vmul.f32 %v4561, %v4574
    %v4576 = vadd.f32 %v4575, 0.014752088
    %v4577 = vmul.f32 %v4561, %v4576
    %v4578 = vadd.f32 %v4577, 0.112945676
    %v4579 = vmul.f32 %v4561, %v4578
    %v4580 = vadd.f32 %v4579, 0.4994258
    %v4581 = vmul.f32 %v4561, %v4580
    %v4582 = vadd.f32 %v4581, 1.0
    %v4583 = vrcp.pop %v4582
    %v4584 = vmul.f32 %v4582, %v4583
    %v4585 = vsub.f32 1.0, %v4584
    %v4586 = vmul.f32 %v4583, %v4585
    %v4587 = vadd.f32 %v4583, %v4586
    %vm4588 = vweird.f32 %v4582
    %vm4589 = vweird.f32 %v4583
    %vm4590 = vmor %vm4588, %vm4589
    %v4591 = vsel %vm4590, %v4583, %v4587
    %v4592 = vand.u32 2147483647, %v4582
    %vm4593 = vcmp.eq.f32.partialorder %v4592, 8.507059e+37
    %v4594 = vand.u32 %v4582, 2147483648
    %v4595 = vor.u32 1.1754944e-38, %v4594
    %v4596 = vsel %vm4593, %v4595, %v4591
    %v4597 = vmul.f32 %v4572, %v4596
    %v4598 = vmin.f32 %v4597, 1.0
    %v4599 = vmax.f32 %v4598, -1.0
    %v4600 = vmul.f32 %v4319, %v4319
    %v4601 = vmin.f32 16.0, %v4600
    %v4602 = vmul.f32 %v4601, 2.1237322e-06
    %v4603 = vadd.f32 %v4602, 0.00028619796
    %v4604 = vmul.f32 %v4601, %v4603
    %v4605 = vadd.f32 %v4604, 0.0036580483
    %v4606 = vmul.f32 %v4601, %v4605
    %v4607 = vadd.f32 %v4606, 0.05243302
    %v4608 = vmul.f32 %v4601, %v4607
    %v4609 = vadd.f32 %v4608, 0.18741608
    %v4610 = vmul.f32 %v4601, %v4609
    %v4611 = vadd.f32 %v4610, 1.1283791
    %v4612 = vmul.f32 %v4319, %v4611
    %v4613 = vmul.f32 %v4601, 3.8918573e-05
    %v4614 = vadd.f32 %v4613, 0.001143296
    %v4615 = vmul.f32 %v4601, %v4614
    %v4616 = vadd.f32 %v4615, 0.014752088
    %v4617 = vmul.f32 %v4601, %v4616
    %v4618 = vadd.f32 %v4617, 0.112945676
    %v4619 = vmul.f32 %v4601, %v4618
    %v4620 = vadd.f32 %v4619, 0.4994258
    %v4621 = vmul.f32 %v4601, %v4620
    %v4622 = vadd.f32 %v4621, 1.0
    %v4623 = vrcp.pop %v4622
    %v4624 = vmul.f32 %v4622, %v4623
    %v4625 = vsub.f32 1.0, %v4624
    %v4626 = vmul.f32 %v4623, %v4625
    %v4627 = vadd.f32 %v4623, %v4626
    %vm4628 = vweird.f32 %v4622
    %vm4629 = vweird.f32 %v4623
    %vm4630 = vmor %vm4628, %vm4629
    %v4631 = vsel %vm4630, %v4623, %v4627
    %v4632 = vand.u32 2147483647, %v4622
    %vm4633 = vcmp.eq.f32.partialorder %v4632, 8.507059e+37
    %v4634 = vand.u32 %v4622, 2147483648
    %v4635 = vor.u32 1.1754944e-38, %v4634
    %v4636 = vsel %vm4633, %v4635, %v4631
    %v4637 = vmul.f32 %v4612, %v4636
    %v4638 = vmin.f32 %v4637, 1.0
    %v4639 = vmax.f32 %v4638, -1.0
    %v4640 = vadd.f32 %v4359, 1.0
    %v4641 = vadd.f32 %v4399, 1.0
    %v4642 = vadd.f32 %v4439, 1.0
    %v4643 = vadd.f32 %v4479, 1.0
    %v4644 = vadd.f32 %v4519, 1.0
    %v4645 = vadd.f32 %v4559, 1.0
    %v4646 = vadd.f32 %v4599, 1.0
    %v4647 = vadd.f32 %v4639, 1.0
    %v4648 = vmul.f32 %v4304, %v4640
    %v4649 = vmul.f32 %v4305, %v4641
    %v4650 = vmul.f32 %v4306, %v4642
    %v4651 = vmul.f32 %v4307, %v4643
    %v4652 = vmul.f32 %v4308, %v4644
    %v4653 = vmul.f32 %v4309, %v4645
    %v4654 = vmul.f32 %v4310, %v4646
    %v4655 = vmul.f32 %v4311, %v4647
    %v4656 = vpack.c.bf16 %v4649, %v4648
    %v4657 = vpack.c.bf16 %v4651, %v4650
    %v4658 = vpack.c.bf16 %v4653, %v4652
    %v4659 = vpack.c.bf16 %v4655, %v4654
    %v4661 = vsel %vm139, %v4656, 0
    %v4664 = vsel %vm139, %v4657, 0
    %v4667 = vsel %vm139, %v4658, 0
    %v4670 = vsel %vm139, %v4659, 0
    %4672 = vmatpush.bf16.msra.mxu0 0
    %4673 = vmatpush.bf16.msra.mxu0 0
    %4674 = vmatpush.bf16.msra.mxu0 0
    %4675 = vmatpush.bf16.msra.mxu0 0
    %4676 = vmatpush.bf16.msra.mxu0 %v732
    %4677 = vmatpush.bf16.msra.mxu0 %v731
    %4678 = vmatpush.bf16.msra.mxu0 %v730
    %4679 = vmatpush.bf16.msra.mxu0 %v729
    %4680 = vmatmul.bf16.gmra.mxu0 %v4661
    %v4681 = vpop.f32.mrf.mxu0
    %v4682 = vadd.f32 %v711, %v4681
    %v4683 = vpop.f32.mrf.mxu0
    %v4684 = vadd.f32 %v711, %v4683
    %4685 = vmatmul.bf16.gmra.mxu0 %v4664
    %v4686 = vpop.f32.mrf.mxu0
    %v4687 = vadd.f32 %v711, %v4686
    %v4688 = vpop.f32.mrf.mxu0
    %v4689 = vadd.f32 %v711, %v4688
    %4690 = vmatmul.bf16.gmra.mxu0 %v4667
    %v4691 = vpop.f32.mrf.mxu0
    %v4692 = vadd.f32 %v711, %v4691
    %v4693 = vpop.f32.mrf.mxu0
    %v4694 = vadd.f32 %v711, %v4693
    %4695 = vmatmul.bf16.gmra.mxu0 %v4670
    %v4696 = vpop.f32.mrf.mxu0
    %v4697 = vadd.f32 %v711, %v4696
    %v4698 = vpop.f32.mrf.mxu0
    %v4699 = vadd.f32 %v711, %v4698
    %4700 = vdwg.mxu0
    %v4701 = vsel %vm139, %v4682, 0.0
    %4702 = vadd.xlane.f32.xlu0 %v4701
    %v4703 = vpop.xlane.xlu0 %4702
    %v4704 = vsel %vm139, %v4684, 0.0
    %4705 = vadd.xlane.f32.xlu0 %v4704
    %v4706 = vpop.xlane.xlu0 %4705
    %v4707 = vsel %vm139, %v4687, 0.0
    %4708 = vadd.xlane.f32.xlu0 %v4707
    %v4709 = vpop.xlane.xlu0 %4708
    %v4710 = vsel %vm139, %v4689, 0.0
    %4711 = vadd.xlane.f32.xlu0 %v4710
    %v4712 = vpop.xlane.xlu0 %4711
    %v4713 = vsel %vm139, %v4692, 0.0
    %4714 = vadd.xlane.f32.xlu0 %v4713
    %v4715 = vpop.xlane.xlu0 %4714
    %v4716 = vsel %vm139, %v4694, 0.0
    %4717 = vadd.xlane.f32.xlu0 %v4716
    %v4718 = vpop.xlane.xlu0 %4717
    %v4719 = vsel %vm139, %v4697, 0.0
    %4720 = vadd.xlane.f32.xlu0 %v4719
    %v4721 = vpop.xlane.xlu0 %4720
    %v4722 = vsel %vm139, %v4699, 0.0
    %4723 = vadd.xlane.f32.xlu0 %v4722
    %v4724 = vpop.xlane.xlu0 %4723
    %v4725 = vmul.f32 %v4682, %v4682
    %v4726 = vmul.f32 %v4684, %v4684
    %v4727 = vmul.f32 %v4687, %v4687
    %v4728 = vmul.f32 %v4689, %v4689
    %v4729 = vmul.f32 %v4692, %v4692
    %v4730 = vmul.f32 %v4694, %v4694
    %v4731 = vmul.f32 %v4697, %v4697
    %v4732 = vmul.f32 %v4699, %v4699
    %v4733 = vsel %vm139, %v4725, 0.0
    %4734 = vadd.xlane.f32.xlu0 %v4733
    %v4735 = vpop.xlane.xlu0 %4734
    %v4736 = vsel %vm139, %v4726, 0.0
    %4737 = vadd.xlane.f32.xlu0 %v4736
    %v4738 = vpop.xlane.xlu0 %4737
    %v4739 = vsel %vm139, %v4727, 0.0
    %4740 = vadd.xlane.f32.xlu0 %v4739
    %v4741 = vpop.xlane.xlu0 %4740
    %v4742 = vsel %vm139, %v4728, 0.0
    %4743 = vadd.xlane.f32.xlu0 %v4742
    %v4744 = vpop.xlane.xlu0 %4743
    %v4745 = vsel %vm139, %v4729, 0.0
    %4746 = vadd.xlane.f32.xlu0 %v4745
    %v4747 = vpop.xlane.xlu0 %4746
    %v4748 = vsel %vm139, %v4730, 0.0
    %4749 = vadd.xlane.f32.xlu0 %v4748
    %v4750 = vpop.xlane.xlu0 %4749
    %v4751 = vsel %vm139, %v4731, 0.0
    %4752 = vadd.xlane.f32.xlu0 %v4751
    %v4753 = vpop.xlane.xlu0 %4752
    %v4754 = vsel %vm139, %v4732, 0.0
    %4755 = vadd.xlane.f32.xlu0 %v4754
    %v4756 = vpop.xlane.xlu0 %4755
    %v4757 = vmul.f32 %v4703, 0.015625
    %v4758 = vmul.f32 %v4706, 0.015625
    %v4759 = vmul.f32 %v4709, 0.015625
    %v4760 = vmul.f32 %v4712, 0.015625
    %v4761 = vmul.f32 %v4715, 0.015625
    %v4762 = vmul.f32 %v4718, 0.015625
    %v4763 = vmul.f32 %v4721, 0.015625
    %v4764 = vmul.f32 %v4724, 0.015625
    %v4765 = vmul.f32 %v4735, 0.015625
    %v4766 = vmul.f32 %v4738, 0.015625
    %v4767 = vmul.f32 %v4741, 0.015625
    %v4768 = vmul.f32 %v4744, 0.015625
    %v4769 = vmul.f32 %v4747, 0.015625
    %v4770 = vmul.f32 %v4750, 0.015625
    %v4771 = vmul.f32 %v4753, 0.015625
    %v4772 = vmul.f32 %v4756, 0.015625
    %v4773 = vmul.f32 %v4757, %v4757
    %v4774 = vmul.f32 %v4758, %v4758
    %v4775 = vmul.f32 %v4759, %v4759
    %v4776 = vmul.f32 %v4760, %v4760
    %v4777 = vmul.f32 %v4761, %v4761
    %v4778 = vmul.f32 %v4762, %v4762
    %v4779 = vmul.f32 %v4763, %v4763
    %v4780 = vmul.f32 %v4764, %v4764
    %v4781 = vsub.f32 %v4765, %v4773
    %v4782 = vsub.f32 %v4766, %v4774
    %v4783 = vsub.f32 %v4767, %v4775
    %v4784 = vsub.f32 %v4768, %v4776
    %v4785 = vsub.f32 %v4769, %v4777
    %v4786 = vsub.f32 %v4770, %v4778
    %v4787 = vsub.f32 %v4771, %v4779
    %v4788 = vsub.f32 %v4772, %v4780
    %v4789 = vsub.f32 %v4682, %v4757
    %v4790 = vsub.f32 %v4684, %v4758
    %v4791 = vsub.f32 %v4687, %v4759
    %v4792 = vsub.f32 %v4689, %v4760
    %v4793 = vsub.f32 %v4692, %v4761
    %v4794 = vsub.f32 %v4694, %v4762
    %v4795 = vsub.f32 %v4697, %v4763
    %v4796 = vsub.f32 %v4699, %v4764
    %v4797 = vadd.f32 %v4781, 1e-05
    %v4798 = vadd.f32 %v4782, 1e-05
    %v4799 = vadd.f32 %v4783, 1e-05
    %v4800 = vadd.f32 %v4784, 1e-05
    %v4801 = vadd.f32 %v4785, 1e-05
    %v4802 = vadd.f32 %v4786, 1e-05
    %v4803 = vadd.f32 %v4787, 1e-05
    %v4804 = vadd.f32 %v4788, 1e-05
    %v4805 = vrsqrt.pop %v4797
    %v4806 = vmul.f32 %v4805, %v4797
    %v4807 = vmul.f32 %v4806, %v4805
    %v4808 = vmul.f32 0.5, %v4807
    %v4809 = vsub.f32 1.5, %v4808
    %v4810 = vmul.f32 %v4805, %v4809
    %vm4811 = vweird.f32 %v4797
    %vm4812 = vweird.f32 %v4805
    %vm4813 = vmor %vm4811, %vm4812
    %v4814 = vsel %vm4813, %v4805, %v4810
    %v4815 = vrsqrt.pop %v4798
    %v4816 = vmul.f32 %v4815, %v4798
    %v4817 = vmul.f32 %v4816, %v4815
    %v4818 = vmul.f32 0.5, %v4817
    %v4819 = vsub.f32 1.5, %v4818
    %v4820 = vmul.f32 %v4815, %v4819
    %vm4821 = vweird.f32 %v4798
    %vm4822 = vweird.f32 %v4815
    %vm4823 = vmor %vm4821, %vm4822
    %v4824 = vsel %vm4823, %v4815, %v4820
    %v4825 = vrsqrt.pop %v4799
    %v4826 = vmul.f32 %v4825, %v4799
    %v4827 = vmul.f32 %v4826, %v4825
    %v4828 = vmul.f32 0.5, %v4827
    %v4829 = vsub.f32 1.5, %v4828
    %v4830 = vmul.f32 %v4825, %v4829
    %vm4831 = vweird.f32 %v4799
    %vm4832 = vweird.f32 %v4825
    %vm4833 = vmor %vm4831, %vm4832
    %v4834 = vsel %vm4833, %v4825, %v4830
    %v4835 = vrsqrt.pop %v4800
    %v4836 = vmul.f32 %v4835, %v4800
    %v4837 = vmul.f32 %v4836, %v4835
    %v4838 = vmul.f32 0.5, %v4837
    %v4839 = vsub.f32 1.5, %v4838
    %v4840 = vmul.f32 %v4835, %v4839
    %vm4841 = vweird.f32 %v4800
    %vm4842 = vweird.f32 %v4835
    %vm4843 = vmor %vm4841, %vm4842
    %v4844 = vsel %vm4843, %v4835, %v4840
    %v4845 = vrsqrt.pop %v4801
    %v4846 = vmul.f32 %v4845, %v4801
    %v4847 = vmul.f32 %v4846, %v4845
    %v4848 = vmul.f32 0.5, %v4847
    %v4849 = vsub.f32 1.5, %v4848
    %v4850 = vmul.f32 %v4845, %v4849
    %vm4851 = vweird.f32 %v4801
    %vm4852 = vweird.f32 %v4845
    %vm4853 = vmor %vm4851, %vm4852
    %v4854 = vsel %vm4853, %v4845, %v4850
    %v4855 = vrsqrt.pop %v4802
    %v4856 = vmul.f32 %v4855, %v4802
    %v4857 = vmul.f32 %v4856, %v4855
    %v4858 = vmul.f32 0.5, %v4857
    %v4859 = vsub.f32 1.5, %v4858
    %v4860 = vmul.f32 %v4855, %v4859
    %vm4861 = vweird.f32 %v4802
    %vm4862 = vweird.f32 %v4855
    %vm4863 = vmor %vm4861, %vm4862
    %v4864 = vsel %vm4863, %v4855, %v4860
    %v4865 = vrsqrt.pop %v4803
    %v4866 = vmul.f32 %v4865, %v4803
    %v4867 = vmul.f32 %v4866, %v4865
    %v4868 = vmul.f32 0.5, %v4867
    %v4869 = vsub.f32 1.5, %v4868
    %v4870 = vmul.f32 %v4865, %v4869
    %vm4871 = vweird.f32 %v4803
    %vm4872 = vweird.f32 %v4865
    %vm4873 = vmor %vm4871, %vm4872
    %v4874 = vsel %vm4873, %v4865, %v4870
    %v4875 = vrsqrt.pop %v4804
    %v4876 = vmul.f32 %v4875, %v4804
    %v4877 = vmul.f32 %v4876, %v4875
    %v4878 = vmul.f32 0.5, %v4877
    %v4879 = vsub.f32 1.5, %v4878
    %v4880 = vmul.f32 %v4875, %v4879
    %vm4881 = vweird.f32 %v4804
    %vm4882 = vweird.f32 %v4875
    %vm4883 = vmor %vm4881, %vm4882
    %v4884 = vsel %vm4883, %v4875, %v4880
    %v4885 = vmul.f32 %v4789, %v4814
    %v4886 = vmul.f32 %v4790, %v4824
    %v4887 = vmul.f32 %v4791, %v4834
    %v4888 = vmul.f32 %v4792, %v4844
    %v4889 = vmul.f32 %v4793, %v4854
    %v4890 = vmul.f32 %v4794, %v4864
    %v4891 = vmul.f32 %v4795, %v4874
    %v4892 = vmul.f32 %v4796, %v4884
    %v4893 = vmul.f32 %v4885, %v971
    %v4894 = vmul.f32 %v4886, %v971
    %v4895 = vmul.f32 %v4887, %v971
    %v4896 = vmul.f32 %v4888, %v971
    %v4897 = vmul.f32 %v4889, %v971
    %v4898 = vmul.f32 %v4890, %v971
    %v4899 = vmul.f32 %v4891, %v971
    %v4900 = vmul.f32 %v4892, %v971
    %v4901 = vadd.f32 %v4893, %v982
    %v4902 = vadd.f32 %v4894, %v982
    %v4903 = vadd.f32 %v4895, %v982
    %v4904 = vadd.f32 %v4896, %v982
    %v4905 = vadd.f32 %v4897, %v982
    %v4906 = vadd.f32 %v4898, %v982
    %v4907 = vadd.f32 %v4899, %v982
    %v4908 = vadd.f32 %v4900, %v982
    %v4909 = vmul.f32 %v4901, 0.5
    %v4910 = vmul.f32 %v4902, 0.5
    %v4911 = vmul.f32 %v4903, 0.5
    %v4912 = vmul.f32 %v4904, 0.5
    %v4913 = vmul.f32 %v4905, 0.5
    %v4914 = vmul.f32 %v4906, 0.5
    %v4915 = vmul.f32 %v4907, 0.5
    %v4916 = vmul.f32 %v4908, 0.5
    %v4917 = vmul.f32 %v4901, 0.70710677
    %v4918 = vmul.f32 %v4902, 0.70710677
    %v4919 = vmul.f32 %v4903, 0.70710677
    %v4920 = vmul.f32 %v4904, 0.70710677
    %v4921 = vmul.f32 %v4905, 0.70710677
    %v4922 = vmul.f32 %v4906, 0.70710677
    %v4923 = vmul.f32 %v4907, 0.70710677
    %v4924 = vmul.f32 %v4908, 0.70710677
    %v4925 = vmul.f32 %v4917, %v4917
    %v4926 = vmin.f32 16.0, %v4925
    %v4927 = vmul.f32 %v4926, 2.1237322e-06
    %v4928 = vadd.f32 %v4927, 0.00028619796
    %v4929 = vmul.f32 %v4926, %v4928
    %v4930 = vadd.f32 %v4929, 0.0036580483
    %v4931 = vmul.f32 %v4926, %v4930
    %v4932 = vadd.f32 %v4931, 0.05243302
    %v4933 = vmul.f32 %v4926, %v4932
    %v4934 = vadd.f32 %v4933, 0.18741608
    %v4935 = vmul.f32 %v4926, %v4934
    %v4936 = vadd.f32 %v4935, 1.1283791
    %v4937 = vmul.f32 %v4917, %v4936
    %v4938 = vmul.f32 %v4926, 3.8918573e-05
    %v4939 = vadd.f32 %v4938, 0.001143296
    %v4940 = vmul.f32 %v4926, %v4939
    %v4941 = vadd.f32 %v4940, 0.014752088
    %v4942 = vmul.f32 %v4926, %v4941
    %v4943 = vadd.f32 %v4942, 0.112945676
    %v4944 = vmul.f32 %v4926, %v4943
    %v4945 = vadd.f32 %v4944, 0.4994258
    %v4946 = vmul.f32 %v4926, %v4945
    %v4947 = vadd.f32 %v4946, 1.0
    %v4948 = vrcp.pop %v4947
    %v4949 = vmul.f32 %v4947, %v4948
    %v4950 = vsub.f32 1.0, %v4949
    %v4951 = vmul.f32 %v4948, %v4950
    %v4952 = vadd.f32 %v4948, %v4951
    %vm4953 = vweird.f32 %v4947
    %vm4954 = vweird.f32 %v4948
    %vm4955 = vmor %vm4953, %vm4954
    %v4956 = vsel %vm4955, %v4948, %v4952
    %v4957 = vand.u32 2147483647, %v4947
    %vm4958 = vcmp.eq.f32.partialorder %v4957, 8.507059e+37
    %v4959 = vand.u32 %v4947, 2147483648
    %v4960 = vor.u32 1.1754944e-38, %v4959
    %v4961 = vsel %vm4958, %v4960, %v4956
    %v4962 = vmul.f32 %v4937, %v4961
    %v4963 = vmin.f32 %v4962, 1.0
    %v4964 = vmax.f32 %v4963, -1.0
    %v4965 = vmul.f32 %v4918, %v4918
    %v4966 = vmin.f32 16.0, %v4965
    %v4967 = vmul.f32 %v4966, 2.1237322e-06
    %v4968 = vadd.f32 %v4967, 0.00028619796
    %v4969 = vmul.f32 %v4966, %v4968
    %v4970 = vadd.f32 %v4969, 0.0036580483
    %v4971 = vmul.f32 %v4966, %v4970
    %v4972 = vadd.f32 %v4971, 0.05243302
    %v4973 = vmul.f32 %v4966, %v4972
    %v4974 = vadd.f32 %v4973, 0.18741608
    %v4975 = vmul.f32 %v4966, %v4974
    %v4976 = vadd.f32 %v4975, 1.1283791
    %v4977 = vmul.f32 %v4918, %v4976
    %v4978 = vmul.f32 %v4966, 3.8918573e-05
    %v4979 = vadd.f32 %v4978, 0.001143296
    %v4980 = vmul.f32 %v4966, %v4979
    %v4981 = vadd.f32 %v4980, 0.014752088
    %v4982 = vmul.f32 %v4966, %v4981
    %v4983 = vadd.f32 %v4982, 0.112945676
    %v4984 = vmul.f32 %v4966, %v4983
    %v4985 = vadd.f32 %v4984, 0.4994258
    %v4986 = vmul.f32 %v4966, %v4985
    %v4987 = vadd.f32 %v4986, 1.0
    %v4988 = vrcp.pop %v4987
    %v4989 = vmul.f32 %v4987, %v4988
    %v4990 = vsub.f32 1.0, %v4989
    %v4991 = vmul.f32 %v4988, %v4990
    %v4992 = vadd.f32 %v4988, %v4991
    %vm4993 = vweird.f32 %v4987
    %vm4994 = vweird.f32 %v4988
    %vm4995 = vmor %vm4993, %vm4994
    %v4996 = vsel %vm4995, %v4988, %v4992
    %v4997 = vand.u32 2147483647, %v4987
    %vm4998 = vcmp.eq.f32.partialorder %v4997, 8.507059e+37
    %v4999 = vand.u32 %v4987, 2147483648
    %v5000 = vor.u32 1.1754944e-38, %v4999
    %v5001 = vsel %vm4998, %v5000, %v4996
    %v5002 = vmul.f32 %v4977, %v5001
    %v5003 = vmin.f32 %v5002, 1.0
    %v5004 = vmax.f32 %v5003, -1.0
    %v5005 = vmul.f32 %v4919, %v4919
    %v5006 = vmin.f32 16.0, %v5005
    %v5007 = vmul.f32 %v5006, 2.1237322e-06
    %v5008 = vadd.f32 %v5007, 0.00028619796
    %v5009 = vmul.f32 %v5006, %v5008
    %v5010 = vadd.f32 %v5009, 0.0036580483
    %v5011 = vmul.f32 %v5006, %v5010
    %v5012 = vadd.f32 %v5011, 0.05243302
    %v5013 = vmul.f32 %v5006, %v5012
    %v5014 = vadd.f32 %v5013, 0.18741608
    %v5015 = vmul.f32 %v5006, %v5014
    %v5016 = vadd.f32 %v5015, 1.1283791
    %v5017 = vmul.f32 %v4919, %v5016
    %v5018 = vmul.f32 %v5006, 3.8918573e-05
    %v5019 = vadd.f32 %v5018, 0.001143296
    %v5020 = vmul.f32 %v5006, %v5019
    %v5021 = vadd.f32 %v5020, 0.014752088
    %v5022 = vmul.f32 %v5006, %v5021
    %v5023 = vadd.f32 %v5022, 0.112945676
    %v5024 = vmul.f32 %v5006, %v5023
    %v5025 = vadd.f32 %v5024, 0.4994258
    %v5026 = vmul.f32 %v5006, %v5025
    %v5027 = vadd.f32 %v5026, 1.0
    %v5028 = vrcp.pop %v5027
    %v5029 = vmul.f32 %v5027, %v5028
    %v5030 = vsub.f32 1.0, %v5029
    %v5031 = vmul.f32 %v5028, %v5030
    %v5032 = vadd.f32 %v5028, %v5031
    %vm5033 = vweird.f32 %v5027
    %vm5034 = vweird.f32 %v5028
    %vm5035 = vmor %vm5033, %vm5034
    %v5036 = vsel %vm5035, %v5028, %v5032
    %v5037 = vand.u32 2147483647, %v5027
    %vm5038 = vcmp.eq.f32.partialorder %v5037, 8.507059e+37
    %v5039 = vand.u32 %v5027, 2147483648
    %v5040 = vor.u32 1.1754944e-38, %v5039
    %v5041 = vsel %vm5038, %v5040, %v5036
    %v5042 = vmul.f32 %v5017, %v5041
    %v5043 = vmin.f32 %v5042, 1.0
    %v5044 = vmax.f32 %v5043, -1.0
    %v5045 = vmul.f32 %v4920, %v4920
    %v5046 = vmin.f32 16.0, %v5045
    %v5047 = vmul.f32 %v5046, 2.1237322e-06
    %v5048 = vadd.f32 %v5047, 0.00028619796
    %v5049 = vmul.f32 %v5046, %v5048
    %v5050 = vadd.f32 %v5049, 0.0036580483
    %v5051 = vmul.f32 %v5046, %v5050
    %v5052 = vadd.f32 %v5051, 0.05243302
    %v5053 = vmul.f32 %v5046, %v5052
    %v5054 = vadd.f32 %v5053, 0.18741608
    %v5055 = vmul.f32 %v5046, %v5054
    %v5056 = vadd.f32 %v5055, 1.1283791
    %v5057 = vmul.f32 %v4920, %v5056
    %v5058 = vmul.f32 %v5046, 3.8918573e-05
    %v5059 = vadd.f32 %v5058, 0.001143296
    %v5060 = vmul.f32 %v5046, %v5059
    %v5061 = vadd.f32 %v5060, 0.014752088
    %v5062 = vmul.f32 %v5046, %v5061
    %v5063 = vadd.f32 %v5062, 0.112945676
    %v5064 = vmul.f32 %v5046, %v5063
    %v5065 = vadd.f32 %v5064, 0.4994258
    %v5066 = vmul.f32 %v5046, %v5065
    %v5067 = vadd.f32 %v5066, 1.0
    %v5068 = vrcp.pop %v5067
    %v5069 = vmul.f32 %v5067, %v5068
    %v5070 = vsub.f32 1.0, %v5069
    %v5071 = vmul.f32 %v5068, %v5070
    %v5072 = vadd.f32 %v5068, %v5071
    %vm5073 = vweird.f32 %v5067
    %vm5074 = vweird.f32 %v5068
    %vm5075 = vmor %vm5073, %vm5074
    %v5076 = vsel %vm5075, %v5068, %v5072
    %v5077 = vand.u32 2147483647, %v5067
    %vm5078 = vcmp.eq.f32.partialorder %v5077, 8.507059e+37
    %v5079 = vand.u32 %v5067, 2147483648
    %v5080 = vor.u32 1.1754944e-38, %v5079
    %v5081 = vsel %vm5078, %v5080, %v5076
    %v5082 = vmul.f32 %v5057, %v5081
    %v5083 = vmin.f32 %v5082, 1.0
    %v5084 = vmax.f32 %v5083, -1.0
    %v5085 = vmul.f32 %v4921, %v4921
    %v5086 = vmin.f32 16.0, %v5085
    %v5087 = vmul.f32 %v5086, 2.1237322e-06
    %v5088 = vadd.f32 %v5087, 0.00028619796
    %v5089 = vmul.f32 %v5086, %v5088
    %v5090 = vadd.f32 %v5089, 0.0036580483
    %v5091 = vmul.f32 %v5086, %v5090
    %v5092 = vadd.f32 %v5091, 0.05243302
    %v5093 = vmul.f32 %v5086, %v5092
    %v5094 = vadd.f32 %v5093, 0.18741608
    %v5095 = vmul.f32 %v5086, %v5094
    %v5096 = vadd.f32 %v5095, 1.1283791
    %v5097 = vmul.f32 %v4921, %v5096
    %v5098 = vmul.f32 %v5086, 3.8918573e-05
    %v5099 = vadd.f32 %v5098, 0.001143296
    %v5100 = vmul.f32 %v5086, %v5099
    %v5101 = vadd.f32 %v5100, 0.014752088
    %v5102 = vmul.f32 %v5086, %v5101
    %v5103 = vadd.f32 %v5102, 0.112945676
    %v5104 = vmul.f32 %v5086, %v5103
    %v5105 = vadd.f32 %v5104, 0.4994258
    %v5106 = vmul.f32 %v5086, %v5105
    %v5107 = vadd.f32 %v5106, 1.0
    %v5108 = vrcp.pop %v5107
    %v5109 = vmul.f32 %v5107, %v5108
    %v5110 = vsub.f32 1.0, %v5109
    %v5111 = vmul.f32 %v5108, %v5110
    %v5112 = vadd.f32 %v5108, %v5111
    %vm5113 = vweird.f32 %v5107
    %vm5114 = vweird.f32 %v5108
    %vm5115 = vmor %vm5113, %vm5114
    %v5116 = vsel %vm5115, %v5108, %v5112
    %v5117 = vand.u32 2147483647, %v5107
    %vm5118 = vcmp.eq.f32.partialorder %v5117, 8.507059e+37
    %v5119 = vand.u32 %v5107, 2147483648
    %v5120 = vor.u32 1.1754944e-38, %v5119
    %v5121 = vsel %vm5118, %v5120, %v5116
    %v5122 = vmul.f32 %v5097, %v5121
    %v5123 = vmin.f32 %v5122, 1.0
    %v5124 = vmax.f32 %v5123, -1.0
    %v5125 = vmul.f32 %v4922, %v4922
    %v5126 = vmin.f32 16.0, %v5125
    %v5127 = vmul.f32 %v5126, 2.1237322e-06
    %v5128 = vadd.f32 %v5127, 0.00028619796
    %v5129 = vmul.f32 %v5126, %v5128
    %v5130 = vadd.f32 %v5129, 0.0036580483
    %v5131 = vmul.f32 %v5126, %v5130
    %v5132 = vadd.f32 %v5131, 0.05243302
    %v5133 = vmul.f32 %v5126, %v5132
    %v5134 = vadd.f32 %v5133, 0.18741608
    %v5135 = vmul.f32 %v5126, %v5134
    %v5136 = vadd.f32 %v5135, 1.1283791
    %v5137 = vmul.f32 %v4922, %v5136
    %v5138 = vmul.f32 %v5126, 3.8918573e-05
    %v5139 = vadd.f32 %v5138, 0.001143296
    %v5140 = vmul.f32 %v5126, %v5139
    %v5141 = vadd.f32 %v5140, 0.014752088
    %v5142 = vmul.f32 %v5126, %v5141
    %v5143 = vadd.f32 %v5142, 0.112945676
    %v5144 = vmul.f32 %v5126, %v5143
    %v5145 = vadd.f32 %v5144, 0.4994258
    %v5146 = vmul.f32 %v5126, %v5145
    %v5147 = vadd.f32 %v5146, 1.0
    %v5148 = vrcp.pop %v5147
    %v5149 = vmul.f32 %v5147, %v5148
    %v5150 = vsub.f32 1.0, %v5149
    %v5151 = vmul.f32 %v5148, %v5150
    %v5152 = vadd.f32 %v5148, %v5151
    %vm5153 = vweird.f32 %v5147
    %vm5154 = vweird.f32 %v5148
    %vm5155 = vmor %vm5153, %vm5154
    %v5156 = vsel %vm5155, %v5148, %v5152
    %v5157 = vand.u32 2147483647, %v5147
    %vm5158 = vcmp.eq.f32.partialorder %v5157, 8.507059e+37
    %v5159 = vand.u32 %v5147, 2147483648
    %v5160 = vor.u32 1.1754944e-38, %v5159
    %v5161 = vsel %vm5158, %v5160, %v5156
    %v5162 = vmul.f32 %v5137, %v5161
    %v5163 = vmin.f32 %v5162, 1.0
    %v5164 = vmax.f32 %v5163, -1.0
    %v5165 = vmul.f32 %v4923, %v4923
    %v5166 = vmin.f32 16.0, %v5165
    %v5167 = vmul.f32 %v5166, 2.1237322e-06
    %v5168 = vadd.f32 %v5167, 0.00028619796
    %v5169 = vmul.f32 %v5166, %v5168
    %v5170 = vadd.f32 %v5169, 0.0036580483
    %v5171 = vmul.f32 %v5166, %v5170
    %v5172 = vadd.f32 %v5171, 0.05243302
    %v5173 = vmul.f32 %v5166, %v5172
    %v5174 = vadd.f32 %v5173, 0.18741608
    %v5175 = vmul.f32 %v5166, %v5174
    %v5176 = vadd.f32 %v5175, 1.1283791
    %v5177 = vmul.f32 %v4923, %v5176
    %v5178 = vmul.f32 %v5166, 3.8918573e-05
    %v5179 = vadd.f32 %v5178, 0.001143296
    %v5180 = vmul.f32 %v5166, %v5179
    %v5181 = vadd.f32 %v5180, 0.014752088
    %v5182 = vmul.f32 %v5166, %v5181
    %v5183 = vadd.f32 %v5182, 0.112945676
    %v5184 = vmul.f32 %v5166, %v5183
    %v5185 = vadd.f32 %v5184, 0.4994258
    %v5186 = vmul.f32 %v5166, %v5185
    %v5187 = vadd.f32 %v5186, 1.0
    %v5188 = vrcp.pop %v5187
    %v5189 = vmul.f32 %v5187, %v5188
    %v5190 = vsub.f32 1.0, %v5189
    %v5191 = vmul.f32 %v5188, %v5190
    %v5192 = vadd.f32 %v5188, %v5191
    %vm5193 = vweird.f32 %v5187
    %vm5194 = vweird.f32 %v5188
    %vm5195 = vmor %vm5193, %vm5194
    %v5196 = vsel %vm5195, %v5188, %v5192
    %v5197 = vand.u32 2147483647, %v5187
    %vm5198 = vcmp.eq.f32.partialorder %v5197, 8.507059e+37
    %v5199 = vand.u32 %v5187, 2147483648
    %v5200 = vor.u32 1.1754944e-38, %v5199
    %v5201 = vsel %vm5198, %v5200, %v5196
    %v5202 = vmul.f32 %v5177, %v5201
    %v5203 = vmin.f32 %v5202, 1.0
    %v5204 = vmax.f32 %v5203, -1.0
    %v5205 = vmul.f32 %v4924, %v4924
    %v5206 = vmin.f32 16.0, %v5205
    %v5207 = vmul.f32 %v5206, 2.1237322e-06
    %v5208 = vadd.f32 %v5207, 0.00028619796
    %v5209 = vmul.f32 %v5206, %v5208
    %v5210 = vadd.f32 %v5209, 0.0036580483
    %v5211 = vmul.f32 %v5206, %v5210
    %v5212 = vadd.f32 %v5211, 0.05243302
    %v5213 = vmul.f32 %v5206, %v5212
    %v5214 = vadd.f32 %v5213, 0.18741608
    %v5215 = vmul.f32 %v5206, %v5214
    %v5216 = vadd.f32 %v5215, 1.1283791
    %v5217 = vmul.f32 %v4924, %v5216
    %v5218 = vmul.f32 %v5206, 3.8918573e-05
    %v5219 = vadd.f32 %v5218, 0.001143296
    %v5220 = vmul.f32 %v5206, %v5219
    %v5221 = vadd.f32 %v5220, 0.014752088
    %v5222 = vmul.f32 %v5206, %v5221
    %v5223 = vadd.f32 %v5222, 0.112945676
    %v5224 = vmul.f32 %v5206, %v5223
    %v5225 = vadd.f32 %v5224, 0.4994258
    %v5226 = vmul.f32 %v5206, %v5225
    %v5227 = vadd.f32 %v5226, 1.0
    %v5228 = vrcp.pop %v5227
    %v5229 = vmul.f32 %v5227, %v5228
    %v5230 = vsub.f32 1.0, %v5229
    %v5231 = vmul.f32 %v5228, %v5230
    %v5232 = vadd.f32 %v5228, %v5231
    %vm5233 = vweird.f32 %v5227
    %vm5234 = vweird.f32 %v5228
    %vm5235 = vmor %vm5233, %vm5234
    %v5236 = vsel %vm5235, %v5228, %v5232
    %v5237 = vand.u32 2147483647, %v5227
    %vm5238 = vcmp.eq.f32.partialorder %v5237, 8.507059e+37
    %v5239 = vand.u32 %v5227, 2147483648
    %v5240 = vor.u32 1.1754944e-38, %v5239
    %v5241 = vsel %vm5238, %v5240, %v5236
    %v5242 = vmul.f32 %v5217, %v5241
    %v5243 = vmin.f32 %v5242, 1.0
    %v5244 = vmax.f32 %v5243, -1.0
    %v5245 = vadd.f32 %v4964, 1.0
    %v5246 = vadd.f32 %v5004, 1.0
    %v5247 = vadd.f32 %v5044, 1.0
    %v5248 = vadd.f32 %v5084, 1.0
    %v5249 = vadd.f32 %v5124, 1.0
    %v5250 = vadd.f32 %v5164, 1.0
    %v5251 = vadd.f32 %v5204, 1.0
    %v5252 = vadd.f32 %v5244, 1.0
    %v5253 = vmul.f32 %v4909, %v5245
    %v5254 = vmul.f32 %v4910, %v5246
    %v5255 = vmul.f32 %v4911, %v5247
    %v5256 = vmul.f32 %v4912, %v5248
    %v5257 = vmul.f32 %v4913, %v5249
    %v5258 = vmul.f32 %v4914, %v5250
    %v5259 = vmul.f32 %v4915, %v5251
    %v5260 = vmul.f32 %v4916, %v5252
    %v5261 = vpack.c.bf16 %v5254, %v5253
    %v5262 = vpack.c.bf16 %v5256, %v5255
    %v5263 = vpack.c.bf16 %v5258, %v5257
    %v5264 = vpack.c.bf16 %v5260, %v5259
    %v5266 = vsel %vm139, %v5261, 0
    %v5269 = vsel %vm139, %v5262, 0
    %v5272 = vsel %vm139, %v5263, 0
    %v5275 = vsel %vm139, %v5264, 0
    %5277 = vmatpush.bf16.msra.mxu0 0
    %5278 = vmatpush.bf16.msra.mxu0 0
    %5279 = vmatpush.bf16.msra.mxu0 0
    %5280 = vmatpush.bf16.msra.mxu0 0
    %5281 = vmatpush.bf16.msra.mxu0 %v1370
    %5282 = vmatpush.bf16.msra.mxu0 %v1369
    %5283 = vmatpush.bf16.msra.mxu0 %v1368
    %5284 = vmatpush.bf16.msra.mxu0 %v1367
    %5285 = vmatmul.bf16.gmra.mxu0 %v5266
    %v5286 = vpop.f32.mrf.mxu0
    %v5287 = vadd.f32 %v1349, %v5286
    %v5288 = vpop.f32.mrf.mxu0
    %v5289 = vadd.f32 %v1349, %v5288
    %5290 = vmatmul.bf16.gmra.mxu0 %v5269
    %v5291 = vpop.f32.mrf.mxu0
    %v5292 = vadd.f32 %v1349, %v5291
    %v5293 = vpop.f32.mrf.mxu0
    %v5294 = vadd.f32 %v1349, %v5293
    %5295 = vmatmul.bf16.gmra.mxu0 %v5272
    %v5296 = vpop.f32.mrf.mxu0
    %v5297 = vadd.f32 %v1349, %v5296
    %v5298 = vpop.f32.mrf.mxu0
    %v5299 = vadd.f32 %v1349, %v5298
    %5300 = vmatmul.bf16.gmra.mxu0 %v5275
    %v5301 = vpop.f32.mrf.mxu0
    %v5302 = vadd.f32 %v1349, %v5301
    %v5303 = vpop.f32.mrf.mxu0
    %v5304 = vadd.f32 %v1349, %v5303
    %5305 = vdwg.mxu0
    %v5306 = vmul.f32 %v5287, 1.442695
    %v5307 = vpow.pop %v5306
    %v5308 = vmul.f32 %v5289, 1.442695
    %v5309 = vpow.pop %v5308
    %v5310 = vmul.f32 %v5292, 1.442695
    %v5311 = vpow.pop %v5310
    %v5312 = vmul.f32 %v5294, 1.442695
    %v5313 = vpow.pop %v5312
    %v5314 = vmul.f32 %v5297, 1.442695
    %v5315 = vpow.pop %v5314
    %v5316 = vmul.f32 %v5299, 1.442695
    %v5317 = vpow.pop %v5316
    %v5318 = vmul.f32 %v5302, 1.442695
    %v5319 = vpow.pop %v5318
    %v5320 = vmul.f32 %v5304, 1.442695
    %v5321 = vpow.pop %v5320
    %v5322 = vsel %vm42, %v5307, %v5287
    %v5323 = vsel %vm42, %v5309, %v5289
    %v5324 = vsel %vm42, %v5311, %v5292
    %v5325 = vsel %vm42, %v5313, %v5294
    %v5326 = vsel %vm42, %v5315, %v5297
    %v5327 = vsel %vm42, %v5317, %v5299
    %v5328 = vsel %vm42, %v5319, %v5302
    %v5329 = vsel %vm42, %v5321, %v5304
    %s5330 = scalar_lea.vmem [#allocation2], 192
    %5331 = vst [vmem:[%s5330] sm:$0xff] %v5322
    %5332 = vst [vmem:[%s5330 + $0x8] sm:$0xff] %v5323
    %5333 = vst [vmem:[%s5330 + $0x10] sm:$0xff] %v5324
    %5334 = vst [vmem:[%s5330 + $0x18] sm:$0xff] %v5325
    %5335 = vst [vmem:[%s5330 + $0x20] sm:$0xff] %v5326
    %5336 = vst [vmem:[%s5330 + $0x28] sm:$0xff] %v5327
    %5337 = vst [vmem:[%s5330 + $0x30] sm:$0xff] %v5328
    %5338 = vst [vmem:[%s5330 + $0x38] sm:$0xff] %v5329
    // Predicated region
    $region46: #{tpu_custom_call.1} parent=1 // pred_check
      _
    $region47: #{tpu_custom_call.1} parent=1 // pred_check_branch
      %5340 = sbr.rel (0) target = $region49
    $region48: #{tpu_custom_call.1} parent=1 // pred_region
      %5342 = vsyncadd [#allocation3], 0
      %s5343 = sshll.u32 [#allocation2], 4
      %s5344 = int_to_ptr.vmem [resolvable:$true] %s5343
      %s5345 = sshll.u32 %s11, 4
      %s5346 = int_to_ptr.hbm [resolvable:$true] %s5345
      %5351 = dma.vmem_to_hbm [thread:$0]  %s5344, 4096, %s5346, [#allocation3], 128, 128, 8
    $region49: #{tpu_custom_call.1} parent=1 // pred_fallthru
      _
    // Predicated region
    $region50: #{tpu_custom_call.1} parent=1 // pred_check
      _
    $region51: #{tpu_custom_call.1} parent=1 // pred_check_branch
      %5353 = sbr.rel (0) target = $region53
    $region52: #{tpu_custom_call.1} parent=1 // pred_region
      %5355 = dma.done [#allocation3], 4096
    $region53: #{tpu_custom_call.1} parent=1 // pred_fallthru
      _
    %5356 = vsyncpa [#allocation3], 1

</llo_original>
